<compile_context>
chip_gen: v5e
topology: v5e:2x2
jax: 0.10.0
libtpu: 0.0.40
codegen_flags: <defaults>
</compile_context>

<pallas_src>
import jax
import jax.numpy as jnp
from jax.experimental import pallas as pl
from jax.experimental.pallas import tpu as pltpu


# ----------------------------------------------------------------------------
# Pallas kernel: one branch (score head + feature layer) on a channel-major
# tile of positions.  Conv1x1+BN(eval)+ReLU stacks, global-feature fusion,
# sigmoid score and L2 channel normalization all happen here.
# ----------------------------------------------------------------------------
def _branch_kernel(x_ref, b1_ref,
                   w1t_ref, ws2t_ref, s2b_ref, ws3_ref,
                   wf2t_ref, f2b_ref, wf3t_ref,
                   feat_ref, score_ref):
    x = x_ref[0]                                           # (cin, T) bf16

    # Fused stage 1: [score Conv1x1(cin->128) ; feature Conv1x1(cin->cin)] in
    # one MXU pass.  BN scales are folded into w1t; BN shifts plus the hoisted
    # (1,512)@(512,128) global-feature contribution are folded into the single
    # per-batch bias b1.
    y = jnp.dot(w1t_ref[...], x, preferred_element_type=jnp.float32)
    y = jnp.maximum(y + b1_ref[0], 0.0)                    # (128+cin, T) f32
    h = y[:128, :]                                         # score path
    f = y[128:, :]                                         # feature path

    # score head: Conv1x1(128->64) + BN + ReLU
    h = jnp.dot(ws2t_ref[...], h.astype(jnp.bfloat16),
                preferred_element_type=jnp.float32)
    h = jnp.maximum(h + s2b_ref[...], 0.0)                 # (64, T)
    # Conv1x1(64->1) + Sigmoid: VPU multiply + sublane reduce (no MXU pass).
    s = jnp.sum(h * ws3_ref[...], axis=0, keepdims=True)   # (1, T)
    score_ref[0] = jax.nn.sigmoid(s)

    # feature layer: Conv1x1(cin->cin)+BN+ReLU, Conv1x1(cin->64)
    f = jnp.dot(wf2t_ref[...], f.astype(jnp.bfloat16),
                preferred_element_type=jnp.float32)
    f = jnp.maximum(f + f2b_ref[...], 0.0)
    f = jnp.dot(wf3t_ref[...], f.astype(jnp.bfloat16),
                preferred_element_type=jnp.float32)        # (64, T)
    # F.normalize(dim=channel, p=2): f / max(||f||, 1e-12), computed in f32,
    # stored in bf16 (halves the largest HBM writeback stream).
    ssq = jnp.sum(f * f, axis=0, keepdims=True)            # (1, T)
    f = f * jax.lax.rsqrt(jnp.maximum(ssq, 1e-24))
    feat_ref[0] = f.astype(feat_ref.dtype)


def _pick_tile(P, B, cin):
    """Large lane-dense tiles (amortize ~0.35us/step pipeline overhead):
    4096 positions for cin=64, 2048 for cin=128 (f32 intermediates stay well
    under scoped VMEM on v5e/v6e/v7x).  Shrink (never below 128) until the
    grid has >= 4 total steps, i.e. >= 2 pipelined steps per TensorCore when
    v7x megacore shards the parallel axes across its two cores."""
    tile = 4096 if cin <= 64 else 2048
    while tile > 128 and B * ((P + tile - 1) // tile) < 4:
        tile //= 2
    return tile


def _run_branch(x_cm, b1, w):
    """x_cm: (B, cin, P) channel-first local features (bf16).
       b1:   (B, 128+cin, 1) f32 fused stage-1 bias (global feature + BN shifts)."""
    B, cin, P = x_cm.shape
    tile = _pick_tile(P, B, cin)
    P_pad = -(-P // tile) * tile
    if P_pad != P:
        # Pad positions to a tile multiple: every block stays lane-aligned
        # (unmasked stores), no whole-P fallback block.
        x_cm = jnp.pad(x_cm, ((0, 0), (0, 0), (0, P_pad - P)))

    x_map = lambda b, t: (b, 0, t)
    b_map = lambda b, t: (b, 0, 0)
    w_map = lambda b, t: (0, 0)

    weights = [w["w1t"], w["ws2t"], w["s2b"], w["ws3"],
               w["wf2t"], w["f2b"], w["wf3t"]]

    in_specs = ([pl.BlockSpec((1, cin, tile), x_map),
                 pl.BlockSpec((1, 128 + cin, 1), b_map)]
                + [pl.BlockSpec(p.shape, w_map) for p in weights])
    out_specs = [pl.BlockSpec((1, 64, tile), x_map),   # channel-first, lane-dense
                 pl.BlockSpec((1, 1, tile), x_map)]    # lane-dense score row
    out_shape = [jax.ShapeDtypeStruct((B, 64, P_pad), jnp.bfloat16),
                 jax.ShapeDtypeStruct((B, 1, P_pad), jnp.float32)]

    feat, score = pl.pallas_call(
        _branch_kernel,
        grid=(B, P_pad // tile),
        in_specs=in_specs,
        out_specs=out_specs,
        out_shape=out_shape,
        compiler_params=pltpu.CompilerParams(
            dimension_semantics=("parallel", "parallel"),
            vmem_limit_bytes=40 * 1024 * 1024),
    )(x_cm, b1, *weights)

    if P_pad != P:
        feat = feat[:, :, :P]
        score = score[:, :, :P]
    return feat, score


# ----------------------------------------------------------------------------
# Parameter init (deterministic, synthetic), BN folding and backbone stubs.
# ----------------------------------------------------------------------------
def _init_head(key, cin):
    ks = jax.random.split(key, 14)
    n = lambda k, shape, s=0.1: s * jax.random.normal(k, shape, jnp.float32)
    return {
        # score head (Conv1x1(cin+512->128)+BN, Conv1x1(128->64)+BN, Conv1x1(64->1))
        "ws1": n(ks[0], (cin + 512, 128)),
        "s1s": 1.0 + n(ks[1], (1, 128), 0.05), "s1b": n(ks[2], (1, 128), 0.05),
        "ws2": n(ks[3], (128, 64)),
        "s2s": 1.0 + n(ks[4], (1, 64), 0.05), "s2b": n(ks[5], (1, 64), 0.05),
        "ws3": n(ks[6], (64, 1)),
        # feature layer (Conv1x1(cin->cin)+BN, Conv1x1(cin->cin)+BN, Conv1x1(cin->64))
        "wf1": n(ks[7], (cin, cin)),
        "f1s": 1.0 + n(ks[8], (1, cin), 0.05), "f1b": n(ks[9], (1, cin), 0.05),
        "wf2": n(ks[10], (cin, cin)),
        "f2s": 1.0 + n(ks[11], (1, cin), 0.05), "f2b": n(ks[12], (1, cin), 0.05),
        "wf3": n(ks[13], (cin, 64)),
    }


def _prep_head(w, cin):
    """Fold eval-mode BN scales into conv weights, transpose for channel-major
    matmuls, fuse the two stage-1 convs, cast matmul weights to bf16."""
    # TODO(synk): a real checkpoint's BN also has running_mean/var; fold
    # (x-mu)*gamma/sqrt(var+eps)+beta into these scales/shifts for real weights.
    ws1_loc = w["ws1"][:cin] * w["s1s"]                     # (cin, 128)
    wf1 = w["wf1"] * w["f1s"]                               # (cin, cin)
    w1t = jnp.concatenate([ws1_loc.T, wf1.T], axis=0).astype(jnp.bfloat16)
    return {
        "w1t": w1t,                                         # (128+cin, cin) bf16
        "ws2t": (w["ws2"] * w["s2s"]).T.astype(jnp.bfloat16),   # (64, 128)
        "s2b": w["s2b"].reshape(64, 1).astype(jnp.float32),
        "ws3": w["ws3"].reshape(64, 1).astype(jnp.float32),
        "wf2t": (w["wf2"] * w["f2s"]).T.astype(jnp.bfloat16),   # (cin, cin)
        "f2b": w["f2b"].reshape(cin, 1).astype(jnp.float32),
        "wf3t": w["wf3"].T.astype(jnp.bfloat16),                # (64, cin)
    }


def _fused_bias(g, w, cin):
    """Hoisted per-batch (1,512)@(512,128) global-feature matmul of the score
    head's first conv (BN scale/shift folded in), concatenated with the
    feature layer's first BN shift -> one (B, 128+cin, 1) stage-1 bias."""
    gb = (g @ w["ws1"][cin:]) * w["s1s"] + w["s1b"]         # (B, 128)
    f1b = jnp.broadcast_to(w["f1b"], (g.shape[0], cin))     # (B, cin)
    return jnp.concatenate([gb, f1b], axis=1)[:, :, None].astype(jnp.float32)


def init_params(key):
    ks = jax.random.split(key, 6)
    return {
        # TODO(synk): PointMamba_Pointwise and imagenet.ImageEncoder definitions
        # are not part of the provided module; they are replaced by small
        # deterministic projection stubs producing the same feature shapes
        # (point: (B,128,N) + (B,512); image: (B,64,H/4*W/4) + (B,512)).
        "Wp1": 0.3 * jax.random.normal(ks[0], (3, 128), jnp.float32),
        "Wpg": 0.3 * jax.random.normal(ks[1], (128, 512), jnp.float32),
        "Wi1": 0.3 * jax.random.normal(ks[2], (48, 64), jnp.float32),
        "Wig": 0.3 * jax.random.normal(ks[3], (64, 512), jnp.float32),
        "img_head": _init_head(ks[4], 64),
        "pc_head": _init_head(ks[5], 128),
    }


def _stub_point_backbone(pc, params):
    # pc: (B, 3, N) channel-first, as in the PyTorch module.  Emits the
    # point-wise features channel-major bf16 directly (no wrapper transpose).
    pt = jnp.tanh(jnp.einsum("cd,bcn->bdn", params["Wp1"], pc))            # (B,128,N)
    g = jnp.max(jnp.tanh(jnp.einsum("dg,bdn->bgn", params["Wpg"], pt)), axis=-1)  # (B,512)
    return g, pt.astype(jnp.bfloat16)


def _stub_img_backbone(img, params):
    # img: (B, 3, H, W) NCHW -> 1/4-resolution pixel-wise features, emitted
    # channel-major bf16 directly (no wrapper transpose+cast HBM pass).
    B, C, H, W = img.shape
    s = 4
    x = img.reshape(B, C, H // s, s, W // s, s)
    x = jnp.transpose(x, (0, 1, 3, 5, 2, 4)).reshape(B, C * s * s, (H // s) * (W // s))
    pix = jnp.tanh(jnp.einsum("kc,bkp->bcp", params["Wi1"], x))            # (B,64,P)
    g = jnp.max(jnp.tanh(jnp.einsum("cg,bcp->bgp", params["Wig"], pix)), axis=-1)  # (B,512)
    return g, pix.astype(jnp.bfloat16)


@jax.jit
def mamba_i2p_forward(pc, intensity, sn, img, params):
    # intensity / sn are accepted for signature parity with the PyTorch module
    # but (exactly as in the reference forward) are unused.
    del intensity, sn

    global_pc_feat, point_wise_feat = _stub_point_backbone(pc, params)   # (B,512), (B,128,N)
    global_img_feat, pixel_wise_feat = _stub_img_backbone(img, params)   # (B,512), (B,64,P)

    img_head = _prep_head(params["img_head"], 64)
    pc_head = _prep_head(params["pc_head"], 128)
    b1_img = _fused_bias(global_pc_feat, params["img_head"], 64)    # pc global -> img branch
    b1_pc = _fused_bias(global_img_feat, params["pc_head"], 128)    # img global -> pc branch

    # image branch: fusion + img_score_head + img_feature_layer + L2 norm (Pallas)
    pix_feat, img_score = _run_branch(pixel_wise_feat, b1_img, img_head)
    # point branch: fusion + pc_score_head + pc_feature_layer + L2 norm (Pallas)
    pt_feat, pc_score = _run_branch(point_wise_feat, b1_pc, pc_head)

    # Already channel-first / flattened: (B,64,P), (B,64,N), (B,1,P), (B,1,N)
    return pix_feat, pt_feat, img_score, pc_score


if __name__ == "__main__":
    key = jax.random.PRNGKey(0)
    ks = jax.random.split(key, 5)

    B, N = 2, 256
    H, W = 64, 64
    pc = jax.random.normal(ks[0], (B, 3, N), jnp.float32)
    intensity = jax.random.normal(ks[1], (B, 1, N), jnp.float32)
    sn = jax.random.normal(ks[2], (B, 3, N), jnp.float32)
    img = jax.random.normal(ks[3], (B, 3, H, W), jnp.float32)
    params = init_params(ks[4])

    outs = jax.block_until_ready(mamba_i2p_forward(pc, intensity, sn, img, params))
    pix_flat, pt_feat, img_score_flat, pc_score = outs

    P = (H // 4) * (W // 4)
    assert pix_flat.shape == (B, 64, P)
    assert pt_feat.shape == (B, 64, N)
    assert img_score_flat.shape == (B, 1, P)
    assert pc_score.shape == (B, 1, N)
    # score heads end in Sigmoid -> values in [0, 1]
    assert bool(jnp.all((img_score_flat >= 0.0) & (img_score_flat <= 1.0)))
    assert bool(jnp.all((pc_score >= 0.0) & (pc_score <= 1.0)))
    # feature outputs are L2-normalized over the channel axis (stored in bf16,
    # normalization computed in f32 inside the kernel)
    pt32 = pt_feat.astype(jnp.float32)
    px32 = pix_flat.astype(jnp.float32)
    assert bool(jnp.allclose(jnp.sum(pt32 * pt32, axis=1), 1.0, atol=2e-2))
    assert bool(jnp.allclose(jnp.sum(px32 * px32, axis=1), 1.0, atol=2e-2))

    print("KERNEL_OK")
</pallas_src>

<mosaic_0001>
module attributes {stable_mosaic.version = 11 : i64} {
  func.func @_branch_kernel(%arg0: i32, %arg1: i32, %arg2: memref<1x128x128xbf16, #tpu.memory_space<vmem>>, %arg3: memref<1x256x1xf32, #tpu.memory_space<vmem>>, %arg4: memref<256x128xbf16, #tpu.memory_space<vmem>>, %arg5: memref<64x128xbf16, #tpu.memory_space<vmem>>, %arg6: memref<64x1xf32, #tpu.memory_space<vmem>>, %arg7: memref<64x1xf32, #tpu.memory_space<vmem>>, %arg8: memref<128x128xbf16, #tpu.memory_space<vmem>>, %arg9: memref<128x1xf32, #tpu.memory_space<vmem>>, %arg10: memref<64x128xbf16, #tpu.memory_space<vmem>>, %arg11: memref<1x64x128xbf16, #tpu.memory_space<vmem>>, %arg12: memref<1x1x128xf32, #tpu.memory_space<vmem>>) attributes {dimension_semantics = [#tpu.dimension_semantics<parallel>, #tpu.dimension_semantics<parallel>], iteration_bounds = array<i64: 2, 2>, scalar_prefetch = 0 : i64, scratch_operands = 0 : i64, tpu.core_type = #tpu.core_type<tc>, window_params = [{transform_indices = @transform_0, window_bounds = array<i64: 1, 128, 128>}, {transform_indices = @transform_1, window_bounds = array<i64: 1, 256, 1>}, {pipeline_mode = #tpu.pipeline_mode<synchronous>, transform_indices = @transform_2, window_bounds = array<i64: 256, 128>}, {pipeline_mode = #tpu.pipeline_mode<synchronous>, transform_indices = @transform_3, window_bounds = array<i64: 64, 128>}, {pipeline_mode = #tpu.pipeline_mode<synchronous>, transform_indices = @transform_4, window_bounds = array<i64: 64, 1>}, {pipeline_mode = #tpu.pipeline_mode<synchronous>, transform_indices = @transform_5, window_bounds = array<i64: 64, 1>}, {pipeline_mode = #tpu.pipeline_mode<synchronous>, transform_indices = @transform_6, window_bounds = array<i64: 128, 128>}, {pipeline_mode = #tpu.pipeline_mode<synchronous>, transform_indices = @transform_7, window_bounds = array<i64: 128, 1>}, {pipeline_mode = #tpu.pipeline_mode<synchronous>, transform_indices = @transform_8, window_bounds = array<i64: 64, 128>}, {transform_indices = @transform_9, window_bounds = array<i64: 1, 64, 128>}, {transform_indices = @transform_10, window_bounds = array<i64: 1, 1, 128>}]} {
    %c0 = arith.constant 0 : index
    %c0_0 = arith.constant 0 : index
    %c0_1 = arith.constant 0 : index
    %0 = vector.load %arg2[%c0, %c0_0, %c0_1] : memref<1x128x128xbf16, #tpu.memory_space<vmem>>, vector<1x128x128xbf16>
    %1 = vector.shape_cast %0 : vector<1x128x128xbf16> to vector<128x128xbf16>
    %c0_2 = arith.constant 0 : index
    %c0_3 = arith.constant 0 : index
    %2 = vector.load %arg4[%c0_2, %c0_3] : memref<256x128xbf16, #tpu.memory_space<vmem>>, vector<256x128xbf16>
    %cst = arith.constant dense<0.000000e+00> : vector<256x128xf32>
    %3 = tpu.matmul %2, %1, %cst {dimension_numbers = #tpu.dot_dimension_numbers<[1], [0], [0], [1], [0, 0, 1, 1], [], []>} : vector<256x128xbf16>, vector<128x128xbf16>, vector<256x128xf32> -> vector<256x128xf32>
    %c0_4 = arith.constant 0 : index
    %c0_5 = arith.constant 0 : index
    %c0_6 = arith.constant 0 : index
    %4 = vector.load %arg3[%c0_4, %c0_5, %c0_6] : memref<1x256x1xf32, #tpu.memory_space<vmem>>, vector<1x256x1xf32>
    %5 = vector.shape_cast %4 : vector<1x256x1xf32> to vector<256x1xf32>
    %6 = vector.broadcast %5 : vector<256x1xf32> to vector<256x128xf32>
    %7 = arith.addf %3, %6 : vector<256x128xf32>
    %cst_7 = arith.constant 0.000000e+00 : f32
    %8 = vector.broadcast %cst_7 : f32 to vector<256x128xf32>
    %9 = arith.maximumf %7, %8 : vector<256x128xf32>
    %10 = vector.extract_strided_slice %9 {offsets = [0, 0], sizes = [128, 128], strides = [1, 1]} : vector<256x128xf32> to vector<128x128xf32>
    %11 = vector.extract_strided_slice %9 {offsets = [128, 0], sizes = [128, 128], strides = [1, 1]} : vector<256x128xf32> to vector<128x128xf32>
    %c0_8 = arith.constant 0 : index
    %c0_9 = arith.constant 0 : index
    %12 = vector.load %arg5[%c0_8, %c0_9] : memref<64x128xbf16, #tpu.memory_space<vmem>>, vector<64x128xbf16>
    %13 = arith.truncf %10 : vector<128x128xf32> to vector<128x128xbf16>
    %cst_10 = arith.constant dense<0.000000e+00> : vector<64x128xf32>
    %14 = tpu.matmul %12, %13, %cst_10 {dimension_numbers = #tpu.dot_dimension_numbers<[1], [0], [0], [1], [0, 0, 1, 1], [], []>} : vector<64x128xbf16>, vector<128x128xbf16>, vector<64x128xf32> -> vector<64x128xf32>
    %c0_11 = arith.constant 0 : index
    %c0_12 = arith.constant 0 : index
    %15 = vector.load %arg6[%c0_11, %c0_12] : memref<64x1xf32, #tpu.memory_space<vmem>>, vector<64x1xf32>
    %16 = vector.broadcast %15 : vector<64x1xf32> to vector<64x128xf32>
    %17 = arith.addf %14, %16 : vector<64x128xf32>
    %cst_13 = arith.constant 0.000000e+00 : f32
    %18 = vector.broadcast %cst_13 : f32 to vector<64x128xf32>
    %19 = arith.maximumf %17, %18 : vector<64x128xf32>
    %c0_14 = arith.constant 0 : index
    %c0_15 = arith.constant 0 : index
    %20 = vector.load %arg7[%c0_14, %c0_15] : memref<64x1xf32, #tpu.memory_space<vmem>>, vector<64x1xf32>
    %21 = vector.broadcast %20 : vector<64x1xf32> to vector<64x128xf32>
    %22 = arith.mulf %19, %21 : vector<64x128xf32>
    %cst_16 = arith.constant dense<0.000000e+00> : vector<128xf32>
    %23 = vector.multi_reduction <add>, %22, %cst_16 [0] : vector<64x128xf32> to vector<128xf32>
    %24 = vector.shape_cast %23 : vector<128xf32> to vector<1x128xf32>
    %25 = arith.negf %24 : vector<1x128xf32>
    %26 = math.exp %25 : vector<1x128xf32>
    %cst_17 = arith.constant 1.000000e+00 : f32
    %27 = vector.broadcast %cst_17 : f32 to vector<1x128xf32>
    %28 = arith.addf %27, %26 : vector<1x128xf32>
    %29 = arith.divf %27, %28 : vector<1x128xf32>
    %c0_18 = arith.constant 0 : index
    %c0_19 = arith.constant 0 : index
    %c0_20 = arith.constant 0 : index
    %30 = vector.load %arg12[%c0_18, %c0_19, %c0_20] : memref<1x1x128xf32, #tpu.memory_space<vmem>>, vector<1x1x128xf32>
    %31 = vector.shape_cast %30 : vector<1x1x128xf32> to vector<1x128xf32>
    %32 = vector.shape_cast %29 : vector<1x128xf32> to vector<1x1x128xf32>
    tpu.vector_store %arg12[%c0_18, %c0_19, %c0_20], %32 {strides = array<i32>} : memref<1x1x128xf32, #tpu.memory_space<vmem>>, vector<1x1x128xf32>,
    %c0_21 = arith.constant 0 : index
    %c0_22 = arith.constant 0 : index
    %33 = vector.load %arg8[%c0_21, %c0_22] : memref<128x128xbf16, #tpu.memory_space<vmem>>, vector<128x128xbf16>
    %34 = arith.truncf %11 : vector<128x128xf32> to vector<128x128xbf16>
    %cst_23 = arith.constant dense<0.000000e+00> : vector<128x128xf32>
    %35 = tpu.matmul %33, %34, %cst_23 {dimension_numbers = #tpu.dot_dimension_numbers<[1], [0], [0], [1], [0, 0, 1, 1], [], []>} : vector<128x128xbf16>, vector<128x128xbf16>, vector<128x128xf32> -> vector<128x128xf32>
    %c0_24 = arith.constant 0 : index
    %c0_25 = arith.constant 0 : index
    %36 = vector.load %arg9[%c0_24, %c0_25] : memref<128x1xf32, #tpu.memory_space<vmem>>, vector<128x1xf32>
    %37 = vector.broadcast %36 : vector<128x1xf32> to vector<128x128xf32>
    %38 = arith.addf %35, %37 : vector<128x128xf32>
    %cst_26 = arith.constant 0.000000e+00 : f32
    %39 = vector.broadcast %cst_26 : f32 to vector<128x128xf32>
    %40 = arith.maximumf %38, %39 : vector<128x128xf32>
    %c0_27 = arith.constant 0 : index
    %c0_28 = arith.constant 0 : index
    %41 = vector.load %arg10[%c0_27, %c0_28] : memref<64x128xbf16, #tpu.memory_space<vmem>>, vector<64x128xbf16>
    %42 = arith.truncf %40 : vector<128x128xf32> to vector<128x128xbf16>
    %cst_29 = arith.constant dense<0.000000e+00> : vector<64x128xf32>
    %43 = tpu.matmul %41, %42, %cst_29 {dimension_numbers = #tpu.dot_dimension_numbers<[1], [0], [0], [1], [0, 0, 1, 1], [], []>} : vector<64x128xbf16>, vector<128x128xbf16>, vector<64x128xf32> -> vector<64x128xf32>
    %44 = arith.mulf %43, %43 : vector<64x128xf32>
    %cst_30 = arith.constant dense<0.000000e+00> : vector<128xf32>
    %45 = vector.multi_reduction <add>, %44, %cst_30 [0] : vector<64x128xf32> to vector<128xf32>
    %46 = vector.shape_cast %45 : vector<128xf32> to vector<1x128xf32>
    %cst_31 = arith.constant 1.000000e-24 : f32
    %47 = vector.broadcast %cst_31 : f32 to vector<1x128xf32>
    %48 = arith.maximumf %46, %47 : vector<1x128xf32>
    %49 = math.rsqrt %48 : vector<1x128xf32>
    %50 = vector.broadcast %49 : vector<1x128xf32> to vector<64x128xf32>
    %51 = arith.mulf %43, %50 : vector<64x128xf32>
    %52 = arith.truncf %51 : vector<64x128xf32> to vector<64x128xbf16>
    %c0_32 = arith.constant 0 : index
    %c0_33 = arith.constant 0 : index
    %c0_34 = arith.constant 0 : index
    %53 = vector.load %arg11[%c0_32, %c0_33, %c0_34] : memref<1x64x128xbf16, #tpu.memory_space<vmem>>, vector<1x64x128xbf16>
    %54 = vector.shape_cast %53 : vector<1x64x128xbf16> to vector<64x128xbf16>
    %55 = vector.shape_cast %52 : vector<64x128xbf16> to vector<1x64x128xbf16>
    tpu.vector_store %arg11[%c0_32, %c0_33, %c0_34], %55 {strides = array<i32>} : memref<1x64x128xbf16, #tpu.memory_space<vmem>>, vector<1x64x128xbf16>,
    return
  }
  func.func @transform_0(%arg0: i32, %arg1: i32) -> (i32, i32, i32) {
    %c0_i32 = arith.constant 0 : i32
    %c0_i32_0 = arith.constant 0 : i32
    return %arg0, %c0_i32, %arg1 : i32, i32, i32
  }
  func.func @transform_1(%arg0: i32, %arg1: i32) -> (i32, i32, i32) {
    %c0_i32 = arith.constant 0 : i32
    %c0_i32_0 = arith.constant 0 : i32
    %c0_i32_1 = arith.constant 0 : i32
    return %arg0, %c0_i32, %c0_i32_0 : i32, i32, i32
  }
  func.func @transform_2(%arg0: i32, %arg1: i32) -> (i32, i32) {
    %c0_i32 = arith.constant 0 : i32
    %c0_i32_0 = arith.constant 0 : i32
    %c0_i32_1 = arith.constant 0 : i32
    return %c0_i32, %c0_i32_0 : i32, i32
  }
  func.func @transform_3(%arg0: i32, %arg1: i32) -> (i32, i32) {
    %c0_i32 = arith.constant 0 : i32
    %c0_i32_0 = arith.constant 0 : i32
    %c0_i32_1 = arith.constant 0 : i32
    return %c0_i32, %c0_i32_0 : i32, i32
  }
  func.func @transform_4(%arg0: i32, %arg1: i32) -> (i32, i32) {
    %c0_i32 = arith.constant 0 : i32
    %c0_i32_0 = arith.constant 0 : i32
    %c0_i32_1 = arith.constant 0 : i32
    return %c0_i32, %c0_i32_0 : i32, i32
  }
  func.func @transform_5(%arg0: i32, %arg1: i32) -> (i32, i32) {
    %c0_i32 = arith.constant 0 : i32
    %c0_i32_0 = arith.constant 0 : i32
    %c0_i32_1 = arith.constant 0 : i32
    return %c0_i32, %c0_i32_0 : i32, i32
  }
  func.func @transform_6(%arg0: i32, %arg1: i32) -> (i32, i32) {
    %c0_i32 = arith.constant 0 : i32
    %c0_i32_0 = arith.constant 0 : i32
    %c0_i32_1 = arith.constant 0 : i32
    return %c0_i32, %c0_i32_0 : i32, i32
  }
  func.func @transform_7(%arg0: i32, %arg1: i32) -> (i32, i32) {
    %c0_i32 = arith.constant 0 : i32
    %c0_i32_0 = arith.constant 0 : i32
    %c0_i32_1 = arith.constant 0 : i32
    return %c0_i32, %c0_i32_0 : i32, i32
  }
  func.func @transform_8(%arg0: i32, %arg1: i32) -> (i32, i32) {
    %c0_i32 = arith.constant 0 : i32
    %c0_i32_0 = arith.constant 0 : i32
    %c0_i32_1 = arith.constant 0 : i32
    return %c0_i32, %c0_i32_0 : i32, i32
  }
  func.func @transform_9(%arg0: i32, %arg1: i32) -> (i32, i32, i32) {
    %c0_i32 = arith.constant 0 : i32
    %c0_i32_0 = arith.constant 0 : i32
    return %arg0, %c0_i32, %arg1 : i32, i32, i32
  }
  func.func @transform_10(%arg0: i32, %arg1: i32) -> (i32, i32, i32) {
    %c0_i32 = arith.constant 0 : i32
    %c0_i32_0 = arith.constant 0 : i32
    return %arg0, %c0_i32, %arg1 : i32, i32, i32
  }
}

module attributes {stable_mosaic.version = 11 : i64} {
  func.func @_branch_kernel(%arg0: i32, %arg1: i32, %arg2: memref<1x64x128xbf16, #tpu.memory_space<vmem>>, %arg3: memref<1x192x1xf32, #tpu.memory_space<vmem>>, %arg4: memref<192x64xbf16, #tpu.memory_space<vmem>>, %arg5: memref<64x128xbf16, #tpu.memory_space<vmem>>, %arg6: memref<64x1xf32, #tpu.memory_space<vmem>>, %arg7: memref<64x1xf32, #tpu.memory_space<vmem>>, %arg8: memref<64x64xbf16, #tpu.memory_space<vmem>>, %arg9: memref<64x1xf32, #tpu.memory_space<vmem>>, %arg10: memref<64x64xbf16, #tpu.memory_space<vmem>>, %arg11: memref<1x64x128xbf16, #tpu.memory_space<vmem>>, %arg12: memref<1x1x128xf32, #tpu.memory_space<vmem>>) attributes {dimension_semantics = [#tpu.dimension_semantics<parallel>, #tpu.dimension_semantics<parallel>], iteration_bounds = array<i64: 2, 2>, scalar_prefetch = 0 : i64, scratch_operands = 0 : i64, tpu.core_type = #tpu.core_type<tc>, window_params = [{transform_indices = @transform_0, window_bounds = array<i64: 1, 64, 128>}, {transform_indices = @transform_1, window_bounds = array<i64: 1, 192, 1>}, {pipeline_mode = #tpu.pipeline_mode<synchronous>, transform_indices = @transform_2, window_bounds = array<i64: 192, 64>}, {pipeline_mode = #tpu.pipeline_mode<synchronous>, transform_indices = @transform_3, window_bounds = array<i64: 64, 128>}, {pipeline_mode = #tpu.pipeline_mode<synchronous>, transform_indices = @transform_4, window_bounds = array<i64: 64, 1>}, {pipeline_mode = #tpu.pipeline_mode<synchronous>, transform_indices = @transform_5, window_bounds = array<i64: 64, 1>}, {pipeline_mode = #tpu.pipeline_mode<synchronous>, transform_indices = @transform_6, window_bounds = array<i64: 64, 64>}, {pipeline_mode = #tpu.pipeline_mode<synchronous>, transform_indices = @transform_7, window_bounds = array<i64: 64, 1>}, {pipeline_mode = #tpu.pipeline_mode<synchronous>, transform_indices = @transform_8, window_bounds = array<i64: 64, 64>}, {transform_indices = @transform_9, window_bounds = array<i64: 1, 64, 128>}, {transform_indices = @transform_10, window_bounds = array<i64: 1, 1, 128>}]} {
    %c0 = arith.constant 0 : index
    %c0_0 = arith.constant 0 : index
    %c0_1 = arith.constant 0 : index
    %0 = vector.load %arg2[%c0, %c0_0, %c0_1] : memref<1x64x128xbf16, #tpu.memory_space<vmem>>, vector<1x64x128xbf16>
    %1 = vector.shape_cast %0 : vector<1x64x128xbf16> to vector<64x128xbf16>
    %c0_2 = arith.constant 0 : index
    %c0_3 = arith.constant 0 : index
    %2 = vector.load %arg4[%c0_2, %c0_3] : memref<192x64xbf16, #tpu.memory_space<vmem>>, vector<192x64xbf16>
    %cst = arith.constant dense<0.000000e+00> : vector<192x128xf32>
    %3 = tpu.matmul %2, %1, %cst {dimension_numbers = #tpu.dot_dimension_numbers<[1], [0], [0], [1], [0, 0, 1, 1], [], []>} : vector<192x64xbf16>, vector<64x128xbf16>, vector<192x128xf32> -> vector<192x128xf32>
    %c0_4 = arith.constant 0 : index
    %c0_5 = arith.constant 0 : index
    %c0_6 = arith.constant 0 : index
    %4 = vector.load %arg3[%c0_4, %c0_5, %c0_6] : memref<1x192x1xf32, #tpu.memory_space<vmem>>, vector<1x192x1xf32>
    %5 = vector.shape_cast %4 : vector<1x192x1xf32> to vector<192x1xf32>
    %6 = vector.broadcast %5 : vector<192x1xf32> to vector<192x128xf32>
    %7 = arith.addf %3, %6 : vector<192x128xf32>
    %cst_7 = arith.constant 0.000000e+00 : f32
    %8 = vector.broadcast %cst_7 : f32 to vector<192x128xf32>
    %9 = arith.maximumf %7, %8 : vector<192x128xf32>
    %10 = vector.extract_strided_slice %9 {offsets = [0, 0], sizes = [128, 128], strides = [1, 1]} : vector<192x128xf32> to vector<128x128xf32>
    %11 = vector.extract_strided_slice %9 {offsets = [128, 0], sizes = [64, 128], strides = [1, 1]} : vector<192x128xf32> to vector<64x128xf32>
    %c0_8 = arith.constant 0 : index
    %c0_9 = arith.constant 0 : index
    %12 = vector.load %arg5[%c0_8, %c0_9] : memref<64x128xbf16, #tpu.memory_space<vmem>>, vector<64x128xbf16>
    %13 = arith.truncf %10 : vector<128x128xf32> to vector<128x128xbf16>
    %cst_10 = arith.constant dense<0.000000e+00> : vector<64x128xf32>
    %14 = tpu.matmul %12, %13, %cst_10 {dimension_numbers = #tpu.dot_dimension_numbers<[1], [0], [0], [1], [0, 0, 1, 1], [], []>} : vector<64x128xbf16>, vector<128x128xbf16>, vector<64x128xf32> -> vector<64x128xf32>
    %c0_11 = arith.constant 0 : index
    %c0_12 = arith.constant 0 : index
    %15 = vector.load %arg6[%c0_11, %c0_12] : memref<64x1xf32, #tpu.memory_space<vmem>>, vector<64x1xf32>
    %16 = vector.broadcast %15 : vector<64x1xf32> to vector<64x128xf32>
    %17 = arith.addf %14, %16 : vector<64x128xf32>
    %cst_13 = arith.constant 0.000000e+00 : f32
    %18 = vector.broadcast %cst_13 : f32 to vector<64x128xf32>
    %19 = arith.maximumf %17, %18 : vector<64x128xf32>
    %c0_14 = arith.constant 0 : index
    %c0_15 = arith.constant 0 : index
    %20 = vector.load %arg7[%c0_14, %c0_15] : memref<64x1xf32, #tpu.memory_space<vmem>>, vector<64x1xf32>
    %21 = vector.broadcast %20 : vector<64x1xf32> to vector<64x128xf32>
    %22 = arith.mulf %19, %21 : vector<64x128xf32>
    %cst_16 = arith.constant dense<0.000000e+00> : vector<128xf32>
    %23 = vector.multi_reduction <add>, %22, %cst_16 [0] : vector<64x128xf32> to vector<128xf32>
    %24 = vector.shape_cast %23 : vector<128xf32> to vector<1x128xf32>
    %25 = arith.negf %24 : vector<1x128xf32>
    %26 = math.exp %25 : vector<1x128xf32>
    %cst_17 = arith.constant 1.000000e+00 : f32
    %27 = vector.broadcast %cst_17 : f32 to vector<1x128xf32>
    %28 = arith.addf %27, %26 : vector<1x128xf32>
    %29 = arith.divf %27, %28 : vector<1x128xf32>
    %c0_18 = arith.constant 0 : index
    %c0_19 = arith.constant 0 : index
    %c0_20 = arith.constant 0 : index
    %30 = vector.load %arg12[%c0_18, %c0_19, %c0_20] : memref<1x1x128xf32, #tpu.memory_space<vmem>>, vector<1x1x128xf32>
    %31 = vector.shape_cast %30 : vector<1x1x128xf32> to vector<1x128xf32>
    %32 = vector.shape_cast %29 : vector<1x128xf32> to vector<1x1x128xf32>
    tpu.vector_store %arg12[%c0_18, %c0_19, %c0_20], %32 {strides = array<i32>} : memref<1x1x128xf32, #tpu.memory_space<vmem>>, vector<1x1x128xf32>,
    %c0_21 = arith.constant 0 : index
    %c0_22 = arith.constant 0 : index
    %33 = vector.load %arg8[%c0_21, %c0_22] : memref<64x64xbf16, #tpu.memory_space<vmem>>, vector<64x64xbf16>
    %34 = arith.truncf %11 : vector<64x128xf32> to vector<64x128xbf16>
    %cst_23 = arith.constant dense<0.000000e+00> : vector<64x128xf32>
    %35 = tpu.matmul %33, %34, %cst_23 {dimension_numbers = #tpu.dot_dimension_numbers<[1], [0], [0], [1], [0, 0, 1, 1], [], []>} : vector<64x64xbf16>, vector<64x128xbf16>, vector<64x128xf32> -> vector<64x128xf32>
    %c0_24 = arith.constant 0 : index
    %c0_25 = arith.constant 0 : index
    %36 = vector.load %arg9[%c0_24, %c0_25] : memref<64x1xf32, #tpu.memory_space<vmem>>, vector<64x1xf32>
    %37 = vector.broadcast %36 : vector<64x1xf32> to vector<64x128xf32>
    %38 = arith.addf %35, %37 : vector<64x128xf32>
    %cst_26 = arith.constant 0.000000e+00 : f32
    %39 = vector.broadcast %cst_26 : f32 to vector<64x128xf32>
    %40 = arith.maximumf %38, %39 : vector<64x128xf32>
    %c0_27 = arith.constant 0 : index
    %c0_28 = arith.constant 0 : index
    %41 = vector.load %arg10[%c0_27, %c0_28] : memref<64x64xbf16, #tpu.memory_space<vmem>>, vector<64x64xbf16>
    %42 = arith.truncf %40 : vector<64x128xf32> to vector<64x128xbf16>
    %cst_29 = arith.constant dense<0.000000e+00> : vector<64x128xf32>
    %43 = tpu.matmul %41, %42, %cst_29 {dimension_numbers = #tpu.dot_dimension_numbers<[1], [0], [0], [1], [0, 0, 1, 1], [], []>} : vector<64x64xbf16>, vector<64x128xbf16>, vector<64x128xf32> -> vector<64x128xf32>
    %44 = arith.mulf %43, %43 : vector<64x128xf32>
    %cst_30 = arith.constant dense<0.000000e+00> : vector<128xf32>
    %45 = vector.multi_reduction <add>, %44, %cst_30 [0] : vector<64x128xf32> to vector<128xf32>
    %46 = vector.shape_cast %45 : vector<128xf32> to vector<1x128xf32>
    %cst_31 = arith.constant 1.000000e-24 : f32
    %47 = vector.broadcast %cst_31 : f32 to vector<1x128xf32>
    %48 = arith.maximumf %46, %47 : vector<1x128xf32>
    %49 = math.rsqrt %48 : vector<1x128xf32>
    %50 = vector.broadcast %49 : vector<1x128xf32> to vector<64x128xf32>
    %51 = arith.mulf %43, %50 : vector<64x128xf32>
    %52 = arith.truncf %51 : vector<64x128xf32> to vector<64x128xbf16>
    %c0_32 = arith.constant 0 : index
    %c0_33 = arith.constant 0 : index
    %c0_34 = arith.constant 0 : index
    %53 = vector.load %arg11[%c0_32, %c0_33, %c0_34] : memref<1x64x128xbf16, #tpu.memory_space<vmem>>, vector<1x64x128xbf16>
    %54 = vector.shape_cast %53 : vector<1x64x128xbf16> to vector<64x128xbf16>
    %55 = vector.shape_cast %52 : vector<64x128xbf16> to vector<1x64x128xbf16>
    tpu.vector_store %arg11[%c0_32, %c0_33, %c0_34], %55 {strides = array<i32>} : memref<1x64x128xbf16, #tpu.memory_space<vmem>>, vector<1x64x128xbf16>,
    return
  }
  func.func @transform_0(%arg0: i32, %arg1: i32) -> (i32, i32, i32) {
    %c0_i32 = arith.constant 0 : i32
    %c0_i32_0 = arith.constant 0 : i32
    return %arg0, %c0_i32, %arg1 : i32, i32, i32
  }
  func.func @transform_1(%arg0: i32, %arg1: i32) -> (i32, i32, i32) {
    %c0_i32 = arith.constant 0 : i32
    %c0_i32_0 = arith.constant 0 : i32
    %c0_i32_1 = arith.constant 0 : i32
    return %arg0, %c0_i32, %c0_i32_0 : i32, i32, i32
  }
  func.func @transform_2(%arg0: i32, %arg1: i32) -> (i32, i32) {
    %c0_i32 = arith.constant 0 : i32
    %c0_i32_0 = arith.constant 0 : i32
    %c0_i32_1 = arith.constant 0 : i32
    return %c0_i32, %c0_i32_0 : i32, i32
  }
  func.func @transform_3(%arg0: i32, %arg1: i32) -> (i32, i32) {
    %c0_i32 = arith.constant 0 : i32
    %c0_i32_0 = arith.constant 0 : i32
    %c0_i32_1 = arith.constant 0 : i32
    return %c0_i32, %c0_i32_0 : i32, i32
  }
  func.func @transform_4(%arg0: i32, %arg1: i32) -> (i32, i32) {
    %c0_i32 = arith.constant 0 : i32
    %c0_i32_0 = arith.constant 0 : i32
    %c0_i32_1 = arith.constant 0 : i32
    return %c0_i32, %c0_i32_0 : i32, i32
  }
  func.func @transform_5(%arg0: i32, %arg1: i32) -> (i32, i32) {
    %c0_i32 = arith.constant 0 : i32
    %c0_i32_0 = arith.constant 0 : i32
    %c0_i32_1 = arith.constant 0 : i32
    return %c0_i32, %c0_i32_0 : i32, i32
  }
  func.func @transform_6(%arg0: i32, %arg1: i32) -> (i32, i32) {
    %c0_i32 = arith.constant 0 : i32
    %c0_i32_0 = arith.constant 0 : i32
    %c0_i32_1 = arith.constant 0 : i32
    return %c0_i32, %c0_i32_0 : i32, i32
  }
  func.func @transform_7(%arg0: i32, %arg1: i32) -> (i32, i32) {
    %c0_i32 = arith.constant 0 : i32
    %c0_i32_0 = arith.constant 0 : i32
    %c0_i32_1 = arith.constant 0 : i32
    return %c0_i32, %c0_i32_0 : i32, i32
  }
  func.func @transform_8(%arg0: i32, %arg1: i32) -> (i32, i32) {
    %c0_i32 = arith.constant 0 : i32
    %c0_i32_0 = arith.constant 0 : i32
    %c0_i32_1 = arith.constant 0 : i32
    return %c0_i32, %c0_i32_0 : i32, i32
  }
  func.func @transform_9(%arg0: i32, %arg1: i32) -> (i32, i32, i32) {
    %c0_i32 = arith.constant 0 : i32
    %c0_i32_0 = arith.constant 0 : i32
    return %arg0, %c0_i32, %arg1 : i32, i32, i32
  }
  func.func @transform_10(%arg0: i32, %arg1: i32) -> (i32, i32, i32) {
    %c0_i32 = arith.constant 0 : i32
    %c0_i32_0 = arith.constant 0 : i32
    return %arg0, %c0_i32, %arg1 : i32, i32, i32
  }
}

</mosaic_0001>

<llo_original>
// kernel: mamba_i2p_forward.3
$region0: #{mamba_i2p_forward.3}
  #allocation0 [shape = 'u32[]', space=smem, size = 0x4, offset = 0x4, fixed_abs, tag = 'smem constant byte address 0x4 - core index']
  #allocation1 [shape = 'u32[72,128]{1,0:T(1,128)}', space=vmem, size = 0x9000, scoped, tag = 'internal scratch']
  %s0 = inlined_call_operand.vmem [shape: bf16[2,128,256], index: 0, kind: input, shape index: {}]
  %s1 = inlined_call_operand.vmem [shape: f32[2,256,1], index: 1, kind: input, shape index: {}]
  %s2 = inlined_call_operand.vmem [shape: bf16[256,128], index: 2, kind: input, shape index: {}]
  %s3 = inlined_call_operand.vmem [shape: bf16[64,128], index: 3, kind: input, shape index: {}]
  %s4 = inlined_call_operand.vmem [shape: f32[64,1], index: 4, kind: input, shape index: {}]
  %s5 = inlined_call_operand.vmem [shape: f32[64,1], index: 5, kind: input, shape index: {}]
  %s6 = inlined_call_operand.vmem [shape: bf16[128,128], index: 6, kind: input, shape index: {}]
  %s7 = inlined_call_operand.vmem [shape: f32[128,1], index: 7, kind: input, shape index: {}]
  %s8 = inlined_call_operand.vmem [shape: bf16[64,128], index: 8, kind: input, shape index: {}]
  %s9 = inlined_call_operand.hbm [shape: bf16[2,64,256], index: 9, kind: output, shape index: {0}]
  %s10 = inlined_call_operand.hbm [shape: f32[2,1,256], index: 10, kind: output, shape index: {1}]
  %11 = xla_tuple %s9, %s10
  %s12 = sld [smem:[#allocation0]]
  $region118: #{mamba_i2p_forward.3} parent=0
    _
  %s14 = ssub.s32 1, %s12
  %s15 = scalar_select 0, %s14, %s12
  $region1: #{mamba_i2p_forward.3} parent=0
    #allocation2 [shape = 'u8[65536]{0}', space=vmem, size = 0x10000, scoped, tag = 'input window, operand 0']
    #allocation3 [shape = 'u8[32768]{0}', space=vmem, size = 0x8000, scoped, tag = 'output window, operand 0']
    #allocation4 [shape = 's32[2]{0}', space=sflag, size = 0x8, scoped, tag = 'scoped memory for mamba_i2p_forward.3']
    #allocation5 [shape = 'u8[1024]{0}', space=vmem, size = 0x400, scoped, tag = 'output window, operand 1']
    #allocation6 [shape = 's32[2]{0}', space=sflag, size = 0x8, scoped, tag = 'scoped memory for mamba_i2p_forward.3']
    %16 = vsyncpa [#allocation4], 0
    %s17 = scalar_lea.sflag [#allocation4], 1
    %18 = vsyncpa %s17, 0
    %19 = vsyncpa [#allocation6], 0
    %s20 = scalar_lea.sflag [#allocation6], 1
    %21 = vsyncpa %s20, 0
    loop: start=0, step=1, limit=6
    $region2: #{mamba_i2p_forward.3} parent=1 // loop_pre_header
      _
    $region3: #{mamba_i2p_forward.3} parent=1 // loop_header
      %s23 = sphi 0, %s27
      %p24 = scmp.ge.s32.totalorder %s23, 6
      %s30 = sphi 0, %s42
      %s31 = sphi 0, %s38
      %s32 = sphi 0, %s30
      %s33 = sphi 0, %s31
      %s34 = sphi 0, %s32
      %s35 = sphi 0, %s33
      %s47 = sphi 0, %s49
      %s50 = sphi 0, %s47
      %s51 = sphi 0, %s50
      %s67 = sphi 0, %s51
      %s73 = sphi 0, %s75
      %s76 = sphi 0, %s73
      %s77 = sphi 0, %s76
      %s93 = sphi 0, %s77
      %s97 = sphi 0, %s97
      %s99 = sphi 0, %s97
      %s100 = sphi 0, %s99
      %s114 = sphi 0, %s100
      %s118 = sphi 0, %s118
      %s120 = sphi 0, %s118
      %s121 = sphi 0, %s120
      %s135 = sphi 0, %s121
      %s139 = sphi 0, %s139
      %s141 = sphi 0, %s139
      %s142 = sphi 0, %s141
      %s156 = sphi 0, %s142
      %s160 = sphi 0, %s160
      %s162 = sphi 0, %s160
      %s163 = sphi 0, %s162
      %s177 = sphi 0, %s163
      %s181 = sphi 0, %s181
      %s183 = sphi 0, %s181
      %s184 = sphi 0, %s183
      %s198 = sphi 0, %s184
      %s202 = sphi 0, %s202
      %s204 = sphi 0, %s202
      %s205 = sphi 0, %s204
      %s219 = sphi 0, %s205
      %s223 = sphi 0, %s223
      %s225 = sphi 0, %s223
      %s226 = sphi 0, %s225
      %s240 = sphi 0, %s226
      %s248 = sphi 0, %s250
      %s251 = sphi 0, %s248
      %s252 = sphi 0, %s251
      %s268 = sphi 0, %s252
      %s276 = sphi 0, %s278
      %s279 = sphi 0, %s276
      %s280 = sphi 0, %s279
      %s296 = sphi 0, %s280
    $region4: #{mamba_i2p_forward.3} parent=1 // loop_header_branch
      %26 = sbr.rel (%p24) target = $region8
    $region5: #{mamba_i2p_forward.3} parent=1 // loop_body
      %s28 = ssub.s32 %s23, 1
      %s29 = ssub.s32 %s23, 2
      %s36 = sadd.s32 1, %s31
      %p37 = scmp.ge.s32.totalorder %s36, 2
      %s38 = scalar_select %p37, 0, %s36
      %s39 = sadd.s32 1, %s30
      %s40 = scalar_select %p37, %s39, %s30
      %p41 = scmp.ge.s32.totalorder %s40, 2
      %s42 = scalar_select %p41, 0, %s40
      %s43 = ssub.s32 %s30, %s42
      %s44 = ssub.s32 %s31, %s38
      %s45 = sor.u32 %s43, %s44
      %p46 = scmp.eq.s32.totalorder %s45, 0
      %s48 = sadd.s32 %s47, 1
      %s49 = scalar_select %p46, %s47, %s48
      %p52 = pneg %p46
      %p53 = scmp.eq.s32.totalorder %s23, 3
      %p54 = por %p52, %p53
      %p55 = scmp.ne.s32.totalorder %s47, %s50
      %p56 = scmp.eq.s32.totalorder %s23, 0
      %p57 = por %p55, %p56
      %p58 = scmp.ne.s32.totalorder %s47, %s50
      %p59 = scmp.eq.s32.totalorder %s28, 3
      %p60 = por %p58, %p59
      %p61 = scmp.ne.s32.totalorder %s50, %s51
      %p62 = scmp.eq.s32.totalorder %s28, 0
      %p63 = por %p61, %p62
      %p64 = scmp.ne.s32.totalorder %s50, %s51
      %p65 = scmp.eq.s32.totalorder %s29, 3
      %p66 = por %p64, %p65
      %p68 = scmp.ne.s32.totalorder %s51, %s67
      %p69 = scmp.eq.s32.totalorder %s29, 0
      %p70 = por %p68, %p69
      %s71 = ssub.s32 %s30, %s42
      %p72 = scmp.eq.s32.totalorder %s71, 0
      %s74 = sadd.s32 %s73, 1
      %s75 = scalar_select %p72, %s73, %s74
      %p78 = pneg %p72
      %p79 = scmp.eq.s32.totalorder %s23, 3
      %p80 = por %p78, %p79
      %p81 = scmp.ne.s32.totalorder %s73, %s76
      %p82 = scmp.eq.s32.totalorder %s23, 0
      %p83 = por %p81, %p82
      %p84 = scmp.ne.s32.totalorder %s73, %s76
      %p85 = scmp.eq.s32.totalorder %s28, 3
      %p86 = por %p84, %p85
      %p87 = scmp.ne.s32.totalorder %s76, %s77
      %p88 = scmp.eq.s32.totalorder %s28, 0
      %p89 = por %p87, %p88
      %p90 = scmp.ne.s32.totalorder %s76, %s77
      %p91 = scmp.eq.s32.totalorder %s29, 3
      %p92 = por %p90, %p91
      %p94 = scmp.ne.s32.totalorder %s77, %s93
      %p95 = scmp.eq.s32.totalorder %s29, 0
      %p96 = por %p94, %p95
      %s98 = sadd.s32 %s97, 1
      %p101 = scmp.eq.s32.totalorder %s23, 3
      %p102 = scmp.ne.s32.totalorder %s97, %s99
      %p103 = scmp.eq.s32.totalorder %s23, 0
      %p104 = por %p102, %p103
      %p105 = scmp.ne.s32.totalorder %s97, %s99
      %p106 = scmp.eq.s32.totalorder %s28, 3
      %p107 = por %p105, %p106
      %p108 = scmp.ne.s32.totalorder %s99, %s100
      %p109 = scmp.eq.s32.totalorder %s28, 0
      %p110 = por %p108, %p109
      %p111 = scmp.ne.s32.totalorder %s99, %s100
      %p112 = scmp.eq.s32.totalorder %s29, 3
      %p113 = por %p111, %p112
      %p115 = scmp.ne.s32.totalorder %s100, %s114
      %p116 = scmp.eq.s32.totalorder %s29, 0
      %p117 = por %p115, %p116
      %s119 = sadd.s32 %s118, 1
      %p122 = scmp.eq.s32.totalorder %s23, 3
      %p123 = scmp.ne.s32.totalorder %s118, %s120
      %p124 = scmp.eq.s32.totalorder %s23, 0
      %p125 = por %p123, %p124
      %p126 = scmp.ne.s32.totalorder %s118, %s120
      %p127 = scmp.eq.s32.totalorder %s28, 3
      %p128 = por %p126, %p127
      %p129 = scmp.ne.s32.totalorder %s120, %s121
      %p130 = scmp.eq.s32.totalorder %s28, 0
      %p131 = por %p129, %p130
      %p132 = scmp.ne.s32.totalorder %s120, %s121
      %p133 = scmp.eq.s32.totalorder %s29, 3
      %p134 = por %p132, %p133
      %p136 = scmp.ne.s32.totalorder %s121, %s135
      %p137 = scmp.eq.s32.totalorder %s29, 0
      %p138 = por %p136, %p137
      %s140 = sadd.s32 %s139, 1
      %p143 = scmp.eq.s32.totalorder %s23, 3
      %p144 = scmp.ne.s32.totalorder %s139, %s141
      %p145 = scmp.eq.s32.totalorder %s23, 0
      %p146 = por %p144, %p145
      %p147 = scmp.ne.s32.totalorder %s139, %s141
      %p148 = scmp.eq.s32.totalorder %s28, 3
      %p149 = por %p147, %p148
      %p150 = scmp.ne.s32.totalorder %s141, %s142
      %p151 = scmp.eq.s32.totalorder %s28, 0
      %p152 = por %p150, %p151
      %p153 = scmp.ne.s32.totalorder %s141, %s142
      %p154 = scmp.eq.s32.totalorder %s29, 3
      %p155 = por %p153, %p154
      %p157 = scmp.ne.s32.totalorder %s142, %s156
      %p158 = scmp.eq.s32.totalorder %s29, 0
      %p159 = por %p157, %p158
      %s161 = sadd.s32 %s160, 1
      %p164 = scmp.eq.s32.totalorder %s23, 3
      %p165 = scmp.ne.s32.totalorder %s160, %s162
      %p166 = scmp.eq.s32.totalorder %s23, 0
      %p167 = por %p165, %p166
      %p168 = scmp.ne.s32.totalorder %s160, %s162
      %p169 = scmp.eq.s32.totalorder %s28, 3
      %p170 = por %p168, %p169
      %p171 = scmp.ne.s32.totalorder %s162, %s163
      %p172 = scmp.eq.s32.totalorder %s28, 0
      %p173 = por %p171, %p172
      %p174 = scmp.ne.s32.totalorder %s162, %s163
      %p175 = scmp.eq.s32.totalorder %s29, 3
      %p176 = por %p174, %p175
      %p178 = scmp.ne.s32.totalorder %s163, %s177
      %p179 = scmp.eq.s32.totalorder %s29, 0
      %p180 = por %p178, %p179
      %s182 = sadd.s32 %s181, 1
      %p185 = scmp.eq.s32.totalorder %s23, 3
      %p186 = scmp.ne.s32.totalorder %s181, %s183
      %p187 = scmp.eq.s32.totalorder %s23, 0
      %p188 = por %p186, %p187
      %p189 = scmp.ne.s32.totalorder %s181, %s183
      %p190 = scmp.eq.s32.totalorder %s28, 3
      %p191 = por %p189, %p190
      %p192 = scmp.ne.s32.totalorder %s183, %s184
      %p193 = scmp.eq.s32.totalorder %s28, 0
      %p194 = por %p192, %p193
      %p195 = scmp.ne.s32.totalorder %s183, %s184
      %p196 = scmp.eq.s32.totalorder %s29, 3
      %p197 = por %p195, %p196
      %p199 = scmp.ne.s32.totalorder %s184, %s198
      %p200 = scmp.eq.s32.totalorder %s29, 0
      %p201 = por %p199, %p200
      %s203 = sadd.s32 %s202, 1
      %p206 = scmp.eq.s32.totalorder %s23, 3
      %p207 = scmp.ne.s32.totalorder %s202, %s204
      %p208 = scmp.eq.s32.totalorder %s23, 0
      %p209 = por %p207, %p208
      %p210 = scmp.ne.s32.totalorder %s202, %s204
      %p211 = scmp.eq.s32.totalorder %s28, 3
      %p212 = por %p210, %p211
      %p213 = scmp.ne.s32.totalorder %s204, %s205
      %p214 = scmp.eq.s32.totalorder %s28, 0
      %p215 = por %p213, %p214
      %p216 = scmp.ne.s32.totalorder %s204, %s205
      %p217 = scmp.eq.s32.totalorder %s29, 3
      %p218 = por %p216, %p217
      %p220 = scmp.ne.s32.totalorder %s205, %s219
      %p221 = scmp.eq.s32.totalorder %s29, 0
      %p222 = por %p220, %p221
      %s224 = sadd.s32 %s223, 1
      %p227 = scmp.eq.s32.totalorder %s23, 3
      %p228 = scmp.ne.s32.totalorder %s223, %s225
      %p229 = scmp.eq.s32.totalorder %s23, 0
      %p230 = por %p228, %p229
      %p231 = scmp.ne.s32.totalorder %s223, %s225
      %p232 = scmp.eq.s32.totalorder %s28, 3
      %p233 = por %p231, %p232
      %p234 = scmp.ne.s32.totalorder %s225, %s226
      %p235 = scmp.eq.s32.totalorder %s28, 0
      %p236 = por %p234, %p235
      %p237 = scmp.ne.s32.totalorder %s225, %s226
      %p238 = scmp.eq.s32.totalorder %s29, 3
      %p239 = por %p237, %p238
      %p241 = scmp.ne.s32.totalorder %s226, %s240
      %p242 = scmp.eq.s32.totalorder %s29, 0
      %p243 = por %p241, %p242
      %s244 = ssub.s32 %s30, %s42
      %s245 = ssub.s32 %s31, %s38
      %s246 = sor.u32 %s244, %s245
      %p247 = scmp.eq.s32.totalorder %s246, 0
      %s249 = sadd.s32 %s248, 1
      %s250 = scalar_select %p247, %s248, %s249
      %p253 = pneg %p247
      %p254 = scmp.eq.s32.totalorder %s23, 3
      %p255 = por %p253, %p254
      %p256 = scmp.ne.s32.totalorder %s248, %s251
      %p257 = scmp.eq.s32.totalorder %s23, 0
      %p258 = por %p256, %p257
      %p259 = scmp.ne.s32.totalorder %s248, %s251
      %p260 = scmp.eq.s32.totalorder %s28, 3
      %p261 = por %p259, %p260
      %p262 = scmp.ne.s32.totalorder %s251, %s252
      %p263 = scmp.eq.s32.totalorder %s28, 0
      %p264 = por %p262, %p263
      %p265 = scmp.ne.s32.totalorder %s251, %s252
      %p266 = scmp.eq.s32.totalorder %s29, 3
      %p267 = por %p265, %p266
      %p269 = scmp.ne.s32.totalorder %s252, %s268
      %p270 = scmp.eq.s32.totalorder %s29, 0
      %p271 = por %p269, %p270
      %s272 = ssub.s32 %s30, %s42
      %s273 = ssub.s32 %s31, %s38
      %s274 = sor.u32 %s272, %s273
      %p275 = scmp.eq.s32.totalorder %s274, 0
      %s277 = sadd.s32 %s276, 1
      %s278 = scalar_select %p275, %s276, %s277
      %p281 = pneg %p275
      %p282 = scmp.eq.s32.totalorder %s23, 3
      %p283 = por %p281, %p282
      %p284 = scmp.ne.s32.totalorder %s276, %s279
      %p285 = scmp.eq.s32.totalorder %s23, 0
      %p286 = por %p284, %p285
      %p287 = scmp.ne.s32.totalorder %s276, %s279
      %p288 = scmp.eq.s32.totalorder %s28, 3
      %p289 = por %p287, %p288
      %p290 = scmp.ne.s32.totalorder %s279, %s280
      %p291 = scmp.eq.s32.totalorder %s28, 0
      %p292 = por %p290, %p291
      %p293 = scmp.ne.s32.totalorder %s279, %s280
      %p294 = scmp.eq.s32.totalorder %s29, 3
      %p295 = por %p293, %p294
      %p297 = scmp.ne.s32.totalorder %s280, %s296
      %p298 = scmp.eq.s32.totalorder %s29, 0
      %p299 = por %p297, %p298
      %p300 = scmp.le.s32.totalorder 1, %s23
      %p301 = scmp.lt.s32.totalorder %s23, 5
      %p302 = pnand %p300, %p301
      %p303 = pneg %p302
      // Predicated region
      $region9: #{mamba_i2p_forward.3} parent=5 // pred_check
        _
      $region10: #{mamba_i2p_forward.3} parent=5 // pred_check_branch
        %305 = sbr.rel (%p302) target = $region12
      $region11: #{mamba_i2p_forward.3} parent=5 // pred_region
        %s306 = ssub.s32 %s23, 1
        // Predicated region
        $region13: #{mamba_i2p_forward.3} parent=11 // pred_check
          %p307 = pneg %p110
        $region14: #{mamba_i2p_forward.3} parent=11 // pred_check_branch
          %309 = sbr.rel (%p307) target = $region16
        $region15: #{mamba_i2p_forward.3} parent=11 // pred_region
          _
        $region16: #{mamba_i2p_forward.3} parent=11 // pred_fallthru
          _
        // Predicated region
        $region17: #{mamba_i2p_forward.3} parent=11 // pred_check
          %p310 = pneg %p131
        $region18: #{mamba_i2p_forward.3} parent=11 // pred_check_branch
          %312 = sbr.rel (%p310) target = $region20
        $region19: #{mamba_i2p_forward.3} parent=11 // pred_region
          _
        $region20: #{mamba_i2p_forward.3} parent=11 // pred_fallthru
          _
        // Predicated region
        $region21: #{mamba_i2p_forward.3} parent=11 // pred_check
          %p313 = pneg %p152
        $region22: #{mamba_i2p_forward.3} parent=11 // pred_check_branch
          %315 = sbr.rel (%p313) target = $region24
        $region23: #{mamba_i2p_forward.3} parent=11 // pred_region
          _
        $region24: #{mamba_i2p_forward.3} parent=11 // pred_fallthru
          _
        // Predicated region
        $region25: #{mamba_i2p_forward.3} parent=11 // pred_check
          %p316 = pneg %p173
        $region26: #{mamba_i2p_forward.3} parent=11 // pred_check_branch
          %318 = sbr.rel (%p316) target = $region28
        $region27: #{mamba_i2p_forward.3} parent=11 // pred_region
          _
        $region28: #{mamba_i2p_forward.3} parent=11 // pred_fallthru
          _
        // Predicated region
        $region29: #{mamba_i2p_forward.3} parent=11 // pred_check
          %p319 = pneg %p194
        $region30: #{mamba_i2p_forward.3} parent=11 // pred_check_branch
          %321 = sbr.rel (%p319) target = $region32
        $region31: #{mamba_i2p_forward.3} parent=11 // pred_region
          _
        $region32: #{mamba_i2p_forward.3} parent=11 // pred_fallthru
          _
        // Predicated region
        $region33: #{mamba_i2p_forward.3} parent=11 // pred_check
          %p322 = pneg %p215
        $region34: #{mamba_i2p_forward.3} parent=11 // pred_check_branch
          %324 = sbr.rel (%p322) target = $region36
        $region35: #{mamba_i2p_forward.3} parent=11 // pred_region
          _
        $region36: #{mamba_i2p_forward.3} parent=11 // pred_fallthru
          _
        // Predicated region
        $region37: #{mamba_i2p_forward.3} parent=11 // pred_check
          %p325 = pneg %p236
        $region38: #{mamba_i2p_forward.3} parent=11 // pred_check_branch
          %327 = sbr.rel (%p325) target = $region40
        $region39: #{mamba_i2p_forward.3} parent=11 // pred_region
          _
        $region40: #{mamba_i2p_forward.3} parent=11 // pred_fallthru
          _
      $region12: #{mamba_i2p_forward.3} parent=5 // pred_fallthru
        _
      %p328 = scmp.lt.s32.totalorder %s23, 4
      // Predicated region
      $region41: #{mamba_i2p_forward.3} parent=5 // pred_check
        %p329 = pneg %p328
      $region42: #{mamba_i2p_forward.3} parent=5 // pred_check_branch
        %331 = sbr.rel (%p329) target = $region44
      $region43: #{mamba_i2p_forward.3} parent=5 // pred_region
        // Predicated region
        $region45: #{mamba_i2p_forward.3} parent=43 // pred_check
          %p332 = pneg %p57
        $region46: #{mamba_i2p_forward.3} parent=43 // pred_check_branch
          %334 = sbr.rel (%p332) target = $region48
        $region47: #{mamba_i2p_forward.3} parent=43 // pred_region
          %s335 = sand.u32 %s47, 1
          %s336 = sand.u32 %s47, 1
          %s337 = smul.addr %s336, 64
          %s338 = scalar_lea.vmem [#allocation2], %s337
          %s339 = smul.addr %s30, 32
          %s340 = sadd.s32 %s31, %s339
          %s341 = smul.addr %s340, 4
          %s342 = scalar_lea.vmem %s0, %s341
          // Predicated region
          $region49: #{mamba_i2p_forward.3} parent=47 // pred_check
            _
          $region50: #{mamba_i2p_forward.3} parent=47 // pred_check_branch
            %344 = sbr.rel (0) target = $region52
          $region51: #{mamba_i2p_forward.3} parent=47 // pred_region
            // Predicated region
            $region53: #{mamba_i2p_forward.3} parent=51 // pred_check
              _
            $region54: #{mamba_i2p_forward.3} parent=51 // pred_check_branch
              %346 = sbr.rel target = $region56
            $region55: #{mamba_i2p_forward.3} parent=51 // pred_region
              // Predicated region
              $region68: #{mamba_i2p_forward.3} parent=55 // pred_check
                _
              $region69: #{mamba_i2p_forward.3} parent=55 // pred_check_branch
                %392 = sbr.rel (0) target = $region71
              $region70: #{mamba_i2p_forward.3} parent=55 // pred_region
                loop: start=0, step=1, limit=1
                $region72: #{mamba_i2p_forward.3} parent=70 // loop_pre_header
                  _
                $region73: #{mamba_i2p_forward.3} parent=70 // loop_header
                  %s394 = sphi 0, %s398
                  %p395 = scmp.ge.s32.totalorder %s394, 1
                  %s399 = sphi %s342, %s342
                  %s400 = sphi %s338, %s338
                $region74: #{mamba_i2p_forward.3} parent=70 // loop_header_branch
                  %397 = sbr.rel (%p395) target = $region78
                $region75: #{mamba_i2p_forward.3} parent=70 // loop_body
                  _
                $region76: #{mamba_i2p_forward.3} parent=70 // loop_footer
                  %s398 = sadd.s32 1, %s394
                $region77: #{mamba_i2p_forward.3} parent=70 // loop_footer_branch
                  %393 = sbr.rel target = $region73
                $region78: #{mamba_i2p_forward.3} parent=70 // loop_exit
                  _
                %s402 = ssub.s32 16, 1
                loop: start=0, step=1, limit=1
                $region79: #{mamba_i2p_forward.3} parent=70 // loop_pre_header
                  _
                $region80: #{mamba_i2p_forward.3} parent=70 // loop_header
                  %s404 = sphi 0, %s408
                  %p405 = scmp.ge.s32.totalorder %s404, 1
                  %s409 = sphi %s342, %s342
                  %s410 = sphi %s338, %s338
                $region81: #{mamba_i2p_forward.3} parent=70 // loop_header_branch
                  %407 = sbr.rel (%p405) target = $region85
                $region82: #{mamba_i2p_forward.3} parent=70 // loop_body
                  %v411 = vld [vmem:[%s409] sm:%s402]
                  %412 = vst [vmem:[%s410] sm:%s402] %v411
                  %v413 = vld [vmem:[%s409 + $0x8] sm:%s402]
                  %414 = vst [vmem:[%s410 + $0x4] sm:%s402] %v413
                  %v415 = vld [vmem:[%s409 + $0x10] sm:%s402]
                  %416 = vst [vmem:[%s410 + $0x8] sm:%s402] %v415
                  %v417 = vld [vmem:[%s409 + $0x18] sm:%s402]
                  %418 = vst [vmem:[%s410 + $0xc] sm:%s402] %v417
                  %v419 = vld [vmem:[%s409 + $0x20] sm:%s402]
                  %420 = vst [vmem:[%s410 + $0x10] sm:%s402] %v419
                  %v421 = vld [vmem:[%s409 + $0x28] sm:%s402]
                  %422 = vst [vmem:[%s410 + $0x14] sm:%s402] %v421
                  %v423 = vld [vmem:[%s409 + $0x30] sm:%s402]
                  %424 = vst [vmem:[%s410 + $0x18] sm:%s402] %v423
                  %v425 = vld [vmem:[%s409 + $0x38] sm:%s402]
                  %426 = vst [vmem:[%s410 + $0x1c] sm:%s402] %v425
                  %v427 = vld [vmem:[%s409 + $0x40] sm:%s402]
                  %428 = vst [vmem:[%s410 + $0x20] sm:%s402] %v427
                  %v429 = vld [vmem:[%s409 + $0x48] sm:%s402]
                  %430 = vst [vmem:[%s410 + $0x24] sm:%s402] %v429
                  %v431 = vld [vmem:[%s409 + $0x50] sm:%s402]
                  %432 = vst [vmem:[%s410 + $0x28] sm:%s402] %v431
                  %v433 = vld [vmem:[%s409 + $0x58] sm:%s402]
                  %434 = vst [vmem:[%s410 + $0x2c] sm:%s402] %v433
                  %v435 = vld [vmem:[%s409 + $0x60] sm:%s402]
                  %436 = vst [vmem:[%s410 + $0x30] sm:%s402] %v435
                  %v437 = vld [vmem:[%s409 + $0x68] sm:%s402]
                  %438 = vst [vmem:[%s410 + $0x34] sm:%s402] %v437
                  %v439 = vld [vmem:[%s409 + $0x70] sm:%s402]
                  %440 = vst [vmem:[%s410 + $0x38] sm:%s402] %v439
                  %v441 = vld [vmem:[%s409 + $0x78] sm:%s402]
                  %442 = vst [vmem:[%s410 + $0x3c] sm:%s402] %v441
                $region83: #{mamba_i2p_forward.3} parent=70 // loop_footer
                  %s408 = sadd.s32 1, %s404
                $region84: #{mamba_i2p_forward.3} parent=70 // loop_footer_branch
                  %403 = sbr.rel target = $region80
                $region85: #{mamba_i2p_forward.3} parent=70 // loop_exit
                  _
              $region71: #{mamba_i2p_forward.3} parent=55 // pred_fallthru
                _
            $region56: #{mamba_i2p_forward.3} parent=51 // pred_fallthru
              _
            // Predicated region
            $region57: #{mamba_i2p_forward.3} parent=51 // pred_check
              _
            $region58: #{mamba_i2p_forward.3} parent=51 // pred_check_branch
              %348 = sbr.rel (0) target = $region60
            $region59: #{mamba_i2p_forward.3} parent=51 // pred_region
              %s350 = ssub.s32 16, 1
              loop: start=0, step=1, limit=1
              $region61: #{mamba_i2p_forward.3} parent=59 // loop_pre_header
                _
              $region62: #{mamba_i2p_forward.3} parent=59 // loop_header
                %s352 = sphi 0, %s356
                %p353 = scmp.ge.s32.totalorder %s352, 1
                %s357 = sphi %s342, %s342
                %s358 = sphi %s338, %s338
              $region63: #{mamba_i2p_forward.3} parent=59 // loop_header_branch
                %355 = sbr.rel (%p353) target = $region67
              $region64: #{mamba_i2p_forward.3} parent=59 // loop_body
                %v359 = vld [vmem:[%s357] sm:%s350]
                %360 = vst [vmem:[%s358] sm:%s350] %v359
                %v361 = vld [vmem:[%s357 + $0x8] sm:%s350]
                %362 = vst [vmem:[%s358 + $0x4] sm:%s350] %v361
                %v363 = vld [vmem:[%s357 + $0x10] sm:%s350]
                %364 = vst [vmem:[%s358 + $0x8] sm:%s350] %v363
                %v365 = vld [vmem:[%s357 + $0x18] sm:%s350]
                %366 = vst [vmem:[%s358 + $0xc] sm:%s350] %v365
                %v367 = vld [vmem:[%s357 + $0x20] sm:%s350]
                %368 = vst [vmem:[%s358 + $0x10] sm:%s350] %v367
                %v369 = vld [vmem:[%s357 + $0x28] sm:%s350]
                %370 = vst [vmem:[%s358 + $0x14] sm:%s350] %v369
                %v371 = vld [vmem:[%s357 + $0x30] sm:%s350]
                %372 = vst [vmem:[%s358 + $0x18] sm:%s350] %v371
                %v373 = vld [vmem:[%s357 + $0x38] sm:%s350]
                %374 = vst [vmem:[%s358 + $0x1c] sm:%s350] %v373
                %v375 = vld [vmem:[%s357 + $0x40] sm:%s350]
                %376 = vst [vmem:[%s358 + $0x20] sm:%s350] %v375
                %v377 = vld [vmem:[%s357 + $0x48] sm:%s350]
                %378 = vst [vmem:[%s358 + $0x24] sm:%s350] %v377
                %v379 = vld [vmem:[%s357 + $0x50] sm:%s350]
                %380 = vst [vmem:[%s358 + $0x28] sm:%s350] %v379
                %v381 = vld [vmem:[%s357 + $0x58] sm:%s350]
                %382 = vst [vmem:[%s358 + $0x2c] sm:%s350] %v381
                %v383 = vld [vmem:[%s357 + $0x60] sm:%s350]
                %384 = vst [vmem:[%s358 + $0x30] sm:%s350] %v383
                %v385 = vld [vmem:[%s357 + $0x68] sm:%s350]
                %386 = vst [vmem:[%s358 + $0x34] sm:%s350] %v385
                %v387 = vld [vmem:[%s357 + $0x70] sm:%s350]
                %388 = vst [vmem:[%s358 + $0x38] sm:%s350] %v387
                %v389 = vld [vmem:[%s357 + $0x78] sm:%s350]
                %390 = vst [vmem:[%s358 + $0x3c] sm:%s350] %v389
              $region65: #{mamba_i2p_forward.3} parent=59 // loop_footer
                %s356 = sadd.s32 1, %s352
              $region66: #{mamba_i2p_forward.3} parent=59 // loop_footer_branch
                %351 = sbr.rel target = $region62
              $region67: #{mamba_i2p_forward.3} parent=59 // loop_exit
                _
            $region60: #{mamba_i2p_forward.3} parent=51 // pred_fallthru
              _
          $region52: #{mamba_i2p_forward.3} parent=47 // pred_fallthru
            _
          %443 = vnop
        $region48: #{mamba_i2p_forward.3} parent=43 // pred_fallthru
          _
        // Predicated region
        $region86: #{mamba_i2p_forward.3} parent=43 // pred_check
          %p444 = pneg %p83
        $region87: #{mamba_i2p_forward.3} parent=43 // pred_check_branch
          %446 = sbr.rel (%p444) target = $region89
        $region88: #{mamba_i2p_forward.3} parent=43 // pred_region
          %p447 = scmp.lt.s32.totalorder %s30, 1
          %s448 = scalar_select %p447, %s30, 1
          %s449 = smul.addr %s448, 32
          %s450 = smul.addr %s449, 8
          %s451 = scalar_lea.vmem %s1, %s450
        $region89: #{mamba_i2p_forward.3} parent=43 // pred_fallthru
          _
      $region44: #{mamba_i2p_forward.3} parent=5 // pred_fallthru
        _
      %p452 = scmp.le.s32.totalorder 1, %s23
      %p453 = scmp.lt.s32.totalorder %s23, 5
      %p454 = pnand %p452, %p453
      %p455 = pneg %p454
      // Predicated region
      $region90: #{mamba_i2p_forward.3} parent=5 // pred_check
        _
      $region91: #{mamba_i2p_forward.3} parent=5 // pred_check_branch
        %457 = sbr.rel (%p454) target = $region93
      $region92: #{mamba_i2p_forward.3} parent=5 // pred_region
        %s458 = ssub.s32 %s23, 1
        %s459 = sand.u32 %s50, 1
        %s460 = sand.u32 %s50, 1
        %s461 = smul.addr %s460, 64
        %s462 = scalar_lea.vmem [#allocation2], %s461
        // Predicated region
        $region94: #{mamba_i2p_forward.3} parent=92 // pred_check
          %p463 = pneg %p63
        $region95: #{mamba_i2p_forward.3} parent=92 // pred_check_branch
          %465 = sbr.rel (%p463) target = $region97
        $region96: #{mamba_i2p_forward.3} parent=92 // pred_region
          _
        $region97: #{mamba_i2p_forward.3} parent=92 // pred_fallthru
          _
        %s466 = sand.u32 %s50, 1
        %s467 = sand.u32 %s50, 1
        %s468 = smul.addr %s467, 64
        %s469 = scalar_lea.vmem [#allocation2], %s468
        %p470 = pneg %p63
        %p471 = pneg %p60
        %p472 = scmp.lt.s32.totalorder %s32, 1
        %s473 = scalar_select %p472, %s32, 1
        %s474 = smul.addr %s473, 32
        %s475 = smul.addr %s474, 8
        %s476 = scalar_lea.vmem %s1, %s475
        %p477 = pneg %p89
        %p478 = pneg %p86
        %p479 = pneg %p110
        %p480 = pneg %p107
        %p481 = pneg %p131
        %p482 = pneg %p128
        %p483 = pneg %p152
        %p484 = pneg %p149
        %p485 = pneg %p173
        %p486 = pneg %p170
        %p487 = pneg %p194
        %p488 = pneg %p191
        %p489 = pneg %p215
        %p490 = pneg %p212
        %p491 = pneg %p236
        %p492 = pneg %p233
        %p493 = pneg %p264
        %p494 = pneg %p261
        %s495 = sand.u32 %s251, 1
        %s496 = scalar_lea.sflag [#allocation4], %s495
        %s497 = sand.u32 %s251, 1
        %s498 = smul.addr %s497, 32
        %s499 = scalar_lea.vmem [#allocation3], %s498
        %p500 = pneg %p292
        %p501 = pneg %p289
        %s502 = sand.u32 %s279, 1
        %s503 = scalar_lea.sflag [#allocation6], %s502
        %s504 = sand.u32 %s279, 1
        %s505 = scalar_lea.vmem [#allocation5], %s504
        %p506 = scmp.lt.s32.totalorder %s32, 1
        %s507 = scalar_select %p506, %s32, 1
        %s508 = smul.addr %s507, 32
        %s509 = smul.addr %s508, 8
        %s510 = scalar_lea.vmem %s1, %s509
        %v511 = vld [vmem:[%s462] sm:$0xf]
        %v512 = vld [vmem:[%s462 + $0x4] sm:$0xf]
        %v513 = vld [vmem:[%s462 + $0x8] sm:$0xf]
        %v514 = vld [vmem:[%s462 + $0xc] sm:$0xf]
        %v515 = vld [vmem:[%s462 + $0x10] sm:$0xf]
        %v516 = vld [vmem:[%s462 + $0x14] sm:$0xf]
        %v517 = vld [vmem:[%s462 + $0x18] sm:$0xf]
        %v518 = vld [vmem:[%s462 + $0x1c] sm:$0xf]
        %v519 = vld [vmem:[%s462 + $0x20] sm:$0xf]
        %v520 = vld [vmem:[%s462 + $0x24] sm:$0xf]
        %v521 = vld [vmem:[%s462 + $0x28] sm:$0xf]
        %v522 = vld [vmem:[%s462 + $0x2c] sm:$0xf]
        %v523 = vld [vmem:[%s462 + $0x30] sm:$0xf]
        %v524 = vld [vmem:[%s462 + $0x34] sm:$0xf]
        %v525 = vld [vmem:[%s462 + $0x38] sm:$0xf]
        %v526 = vld [vmem:[%s462 + $0x3c] sm:$0xf]
        %v527 = vld [vmem:[%s2] sm:$0xf]
        %v528 = vld [vmem:[%s2 + $0x4] sm:$0xf]
        %v529 = vld [vmem:[%s2 + $0x8] sm:$0xf]
        %v530 = vld [vmem:[%s2 + $0xc] sm:$0xf]
        %v531 = vld [vmem:[%s2 + $0x10] sm:$0xf]
        %v532 = vld [vmem:[%s2 + $0x14] sm:$0xf]
        %v533 = vld [vmem:[%s2 + $0x18] sm:$0xf]
        %v534 = vld [vmem:[%s2 + $0x1c] sm:$0xf]
        %v535 = vld [vmem:[%s2 + $0x20] sm:$0xf]
        %v536 = vld [vmem:[%s2 + $0x24] sm:$0xf]
        %v537 = vld [vmem:[%s2 + $0x28] sm:$0xf]
        %v538 = vld [vmem:[%s2 + $0x2c] sm:$0xf]
        %v539 = vld [vmem:[%s2 + $0x30] sm:$0xf]
        %v540 = vld [vmem:[%s2 + $0x34] sm:$0xf]
        %v541 = vld [vmem:[%s2 + $0x38] sm:$0xf]
        %v542 = vld [vmem:[%s2 + $0x3c] sm:$0xf]
        %v543 = vld [vmem:[%s2 + $0x40] sm:$0xf]
        %v544 = vld [vmem:[%s2 + $0x44] sm:$0xf]
        %v545 = vld [vmem:[%s2 + $0x48] sm:$0xf]
        %v546 = vld [vmem:[%s2 + $0x4c] sm:$0xf]
        %v547 = vld [vmem:[%s2 + $0x50] sm:$0xf]
        %v548 = vld [vmem:[%s2 + $0x54] sm:$0xf]
        %v549 = vld [vmem:[%s2 + $0x58] sm:$0xf]
        %v550 = vld [vmem:[%s2 + $0x5c] sm:$0xf]
        %v551 = vld [vmem:[%s2 + $0x60] sm:$0xf]
        %v552 = vld [vmem:[%s2 + $0x64] sm:$0xf]
        %v553 = vld [vmem:[%s2 + $0x68] sm:$0xf]
        %v554 = vld [vmem:[%s2 + $0x6c] sm:$0xf]
        %v555 = vld [vmem:[%s2 + $0x70] sm:$0xf]
        %v556 = vld [vmem:[%s2 + $0x74] sm:$0xf]
        %v557 = vld [vmem:[%s2 + $0x78] sm:$0xf]
        %v558 = vld [vmem:[%s2 + $0x7c] sm:$0xf]
        %v559 = vld [vmem:[%s510] sm:$0xff]
        %v560 = vld [vmem:[%s510 + $0x8] sm:$0xff]
        %v561 = vld [vmem:[%s510 + $0x10] sm:$0xff]
        %v562 = vld [vmem:[%s510 + $0x18] sm:$0xff]
        %v563 = vld [vmem:[%s510 + $0x20] sm:$0xff]
        %v564 = vld [vmem:[%s510 + $0x28] sm:$0xff]
        %v565 = vld [vmem:[%s510 + $0x30] sm:$0xff]
        %v566 = vld [vmem:[%s510 + $0x38] sm:$0xff]
        %v567 = vld [vmem:[%s510 + $0x40] sm:$0xff]
        %v568 = vld [vmem:[%s510 + $0x48] sm:$0xff]
        %v569 = vld [vmem:[%s510 + $0x50] sm:$0xff]
        %v570 = vld [vmem:[%s510 + $0x58] sm:$0xff]
        %v571 = vld [vmem:[%s510 + $0x60] sm:$0xff]
        %v572 = vld [vmem:[%s510 + $0x68] sm:$0xff]
        %v573 = vld [vmem:[%s510 + $0x70] sm:$0xff]
        %v574 = vld [vmem:[%s510 + $0x78] sm:$0xff]
        %v575 = vld [vmem:[%s510 + $0x80] sm:$0xff]
        %v576 = vld [vmem:[%s510 + $0x88] sm:$0xff]
        %v577 = vld [vmem:[%s510 + $0x90] sm:$0xff]
        %v578 = vld [vmem:[%s510 + $0x98] sm:$0xff]
        %v579 = vld [vmem:[%s510 + $0xa0] sm:$0xff]
        %v580 = vld [vmem:[%s510 + $0xa8] sm:$0xff]
        %v581 = vld [vmem:[%s510 + $0xb0] sm:$0xff]
        %v582 = vld [vmem:[%s510 + $0xb8] sm:$0xff]
        %v583 = vld [vmem:[%s510 + $0xc0] sm:$0xff]
        %v584 = vld [vmem:[%s510 + $0xc8] sm:$0xff]
        %v585 = vld [vmem:[%s510 + $0xd0] sm:$0xff]
        %v586 = vld [vmem:[%s510 + $0xd8] sm:$0xff]
        %v587 = vld [vmem:[%s510 + $0xe0] sm:$0xff]
        %v588 = vld [vmem:[%s510 + $0xe8] sm:$0xff]
        %v589 = vld [vmem:[%s510 + $0xf0] sm:$0xff]
        %v590 = vld [vmem:[%s510 + $0xf8] sm:$0xff]
        %592 = vset.pattern.permute.xlu0 0
        %593 = vperm.xlu0 %592, %v559
        %v594 = vpop.permute.xlu0 %593
        %597 = vset.pattern.permute.xlu0 0
        %598 = vperm.xlu0 %597, %v560
        %v599 = vpop.permute.xlu0 %598
        %602 = vset.pattern.permute.xlu0 0
        %603 = vperm.xlu0 %602, %v561
        %v604 = vpop.permute.xlu0 %603
        %607 = vset.pattern.permute.xlu0 0
        %608 = vperm.xlu0 %607, %v562
        %v609 = vpop.permute.xlu0 %608
        %612 = vset.pattern.permute.xlu0 0
        %613 = vperm.xlu0 %612, %v563
        %v614 = vpop.permute.xlu0 %613
        %617 = vset.pattern.permute.xlu0 0
        %618 = vperm.xlu0 %617, %v564
        %v619 = vpop.permute.xlu0 %618
        %622 = vset.pattern.permute.xlu0 0
        %623 = vperm.xlu0 %622, %v565
        %v624 = vpop.permute.xlu0 %623
        %627 = vset.pattern.permute.xlu0 0
        %628 = vperm.xlu0 %627, %v566
        %v629 = vpop.permute.xlu0 %628
        %632 = vset.pattern.permute.xlu0 0
        %633 = vperm.xlu0 %632, %v567
        %v634 = vpop.permute.xlu0 %633
        %637 = vset.pattern.permute.xlu0 0
        %638 = vperm.xlu0 %637, %v568
        %v639 = vpop.permute.xlu0 %638
        %642 = vset.pattern.permute.xlu0 0
        %643 = vperm.xlu0 %642, %v569
        %v644 = vpop.permute.xlu0 %643
        %647 = vset.pattern.permute.xlu0 0
        %648 = vperm.xlu0 %647, %v570
        %v649 = vpop.permute.xlu0 %648
        %652 = vset.pattern.permute.xlu0 0
        %653 = vperm.xlu0 %652, %v571
        %v654 = vpop.permute.xlu0 %653
        %657 = vset.pattern.permute.xlu0 0
        %658 = vperm.xlu0 %657, %v572
        %v659 = vpop.permute.xlu0 %658
        %662 = vset.pattern.permute.xlu0 0
        %663 = vperm.xlu0 %662, %v573
        %v664 = vpop.permute.xlu0 %663
        %667 = vset.pattern.permute.xlu0 0
        %668 = vperm.xlu0 %667, %v574
        %v669 = vpop.permute.xlu0 %668
        %672 = vset.pattern.permute.xlu0 0
        %673 = vperm.xlu0 %672, %v575
        %v674 = vpop.permute.xlu0 %673
        %677 = vset.pattern.permute.xlu0 0
        %678 = vperm.xlu0 %677, %v576
        %v679 = vpop.permute.xlu0 %678
        %682 = vset.pattern.permute.xlu0 0
        %683 = vperm.xlu0 %682, %v577
        %v684 = vpop.permute.xlu0 %683
        %687 = vset.pattern.permute.xlu0 0
        %688 = vperm.xlu0 %687, %v578
        %v689 = vpop.permute.xlu0 %688
        %692 = vset.pattern.permute.xlu0 0
        %693 = vperm.xlu0 %692, %v579
        %v694 = vpop.permute.xlu0 %693
        %697 = vset.pattern.permute.xlu0 0
        %698 = vperm.xlu0 %697, %v580
        %v699 = vpop.permute.xlu0 %698
        %702 = vset.pattern.permute.xlu0 0
        %703 = vperm.xlu0 %702, %v581
        %v704 = vpop.permute.xlu0 %703
        %707 = vset.pattern.permute.xlu0 0
        %708 = vperm.xlu0 %707, %v582
        %v709 = vpop.permute.xlu0 %708
        %712 = vset.pattern.permute.xlu0 0
        %713 = vperm.xlu0 %712, %v583
        %v714 = vpop.permute.xlu0 %713
        %717 = vset.pattern.permute.xlu0 0
        %718 = vperm.xlu0 %717, %v584
        %v719 = vpop.permute.xlu0 %718
        %722 = vset.pattern.permute.xlu0 0
        %723 = vperm.xlu0 %722, %v585
        %v724 = vpop.permute.xlu0 %723
        %727 = vset.pattern.permute.xlu0 0
        %728 = vperm.xlu0 %727, %v586
        %v729 = vpop.permute.xlu0 %728
        %732 = vset.pattern.permute.xlu0 0
        %733 = vperm.xlu0 %732, %v587
        %v734 = vpop.permute.xlu0 %733
        %737 = vset.pattern.permute.xlu0 0
        %738 = vperm.xlu0 %737, %v588
        %v739 = vpop.permute.xlu0 %738
        %742 = vset.pattern.permute.xlu0 0
        %743 = vperm.xlu0 %742, %v589
        %v744 = vpop.permute.xlu0 %743
        %747 = vset.pattern.permute.xlu0 0
        %748 = vperm.xlu0 %747, %v590
        %v749 = vpop.permute.xlu0 %748
        %v783 = vunpack.c.l.b16 %v527
        %v784 = vunpack.c.l.b16 %v528
        %v785 = vunpack.c.l.b16 %v529
        %v786 = vunpack.c.l.b16 %v530
        %v787 = vunpack.c.l.b16 %v531
        %v788 = vunpack.c.l.b16 %v532
        %v789 = vunpack.c.l.b16 %v533
        %v790 = vunpack.c.l.b16 %v534
        %v791 = vunpack.c.l.b16 %v535
        %v792 = vunpack.c.l.b16 %v536
        %v793 = vunpack.c.l.b16 %v537
        %v794 = vunpack.c.l.b16 %v538
        %v795 = vunpack.c.l.b16 %v539
        %v796 = vunpack.c.l.b16 %v540
        %v797 = vunpack.c.l.b16 %v541
        %v798 = vunpack.c.l.b16 %v542
        %v799 = vunpack.c.l.b16 %v543
        %v800 = vunpack.c.l.b16 %v544
        %v801 = vunpack.c.l.b16 %v545
        %v802 = vunpack.c.l.b16 %v546
        %v803 = vunpack.c.l.b16 %v547
        %v804 = vunpack.c.l.b16 %v548
        %v805 = vunpack.c.l.b16 %v549
        %v806 = vunpack.c.l.b16 %v550
        %v807 = vunpack.c.l.b16 %v551
        %v808 = vunpack.c.l.b16 %v552
        %v809 = vunpack.c.l.b16 %v553
        %v810 = vunpack.c.l.b16 %v554
        %v811 = vunpack.c.l.b16 %v555
        %v812 = vunpack.c.l.b16 %v556
        %v813 = vunpack.c.l.b16 %v557
        %v814 = vunpack.c.l.b16 %v558
        %v815 = vpack.c.b16 %v784, %v783
        %v816 = vpack.c.b16 %v786, %v785
        %v817 = vpack.c.b16 %v788, %v787
        %v818 = vpack.c.b16 %v790, %v789
        %v819 = vpack.c.b16 %v792, %v791
        %v820 = vpack.c.b16 %v794, %v793
        %v821 = vpack.c.b16 %v796, %v795
        %v822 = vpack.c.b16 %v798, %v797
        %v823 = vpack.c.b16 %v800, %v799
        %v824 = vpack.c.b16 %v802, %v801
        %v825 = vpack.c.b16 %v804, %v803
        %v826 = vpack.c.b16 %v806, %v805
        %v827 = vpack.c.b16 %v808, %v807
        %v828 = vpack.c.b16 %v810, %v809
        %v829 = vpack.c.b16 %v812, %v811
        %v830 = vpack.c.b16 %v814, %v813
        %v863 = vunpack.c.l.b16 %v511
        %v864 = vunpack.c.l.b16 %v512
        %v865 = vunpack.c.l.b16 %v513
        %v866 = vunpack.c.l.b16 %v514
        %v867 = vunpack.c.l.b16 %v515
        %v868 = vunpack.c.l.b16 %v516
        %v869 = vunpack.c.l.b16 %v517
        %v870 = vunpack.c.l.b16 %v518
        %v871 = vunpack.c.l.b16 %v519
        %v872 = vunpack.c.l.b16 %v520
        %v873 = vunpack.c.l.b16 %v521
        %v874 = vunpack.c.l.b16 %v522
        %v875 = vunpack.c.l.b16 %v523
        %v876 = vunpack.c.l.b16 %v524
        %v877 = vunpack.c.l.b16 %v525
        %v878 = vunpack.c.l.b16 %v526
        %v879 = vpack.c.b16 %v864, %v863
        %v880 = vpack.c.b16 %v866, %v865
        %v881 = vpack.c.b16 %v868, %v867
        %v882 = vpack.c.b16 %v870, %v869
        %v883 = vpack.c.b16 %v872, %v871
        %v884 = vpack.c.b16 %v874, %v873
        %v885 = vpack.c.b16 %v876, %v875
        %v886 = vpack.c.b16 %v878, %v877
        %895 = vmatpush.bf16.msra.mxu0 %v886
        %896 = vmatpush.bf16.msra.mxu0 %v885
        %897 = vmatpush.bf16.msra.mxu0 %v884
        %898 = vmatpush.bf16.msra.mxu0 %v883
        %899 = vmatpush.bf16.msra.mxu0 %v882
        %900 = vmatpush.bf16.msra.mxu0 %v881
        %901 = vmatpush.bf16.msra.mxu0 %v880
        %902 = vmatpush.bf16.msra.mxu0 %v879
        %903 = vmatmul.bf16.gmra.mxu0 %v815
        %v904 = vpop.f32.mrf.mxu0
        %v905 = vadd.f32 %v594, %v904
        %v906 = vpop.f32.mrf.mxu0
        %v907 = vadd.f32 %v599, %v906
        %908 = vmatmul.bf16.gmra.mxu0 %v816
        %v909 = vpop.f32.mrf.mxu0
        %v910 = vadd.f32 %v604, %v909
        %v911 = vpop.f32.mrf.mxu0
        %v912 = vadd.f32 %v609, %v911
        %913 = vmatmul.bf16.gmra.mxu0 %v817
        %v914 = vpop.f32.mrf.mxu0
        %v915 = vadd.f32 %v614, %v914
        %v916 = vpop.f32.mrf.mxu0
        %v917 = vadd.f32 %v619, %v916
        %918 = vmatmul.bf16.gmra.mxu0 %v818
        %v919 = vpop.f32.mrf.mxu0
        %v920 = vadd.f32 %v624, %v919
        %v921 = vpop.f32.mrf.mxu0
        %v922 = vadd.f32 %v629, %v921
        %923 = vmatmul.bf16.gmra.mxu0 %v819
        %v924 = vpop.f32.mrf.mxu0
        %v925 = vadd.f32 %v634, %v924
        %v926 = vpop.f32.mrf.mxu0
        %v927 = vadd.f32 %v639, %v926
        %928 = vmatmul.bf16.gmra.mxu0 %v820
        %v929 = vpop.f32.mrf.mxu0
        %v930 = vadd.f32 %v644, %v929
        %v931 = vpop.f32.mrf.mxu0
        %v932 = vadd.f32 %v649, %v931
        %933 = vmatmul.bf16.gmra.mxu0 %v821
        %v934 = vpop.f32.mrf.mxu0
        %v935 = vadd.f32 %v654, %v934
        %v936 = vpop.f32.mrf.mxu0
        %v937 = vadd.f32 %v659, %v936
        %938 = vmatmul.bf16.gmra.mxu0 %v822
        %v939 = vpop.f32.mrf.mxu0
        %v940 = vadd.f32 %v664, %v939
        %v941 = vpop.f32.mrf.mxu0
        %v942 = vadd.f32 %v669, %v941
        %943 = vmatmul.bf16.gmra.mxu0 %v823
        %v944 = vpop.f32.mrf.mxu0
        %v945 = vadd.f32 %v674, %v944
        %v946 = vpop.f32.mrf.mxu0
        %v947 = vadd.f32 %v679, %v946
        %948 = vmatmul.bf16.gmra.mxu0 %v824
        %v949 = vpop.f32.mrf.mxu0
        %v950 = vadd.f32 %v684, %v949
        %v951 = vpop.f32.mrf.mxu0
        %v952 = vadd.f32 %v689, %v951
        %953 = vmatmul.bf16.gmra.mxu0 %v825
        %v954 = vpop.f32.mrf.mxu0
        %v955 = vadd.f32 %v694, %v954
        %v956 = vpop.f32.mrf.mxu0
        %v957 = vadd.f32 %v699, %v956
        %958 = vmatmul.bf16.gmra.mxu0 %v826
        %v959 = vpop.f32.mrf.mxu0
        %v960 = vadd.f32 %v704, %v959
        %v961 = vpop.f32.mrf.mxu0
        %v962 = vadd.f32 %v709, %v961
        %963 = vmatmul.bf16.gmra.mxu0 %v827
        %v964 = vpop.f32.mrf.mxu0
        %v965 = vadd.f32 %v714, %v964
        %v966 = vpop.f32.mrf.mxu0
        %v967 = vadd.f32 %v719, %v966
        %968 = vmatmul.bf16.gmra.mxu0 %v828
        %v969 = vpop.f32.mrf.mxu0
        %v970 = vadd.f32 %v724, %v969
        %v971 = vpop.f32.mrf.mxu0
        %v972 = vadd.f32 %v729, %v971
        %973 = vmatmul.bf16.gmra.mxu0 %v829
        %v974 = vpop.f32.mrf.mxu0
        %v975 = vadd.f32 %v734, %v974
        %v976 = vpop.f32.mrf.mxu0
        %v977 = vadd.f32 %v739, %v976
        %978 = vmatmul.bf16.gmra.mxu0 %v830
        %v979 = vpop.f32.mrf.mxu0
        %v980 = vadd.f32 %v744, %v979
        %v981 = vpop.f32.mrf.mxu0
        %v982 = vadd.f32 %v749, %v981
        %983 = vdwg.mxu0
        %v984 = vmax.f32 %v905, 0.0
        %v985 = vmax.f32 %v907, 0.0
        %v986 = vmax.f32 %v910, 0.0
        %v987 = vmax.f32 %v912, 0.0
        %v988 = vmax.f32 %v915, 0.0
        %v989 = vmax.f32 %v917, 0.0
        %v990 = vmax.f32 %v920, 0.0
        %v991 = vmax.f32 %v922, 0.0
        %v992 = vmax.f32 %v925, 0.0
        %v993 = vmax.f32 %v927, 0.0
        %v994 = vmax.f32 %v930, 0.0
        %v995 = vmax.f32 %v932, 0.0
        %v996 = vmax.f32 %v935, 0.0
        %v997 = vmax.f32 %v937, 0.0
        %v998 = vmax.f32 %v940, 0.0
        %v999 = vmax.f32 %v942, 0.0
        %v1000 = vmax.f32 %v945, 0.0
        %v1001 = vmax.f32 %v947, 0.0
        %v1002 = vmax.f32 %v950, 0.0
        %v1003 = vmax.f32 %v952, 0.0
        %v1004 = vmax.f32 %v955, 0.0
        %v1005 = vmax.f32 %v957, 0.0
        %v1006 = vmax.f32 %v960, 0.0
        %v1007 = vmax.f32 %v962, 0.0
        %v1008 = vmax.f32 %v965, 0.0
        %v1009 = vmax.f32 %v967, 0.0
        %v1010 = vmax.f32 %v970, 0.0
        %v1011 = vmax.f32 %v972, 0.0
        %v1012 = vmax.f32 %v975, 0.0
        %v1013 = vmax.f32 %v977, 0.0
        %v1014 = vmax.f32 %v980, 0.0
        %v1015 = vmax.f32 %v982, 0.0
        %v1016 = vld [vmem:[%s3] sm:$0xf]
        %v1017 = vld [vmem:[%s3 + $0x4] sm:$0xf]
        %v1018 = vld [vmem:[%s3 + $0x8] sm:$0xf]
        %v1019 = vld [vmem:[%s3 + $0xc] sm:$0xf]
        %v1020 = vld [vmem:[%s3 + $0x10] sm:$0xf]
        %v1021 = vld [vmem:[%s3 + $0x14] sm:$0xf]
        %v1022 = vld [vmem:[%s3 + $0x18] sm:$0xf]
        %v1023 = vld [vmem:[%s3 + $0x1c] sm:$0xf]
        %v1024 = vpack.c.bf16 %v985, %v984
        %v1025 = vpack.c.bf16 %v987, %v986
        %v1026 = vpack.c.bf16 %v989, %v988
        %v1027 = vpack.c.bf16 %v991, %v990
        %v1028 = vpack.c.bf16 %v993, %v992
        %v1029 = vpack.c.bf16 %v995, %v994
        %v1030 = vpack.c.bf16 %v997, %v996
        %v1031 = vpack.c.bf16 %v999, %v998
        %v1032 = vld [vmem:[%s4] sm:$0xff]
        %v1033 = vld [vmem:[%s4 + $0x8] sm:$0xff]
        %v1034 = vld [vmem:[%s4 + $0x10] sm:$0xff]
        %v1035 = vld [vmem:[%s4 + $0x18] sm:$0xff]
        %v1036 = vld [vmem:[%s4 + $0x20] sm:$0xff]
        %v1037 = vld [vmem:[%s4 + $0x28] sm:$0xff]
        %v1038 = vld [vmem:[%s4 + $0x30] sm:$0xff]
        %v1039 = vld [vmem:[%s4 + $0x38] sm:$0xff]
        %1041 = vset.pattern.permute.xlu0 0
        %1042 = vperm.xlu0 %1041, %v1032
        %v1043 = vpop.permute.xlu0 %1042
        %1046 = vset.pattern.permute.xlu0 0
        %1047 = vperm.xlu0 %1046, %v1033
        %v1048 = vpop.permute.xlu0 %1047
        %1051 = vset.pattern.permute.xlu0 0
        %1052 = vperm.xlu0 %1051, %v1034
        %v1053 = vpop.permute.xlu0 %1052
        %1056 = vset.pattern.permute.xlu0 0
        %1057 = vperm.xlu0 %1056, %v1035
        %v1058 = vpop.permute.xlu0 %1057
        %1061 = vset.pattern.permute.xlu0 0
        %1062 = vperm.xlu0 %1061, %v1036
        %v1063 = vpop.permute.xlu0 %1062
        %1066 = vset.pattern.permute.xlu0 0
        %1067 = vperm.xlu0 %1066, %v1037
        %v1068 = vpop.permute.xlu0 %1067
        %1071 = vset.pattern.permute.xlu0 0
        %1072 = vperm.xlu0 %1071, %v1038
        %v1073 = vpop.permute.xlu0 %1072
        %1076 = vset.pattern.permute.xlu0 0
        %1077 = vperm.xlu0 %1076, %v1039
        %v1078 = vpop.permute.xlu0 %1077
        %v1088 = vunpack.c.l.b16 %v1016
        %v1089 = vunpack.c.l.b16 %v1017
        %v1090 = vunpack.c.l.b16 %v1018
        %v1091 = vunpack.c.l.b16 %v1019
        %v1092 = vunpack.c.l.b16 %v1020
        %v1093 = vunpack.c.l.b16 %v1021
        %v1094 = vunpack.c.l.b16 %v1022
        %v1095 = vunpack.c.l.b16 %v1023
        %v1096 = vpack.c.b16 %v1089, %v1088
        %v1097 = vpack.c.b16 %v1091, %v1090
        %v1098 = vpack.c.b16 %v1093, %v1092
        %v1099 = vpack.c.b16 %v1095, %v1094
        %1104 = vmatpush.bf16.msra.mxu0 %v1031
        %1105 = vmatpush.bf16.msra.mxu0 %v1030
        %1106 = vmatpush.bf16.msra.mxu0 %v1029
        %1107 = vmatpush.bf16.msra.mxu0 %v1028
        %1108 = vmatpush.bf16.msra.mxu0 %v1027
        %1109 = vmatpush.bf16.msra.mxu0 %v1026
        %1110 = vmatpush.bf16.msra.mxu0 %v1025
        %1111 = vmatpush.bf16.msra.mxu0 %v1024
        %1112 = vmatmul.bf16.gmra.mxu0 %v1096
        %v1113 = vpop.f32.mrf.mxu0
        %v1114 = vadd.f32 %v1043, %v1113
        %v1115 = vpop.f32.mrf.mxu0
        %v1116 = vadd.f32 %v1048, %v1115
        %1117 = vmatmul.bf16.gmra.mxu0 %v1097
        %v1118 = vpop.f32.mrf.mxu0
        %v1119 = vadd.f32 %v1053, %v1118
        %v1120 = vpop.f32.mrf.mxu0
        %v1121 = vadd.f32 %v1058, %v1120
        %1122 = vmatmul.bf16.gmra.mxu0 %v1098
        %v1123 = vpop.f32.mrf.mxu0
        %v1124 = vadd.f32 %v1063, %v1123
        %v1125 = vpop.f32.mrf.mxu0
        %v1126 = vadd.f32 %v1068, %v1125
        %1127 = vmatmul.bf16.gmra.mxu0 %v1099
        %v1128 = vpop.f32.mrf.mxu0
        %v1129 = vadd.f32 %v1073, %v1128
        %v1130 = vpop.f32.mrf.mxu0
        %v1131 = vadd.f32 %v1078, %v1130
        %1132 = vdwg.mxu0
        %v1133 = vmax.f32 %v1114, 0.0
        %v1134 = vmax.f32 %v1116, 0.0
        %v1135 = vmax.f32 %v1119, 0.0
        %v1136 = vmax.f32 %v1121, 0.0
        %v1137 = vmax.f32 %v1124, 0.0
        %v1138 = vmax.f32 %v1126, 0.0
        %v1139 = vmax.f32 %v1129, 0.0
        %v1140 = vmax.f32 %v1131, 0.0
        %v1141 = vld [vmem:[%s5] sm:$0xff]
        %v1142 = vld [vmem:[%s5 + $0x8] sm:$0xff]
        %v1143 = vld [vmem:[%s5 + $0x10] sm:$0xff]
        %v1144 = vld [vmem:[%s5 + $0x18] sm:$0xff]
        %v1145 = vld [vmem:[%s5 + $0x20] sm:$0xff]
        %v1146 = vld [vmem:[%s5 + $0x28] sm:$0xff]
        %v1147 = vld [vmem:[%s5 + $0x30] sm:$0xff]
        %v1148 = vld [vmem:[%s5 + $0x38] sm:$0xff]
        %1150 = vset.pattern.permute.xlu0 0
        %1151 = vperm.xlu0 %1150, %v1141
        %v1152 = vpop.permute.xlu0 %1151
        %1155 = vset.pattern.permute.xlu0 0
        %1156 = vperm.xlu0 %1155, %v1142
        %v1157 = vpop.permute.xlu0 %1156
        %1160 = vset.pattern.permute.xlu0 0
        %1161 = vperm.xlu0 %1160, %v1143
        %v1162 = vpop.permute.xlu0 %1161
        %1165 = vset.pattern.permute.xlu0 0
        %1166 = vperm.xlu0 %1165, %v1144
        %v1167 = vpop.permute.xlu0 %1166
        %1170 = vset.pattern.permute.xlu0 0
        %1171 = vperm.xlu0 %1170, %v1145
        %v1172 = vpop.permute.xlu0 %1171
        %1175 = vset.pattern.permute.xlu0 0
        %1176 = vperm.xlu0 %1175, %v1146
        %v1177 = vpop.permute.xlu0 %1176
        %1180 = vset.pattern.permute.xlu0 0
        %1181 = vperm.xlu0 %1180, %v1147
        %v1182 = vpop.permute.xlu0 %1181
        %1185 = vset.pattern.permute.xlu0 0
        %1186 = vperm.xlu0 %1185, %v1148
        %v1187 = vpop.permute.xlu0 %1186
        %v1189 = vmul.f32 %v1133, %v1152
        %v1190 = vmul.f32 %v1134, %v1157
        %v1191 = vmul.f32 %v1135, %v1162
        %v1192 = vmul.f32 %v1136, %v1167
        %v1193 = vmul.f32 %v1137, %v1172
        %v1194 = vmul.f32 %v1138, %v1177
        %v1195 = vmul.f32 %v1139, %v1182
        %v1196 = vmul.f32 %v1140, %v1187
        %v1197 = vadd.f32 %v1189, %v1190
        %v1198 = vadd.f32 %v1197, %v1191
        %v1199 = vadd.f32 %v1198, %v1192
        %v1200 = vadd.f32 %v1199, %v1193
        %v1201 = vadd.f32 %v1200, %v1194
        %v1202 = vadd.f32 %v1201, %v1195
        %v1203 = vadd.f32 %v1202, %v1196
        %v1204 = vrot.slane %v1203, 4
        %v1205 = vadd.f32 %v1203, %v1204
        %v1206 = vrot.slane %v1205, 2
        %v1207 = vadd.f32 %v1205, %v1206
        %v1208 = vrot.slane %v1207, 1
        %v1209 = vadd.f32 %v1207, %v1208
        %v1210 = vxor.u32 %v1209, 2147483648
        %v1211 = vmul.f32 %v1210, 1.442695
        %v1212 = vpow.pop %v1211
        %v1213 = vadd.f32 %v1212, 1.0
        %v1214 = vrcp.pop %v1213
        %v1215 = vmul.f32 %v1213, %v1214
        %v1216 = vsub.f32 1.0, %v1215
        %v1217 = vmul.f32 %v1214, %v1216
        %v1218 = vadd.f32 %v1214, %v1217
        %vm1219 = vweird.f32 %v1213
        %vm1220 = vweird.f32 %v1214
        %vm1221 = vmor %vm1219, %vm1220
        %v1222 = vsel %vm1221, %v1214, %v1218
        %v1223 = vand.u32 2147483647, %v1213
        %vm1224 = vcmp.eq.f32.partialorder %v1223, 8.507059e+37
        %v1225 = vand.u32 %v1213, 2147483648
        %v1226 = vor.u32 1.1754944e-38, %v1225
        %v1227 = vsel %vm1224, %v1226, %v1222
        %v1228 = vmul.f32 1.0, %v1227
        %1229 = vst [vmem:[%s505] sm:$0x1] %v1228
        %v1230 = vld [vmem:[%s6] sm:$0xf]
        %v1231 = vld [vmem:[%s6 + $0x4] sm:$0xf]
        %v1232 = vld [vmem:[%s6 + $0x8] sm:$0xf]
        %v1233 = vld [vmem:[%s6 + $0xc] sm:$0xf]
        %v1234 = vld [vmem:[%s6 + $0x10] sm:$0xf]
        %v1235 = vld [vmem:[%s6 + $0x14] sm:$0xf]
        %v1236 = vld [vmem:[%s6 + $0x18] sm:$0xf]
        %v1237 = vld [vmem:[%s6 + $0x1c] sm:$0xf]
        %v1238 = vld [vmem:[%s6 + $0x20] sm:$0xf]
        %v1239 = vld [vmem:[%s6 + $0x24] sm:$0xf]
        %v1240 = vld [vmem:[%s6 + $0x28] sm:$0xf]
        %v1241 = vld [vmem:[%s6 + $0x2c] sm:$0xf]
        %v1242 = vld [vmem:[%s6 + $0x30] sm:$0xf]
        %v1243 = vld [vmem:[%s6 + $0x34] sm:$0xf]
        %v1244 = vld [vmem:[%s6 + $0x38] sm:$0xf]
        %v1245 = vld [vmem:[%s6 + $0x3c] sm:$0xf]
        %v1246 = vpack.c.bf16 %v1001, %v1000
        %v1247 = vpack.c.bf16 %v1003, %v1002
        %v1248 = vpack.c.bf16 %v1005, %v1004
        %v1249 = vpack.c.bf16 %v1007, %v1006
        %v1250 = vpack.c.bf16 %v1009, %v1008
        %v1251 = vpack.c.bf16 %v1011, %v1010
        %v1252 = vpack.c.bf16 %v1013, %v1012
        %v1253 = vpack.c.bf16 %v1015, %v1014
        %v1254 = vld [vmem:[%s7] sm:$0xff]
        %v1255 = vld [vmem:[%s7 + $0x8] sm:$0xff]
        %v1256 = vld [vmem:[%s7 + $0x10] sm:$0xff]
        %v1257 = vld [vmem:[%s7 + $0x18] sm:$0xff]
        %v1258 = vld [vmem:[%s7 + $0x20] sm:$0xff]
        %v1259 = vld [vmem:[%s7 + $0x28] sm:$0xff]
        %v1260 = vld [vmem:[%s7 + $0x30] sm:$0xff]
        %v1261 = vld [vmem:[%s7 + $0x38] sm:$0xff]
        %v1262 = vld [vmem:[%s7 + $0x40] sm:$0xff]
        %v1263 = vld [vmem:[%s7 + $0x48] sm:$0xff]
        %v1264 = vld [vmem:[%s7 + $0x50] sm:$0xff]
        %v1265 = vld [vmem:[%s7 + $0x58] sm:$0xff]
        %v1266 = vld [vmem:[%s7 + $0x60] sm:$0xff]
        %v1267 = vld [vmem:[%s7 + $0x68] sm:$0xff]
        %v1268 = vld [vmem:[%s7 + $0x70] sm:$0xff]
        %v1269 = vld [vmem:[%s7 + $0x78] sm:$0xff]
        %1271 = vset.pattern.permute.xlu0 0
        %1272 = vperm.xlu0 %1271, %v1254
        %v1273 = vpop.permute.xlu0 %1272
        %1276 = vset.pattern.permute.xlu0 0
        %1277 = vperm.xlu0 %1276, %v1255
        %v1278 = vpop.permute.xlu0 %1277
        %1281 = vset.pattern.permute.xlu0 0
        %1282 = vperm.xlu0 %1281, %v1256
        %v1283 = vpop.permute.xlu0 %1282
        %1286 = vset.pattern.permute.xlu0 0
        %1287 = vperm.xlu0 %1286, %v1257
        %v1288 = vpop.permute.xlu0 %1287
        %1291 = vset.pattern.permute.xlu0 0
        %1292 = vperm.xlu0 %1291, %v1258
        %v1293 = vpop.permute.xlu0 %1292
        %1296 = vset.pattern.permute.xlu0 0
        %1297 = vperm.xlu0 %1296, %v1259
        %v1298 = vpop.permute.xlu0 %1297
        %1301 = vset.pattern.permute.xlu0 0
        %1302 = vperm.xlu0 %1301, %v1260
        %v1303 = vpop.permute.xlu0 %1302
        %1306 = vset.pattern.permute.xlu0 0
        %1307 = vperm.xlu0 %1306, %v1261
        %v1308 = vpop.permute.xlu0 %1307
        %1311 = vset.pattern.permute.xlu0 0
        %1312 = vperm.xlu0 %1311, %v1262
        %v1313 = vpop.permute.xlu0 %1312
        %1316 = vset.pattern.permute.xlu0 0
        %1317 = vperm.xlu0 %1316, %v1263
        %v1318 = vpop.permute.xlu0 %1317
        %1321 = vset.pattern.permute.xlu0 0
        %1322 = vperm.xlu0 %1321, %v1264
        %v1323 = vpop.permute.xlu0 %1322
        %1326 = vset.pattern.permute.xlu0 0
        %1327 = vperm.xlu0 %1326, %v1265
        %v1328 = vpop.permute.xlu0 %1327
        %1331 = vset.pattern.permute.xlu0 0
        %1332 = vperm.xlu0 %1331, %v1266
        %v1333 = vpop.permute.xlu0 %1332
        %1336 = vset.pattern.permute.xlu0 0
        %1337 = vperm.xlu0 %1336, %v1267
        %v1338 = vpop.permute.xlu0 %1337
        %1341 = vset.pattern.permute.xlu0 0
        %1342 = vperm.xlu0 %1341, %v1268
        %v1343 = vpop.permute.xlu0 %1342
        %1346 = vset.pattern.permute.xlu0 0
        %1347 = vperm.xlu0 %1346, %v1269
        %v1348 = vpop.permute.xlu0 %1347
        %v1366 = vunpack.c.l.b16 %v1230
        %v1367 = vunpack.c.l.b16 %v1231
        %v1368 = vunpack.c.l.b16 %v1232
        %v1369 = vunpack.c.l.b16 %v1233
        %v1370 = vunpack.c.l.b16 %v1234
        %v1371 = vunpack.c.l.b16 %v1235
        %v1372 = vunpack.c.l.b16 %v1236
        %v1373 = vunpack.c.l.b16 %v1237
        %v1374 = vunpack.c.l.b16 %v1238
        %v1375 = vunpack.c.l.b16 %v1239
        %v1376 = vunpack.c.l.b16 %v1240
        %v1377 = vunpack.c.l.b16 %v1241
        %v1378 = vunpack.c.l.b16 %v1242
        %v1379 = vunpack.c.l.b16 %v1243
        %v1380 = vunpack.c.l.b16 %v1244
        %v1381 = vunpack.c.l.b16 %v1245
        %v1382 = vpack.c.b16 %v1367, %v1366
        %v1383 = vpack.c.b16 %v1369, %v1368
        %v1384 = vpack.c.b16 %v1371, %v1370
        %v1385 = vpack.c.b16 %v1373, %v1372
        %v1386 = vpack.c.b16 %v1375, %v1374
        %v1387 = vpack.c.b16 %v1377, %v1376
        %v1388 = vpack.c.b16 %v1379, %v1378
        %v1389 = vpack.c.b16 %v1381, %v1380
        %1398 = vmatpush.bf16.msra.mxu0 %v1253
        %1399 = vmatpush.bf16.msra.mxu0 %v1252
        %1400 = vmatpush.bf16.msra.mxu0 %v1251
        %1401 = vmatpush.bf16.msra.mxu0 %v1250
        %1402 = vmatpush.bf16.msra.mxu0 %v1249
        %1403 = vmatpush.bf16.msra.mxu0 %v1248
        %1404 = vmatpush.bf16.msra.mxu0 %v1247
        %1405 = vmatpush.bf16.msra.mxu0 %v1246
        %1406 = vmatmul.bf16.gmra.mxu0 %v1382
        %v1407 = vpop.f32.mrf.mxu0
        %v1408 = vadd.f32 %v1273, %v1407
        %v1409 = vpop.f32.mrf.mxu0
        %v1410 = vadd.f32 %v1278, %v1409
        %1411 = vmatmul.bf16.gmra.mxu0 %v1383
        %v1412 = vpop.f32.mrf.mxu0
        %v1413 = vadd.f32 %v1283, %v1412
        %v1414 = vpop.f32.mrf.mxu0
        %v1415 = vadd.f32 %v1288, %v1414
        %1416 = vmatmul.bf16.gmra.mxu0 %v1384
        %v1417 = vpop.f32.mrf.mxu0
        %v1418 = vadd.f32 %v1293, %v1417
        %v1419 = vpop.f32.mrf.mxu0
        %v1420 = vadd.f32 %v1298, %v1419
        %1421 = vmatmul.bf16.gmra.mxu0 %v1385
        %v1422 = vpop.f32.mrf.mxu0
        %v1423 = vadd.f32 %v1303, %v1422
        %v1424 = vpop.f32.mrf.mxu0
        %v1425 = vadd.f32 %v1308, %v1424
        %1426 = vmatmul.bf16.gmra.mxu0 %v1386
        %v1427 = vpop.f32.mrf.mxu0
        %v1428 = vadd.f32 %v1313, %v1427
        %v1429 = vpop.f32.mrf.mxu0
        %v1430 = vadd.f32 %v1318, %v1429
        %1431 = vmatmul.bf16.gmra.mxu0 %v1387
        %v1432 = vpop.f32.mrf.mxu0
        %v1433 = vadd.f32 %v1323, %v1432
        %v1434 = vpop.f32.mrf.mxu0
        %v1435 = vadd.f32 %v1328, %v1434
        %1436 = vmatmul.bf16.gmra.mxu0 %v1388
        %v1437 = vpop.f32.mrf.mxu0
        %v1438 = vadd.f32 %v1333, %v1437
        %v1439 = vpop.f32.mrf.mxu0
        %v1440 = vadd.f32 %v1338, %v1439
        %1441 = vmatmul.bf16.gmra.mxu0 %v1389
        %v1442 = vpop.f32.mrf.mxu0
        %v1443 = vadd.f32 %v1343, %v1442
        %v1444 = vpop.f32.mrf.mxu0
        %v1445 = vadd.f32 %v1348, %v1444
        %1446 = vdwg.mxu0
        %v1447 = vmax.f32 %v1408, 0.0
        %v1448 = vmax.f32 %v1410, 0.0
        %v1449 = vmax.f32 %v1413, 0.0
        %v1450 = vmax.f32 %v1415, 0.0
        %v1451 = vmax.f32 %v1418, 0.0
        %v1452 = vmax.f32 %v1420, 0.0
        %v1453 = vmax.f32 %v1423, 0.0
        %v1454 = vmax.f32 %v1425, 0.0
        %v1455 = vmax.f32 %v1428, 0.0
        %v1456 = vmax.f32 %v1430, 0.0
        %v1457 = vmax.f32 %v1433, 0.0
        %v1458 = vmax.f32 %v1435, 0.0
        %v1459 = vmax.f32 %v1438, 0.0
        %v1460 = vmax.f32 %v1440, 0.0
        %v1461 = vmax.f32 %v1443, 0.0
        %v1462 = vmax.f32 %v1445, 0.0
        %v1463 = vld [vmem:[%s8] sm:$0xf]
        %v1464 = vld [vmem:[%s8 + $0x4] sm:$0xf]
        %v1465 = vld [vmem:[%s8 + $0x8] sm:$0xf]
        %v1466 = vld [vmem:[%s8 + $0xc] sm:$0xf]
        %v1467 = vld [vmem:[%s8 + $0x10] sm:$0xf]
        %v1468 = vld [vmem:[%s8 + $0x14] sm:$0xf]
        %v1469 = vld [vmem:[%s8 + $0x18] sm:$0xf]
        %v1470 = vld [vmem:[%s8 + $0x1c] sm:$0xf]
        %v1471 = vpack.c.bf16 %v1448, %v1447
        %v1472 = vpack.c.bf16 %v1450, %v1449
        %v1473 = vpack.c.bf16 %v1452, %v1451
        %v1474 = vpack.c.bf16 %v1454, %v1453
        %v1475 = vpack.c.bf16 %v1456, %v1455
        %v1476 = vpack.c.bf16 %v1458, %v1457
        %v1477 = vpack.c.bf16 %v1460, %v1459
        %v1478 = vpack.c.bf16 %v1462, %v1461
        %v1487 = vunpack.c.l.b16 %v1463
        %v1488 = vunpack.c.l.b16 %v1464
        %v1489 = vunpack.c.l.b16 %v1465
        %v1490 = vunpack.c.l.b16 %v1466
        %v1491 = vunpack.c.l.b16 %v1467
        %v1492 = vunpack.c.l.b16 %v1468
        %v1493 = vunpack.c.l.b16 %v1469
        %v1494 = vunpack.c.l.b16 %v1470
        %v1495 = vpack.c.b16 %v1488, %v1487
        %v1496 = vpack.c.b16 %v1490, %v1489
        %v1497 = vpack.c.b16 %v1492, %v1491
        %v1498 = vpack.c.b16 %v1494, %v1493
        %1503 = vmatpush.bf16.msra.mxu0 %v1478
        %1504 = vmatpush.bf16.msra.mxu0 %v1477
        %1505 = vmatpush.bf16.msra.mxu0 %v1476
        %1506 = vmatpush.bf16.msra.mxu0 %v1475
        %1507 = vmatpush.bf16.msra.mxu0 %v1474
        %1508 = vmatpush.bf16.msra.mxu0 %v1473
        %1509 = vmatpush.bf16.msra.mxu0 %v1472
        %1510 = vmatpush.bf16.msra.mxu0 %v1471
        %1511 = vmatmul.bf16.gmra.mxu0 %v1495
        %v1512 = vpop.f32.mrf.mxu0
        %v1513 = vadd.f32 0.0, %v1512
        %v1514 = vpop.f32.mrf.mxu0
        %v1515 = vadd.f32 0.0, %v1514
        %1516 = vmatmul.bf16.gmra.mxu0 %v1496
        %v1517 = vpop.f32.mrf.mxu0
        %v1518 = vadd.f32 0.0, %v1517
        %v1519 = vpop.f32.mrf.mxu0
        %v1520 = vadd.f32 0.0, %v1519
        %1521 = vmatmul.bf16.gmra.mxu0 %v1497
        %v1522 = vpop.f32.mrf.mxu0
        %v1523 = vadd.f32 0.0, %v1522
        %v1524 = vpop.f32.mrf.mxu0
        %v1525 = vadd.f32 0.0, %v1524
        %1526 = vmatmul.bf16.gmra.mxu0 %v1498
        %v1527 = vpop.f32.mrf.mxu0
        %v1528 = vadd.f32 0.0, %v1527
        %v1529 = vpop.f32.mrf.mxu0
        %v1530 = vadd.f32 0.0, %v1529
        %1531 = vdwg.mxu0
        %v1532 = vmul.f32 %v1513, %v1513
        %v1533 = vmul.f32 %v1515, %v1515
        %v1534 = vmul.f32 %v1518, %v1518
        %v1535 = vmul.f32 %v1520, %v1520
        %v1536 = vmul.f32 %v1523, %v1523
        %v1537 = vmul.f32 %v1525, %v1525
        %v1538 = vmul.f32 %v1528, %v1528
        %v1539 = vmul.f32 %v1530, %v1530
        %v1540 = vadd.f32 %v1532, %v1533
        %v1541 = vadd.f32 %v1540, %v1534
        %v1542 = vadd.f32 %v1541, %v1535
        %v1543 = vadd.f32 %v1542, %v1536
        %v1544 = vadd.f32 %v1543, %v1537
        %v1545 = vadd.f32 %v1544, %v1538
        %v1546 = vadd.f32 %v1545, %v1539
        %v1547 = vrot.slane %v1546, 4
        %v1548 = vadd.f32 %v1546, %v1547
        %v1549 = vrot.slane %v1548, 2
        %v1550 = vadd.f32 %v1548, %v1549
        %v1551 = vrot.slane %v1550, 1
        %v1552 = vadd.f32 %v1550, %v1551
        %v1553 = vmax.f32 %v1552, 1e-24
        %v1554 = vrsqrt.pop %v1553
        %v1555 = vmul.f32 %v1554, %v1553
        %v1556 = vmul.f32 %v1555, %v1554
        %v1557 = vmul.f32 0.5, %v1556
        %v1558 = vsub.f32 1.5, %v1557
        %v1559 = vmul.f32 %v1554, %v1558
        %vm1560 = vweird.f32 %v1553
        %vm1561 = vweird.f32 %v1554
        %vm1562 = vmor %vm1560, %vm1561
        %v1563 = vsel %vm1562, %v1554, %v1559
        %v1564 = vmul.f32 %v1513, %v1563
        %v1565 = vmul.f32 %v1515, %v1563
        %v1566 = vmul.f32 %v1518, %v1563
        %v1567 = vmul.f32 %v1520, %v1563
        %v1568 = vmul.f32 %v1523, %v1563
        %v1569 = vmul.f32 %v1525, %v1563
        %v1570 = vmul.f32 %v1528, %v1563
        %v1571 = vmul.f32 %v1530, %v1563
        %v1572 = vpack.c.bf16 %v1564, %v1564
        %v1573 = vpack.c.bf16 %v1565, %v1565
        %v1574 = vpack.c.bf16 %v1566, %v1566
        %v1575 = vpack.c.bf16 %v1567, %v1567
        %v1576 = vpack.c.bf16 %v1568, %v1568
        %v1577 = vpack.c.bf16 %v1569, %v1569
        %v1578 = vpack.c.bf16 %v1570, %v1570
        %v1579 = vpack.c.bf16 %v1571, %v1571
        %1580 = vst [vmem:[%s499] sm:$0xf] %v1572
        %1581 = vst [vmem:[%s499 + $0x4] sm:$0xf] %v1573
        %1582 = vst [vmem:[%s499 + $0x8] sm:$0xf] %v1574
        %1583 = vst [vmem:[%s499 + $0xc] sm:$0xf] %v1575
        %1584 = vst [vmem:[%s499 + $0x10] sm:$0xf] %v1576
        %1585 = vst [vmem:[%s499 + $0x14] sm:$0xf] %v1577
        %1586 = vst [vmem:[%s499 + $0x18] sm:$0xf] %v1578
        %1587 = vst [vmem:[%s499 + $0x1c] sm:$0xf] %v1579
        %s1588 = sand.u32 %s251, 1
        %s1589 = scalar_lea.sflag [#allocation4], %s1588
        %s1590 = sand.u32 %s251, 1
        %s1591 = smul.addr %s1590, 32
        %s1592 = scalar_lea.vmem [#allocation3], %s1591
        %s1593 = sand.u32 %s279, 1
        %s1594 = scalar_lea.sflag [#allocation6], %s1593
        %s1595 = sand.u32 %s279, 1
        %s1596 = scalar_lea.vmem [#allocation5], %s1595
        // Predicated region
        $region98: #{mamba_i2p_forward.3} parent=92 // pred_check
          %p1597 = pneg %p261
        $region99: #{mamba_i2p_forward.3} parent=92 // pred_check_branch
          %1599 = sbr.rel (%p1597) target = $region101
        $region100: #{mamba_i2p_forward.3} parent=92 // pred_region
          %1601 = vsyncadd %s1589, 0
          %s1602 = smul.addr %s32, 16
          %s1603 = sadd.s32 %s33, %s1602
          %s1604 = smul.addr %s1603, 4
          %s1605 = scalar_lea.hbm %s9, %s1604
          %s1606 = sshll.u32 %s1592, 4
          %s1607 = int_to_ptr.vmem [resolvable:$true] %s1606
          %s1608 = sshll.u32 %s1605, 4
          %s1609 = int_to_ptr.hbm [resolvable:$true] %s1608
          %1614 = dma.vmem_to_hbm [thread:$0]  %s1607, 512, %s1609, %s1589, 64, 128, 4
        $region101: #{mamba_i2p_forward.3} parent=92 // pred_fallthru
          _
        // Predicated region
        $region102: #{mamba_i2p_forward.3} parent=92 // pred_check
          %p1615 = pneg %p289
        $region103: #{mamba_i2p_forward.3} parent=92 // pred_check_branch
          %1617 = sbr.rel (%p1615) target = $region105
        $region104: #{mamba_i2p_forward.3} parent=92 // pred_region
          %1619 = vsyncadd %s1594, 0
          %s1620 = smul.addr %s32, 2
          %s1621 = sadd.s32 %s33, %s1620
          %s1622 = scalar_lea.hbm %s10, %s1621
          %s1624 = sshll.u32 %s1596, 4
          %s1625 = int_to_ptr.vmem [resolvable:$true] %s1624
          %s1626 = sshll.u32 %s1622, 4
          %s1627 = int_to_ptr.hbm [resolvable:$true] %s1626
          %1629 = dma.vmem_to_hbm [thread:$0]  %s1625, 16, %s1627, %s1594
        $region105: #{mamba_i2p_forward.3} parent=92 // pred_fallthru
          _
      $region93: #{mamba_i2p_forward.3} parent=5 // pred_fallthru
        _
      %p1630 = scmp.le.s32.totalorder 2, %s23
      // Predicated region
      $region106: #{mamba_i2p_forward.3} parent=5 // pred_check
        %p1631 = pneg %p1630
      $region107: #{mamba_i2p_forward.3} parent=5 // pred_check_branch
        %1633 = sbr.rel (%p1631) target = $region109
      $region108: #{mamba_i2p_forward.3} parent=5 // pred_region
        %s1634 = ssub.s32 %s23, 2
        // Predicated region
        $region110: #{mamba_i2p_forward.3} parent=108 // pred_check
          %p1635 = pneg %p267
        $region111: #{mamba_i2p_forward.3} parent=108 // pred_check_branch
          %1637 = sbr.rel (%p1635) target = $region113
        $region112: #{mamba_i2p_forward.3} parent=108 // pred_region
          %s1638 = sand.u32 %s252, 1
          %s1639 = scalar_lea.sflag [#allocation4], %s1638
          %s1640 = sand.u32 %s252, 1
          %s1641 = smul.addr %s1640, 32
          %s1642 = scalar_lea.vmem [#allocation3], %s1641
          %1644 = dma.done %s1639, 512
        $region113: #{mamba_i2p_forward.3} parent=108 // pred_fallthru
          _
        // Predicated region
        $region114: #{mamba_i2p_forward.3} parent=108 // pred_check
          %p1645 = pneg %p295
        $region115: #{mamba_i2p_forward.3} parent=108 // pred_check_branch
          %1647 = sbr.rel (%p1645) target = $region117
        $region116: #{mamba_i2p_forward.3} parent=108 // pred_region
          %s1648 = sand.u32 %s280, 1
          %s1649 = scalar_lea.sflag [#allocation6], %s1648
          %s1650 = sand.u32 %s280, 1
          %s1651 = scalar_lea.vmem [#allocation5], %s1650
          %1653 = dma.done %s1649, 16
        $region117: #{mamba_i2p_forward.3} parent=108 // pred_fallthru
          _
      $region109: #{mamba_i2p_forward.3} parent=5 // pred_fallthru
        _
    $region6: #{mamba_i2p_forward.3} parent=1 // loop_footer
      %s27 = sadd.s32 1, %s23
    $region7: #{mamba_i2p_forward.3} parent=1 // loop_footer_branch
      %22 = sbr.rel target = $region3
    $region8: #{mamba_i2p_forward.3} parent=1 // loop_exit
      _
    %1654 = vsyncpa [#allocation4], 1
    %s1655 = scalar_lea.sflag [#allocation4], 1
    %1656 = vsyncpa %s1655, 1
    %1657 = vsyncpa [#allocation6], 1
    %s1658 = scalar_lea.sflag [#allocation6], 1
    %1659 = vsyncpa %s1658, 1

// kernel: mamba_i2p_forward.2
$region0: #{mamba_i2p_forward.2}
  #allocation0 [shape = 'u32[]', space=smem, size = 0x4, offset = 0x4, fixed_abs, tag = 'smem constant byte address 0x4 - core index']
  #allocation1 [shape = 'u32[72,128]{1,0:T(1,128)}', space=vmem, size = 0x9000, scoped, tag = 'internal scratch']
  %s0 = inlined_call_operand.vmem [shape: bf16[2,64,256], index: 0, kind: input, shape index: {}]
  %s1 = inlined_call_operand.vmem [shape: f32[2,192,1], index: 1, kind: input, shape index: {}]
  %s2 = inlined_call_operand.vmem [shape: bf16[192,64], index: 2, kind: input, shape index: {}]
  %s3 = inlined_call_operand.vmem [shape: bf16[64,128], index: 3, kind: input, shape index: {}]
  %s4 = inlined_call_operand.vmem [shape: f32[64,1], index: 4, kind: input, shape index: {}]
  %s5 = inlined_call_operand.vmem [shape: f32[64,1], index: 5, kind: input, shape index: {}]
  %s6 = inlined_call_operand.vmem [shape: bf16[64,64], index: 6, kind: input, shape index: {}]
  %s7 = inlined_call_operand.vmem [shape: f32[64,1], index: 7, kind: input, shape index: {}]
  %s8 = inlined_call_operand.vmem [shape: bf16[64,64], index: 8, kind: input, shape index: {}]
  %s9 = inlined_call_operand.hbm [shape: bf16[2,64,256], index: 9, kind: output, shape index: {0}]
  %s10 = inlined_call_operand.hbm [shape: f32[2,1,256], index: 10, kind: output, shape index: {1}]
  %11 = xla_tuple %s9, %s10
  %s12 = sld [smem:[#allocation0]]
  $region118: #{mamba_i2p_forward.2} parent=0
    _
  %s14 = ssub.s32 1, %s12
  %s15 = scalar_select 0, %s14, %s12
  $region1: #{mamba_i2p_forward.2} parent=0
    #allocation2 [shape = 'u8[32768]{0}', space=vmem, size = 0x8000, scoped, tag = 'input window, operand 0']
    #allocation3 [shape = 'u8[32768]{0}', space=vmem, size = 0x8000, scoped, tag = 'output window, operand 0']
    #allocation4 [shape = 's32[2]{0}', space=sflag, size = 0x8, scoped, tag = 'scoped memory for mamba_i2p_forward.2']
    #allocation5 [shape = 'u8[1024]{0}', space=vmem, size = 0x400, scoped, tag = 'output window, operand 1']
    #allocation6 [shape = 's32[2]{0}', space=sflag, size = 0x8, scoped, tag = 'scoped memory for mamba_i2p_forward.2']
    %16 = vsyncpa [#allocation4], 0
    %s17 = scalar_lea.sflag [#allocation4], 1
    %18 = vsyncpa %s17, 0
    %19 = vsyncpa [#allocation6], 0
    %s20 = scalar_lea.sflag [#allocation6], 1
    %21 = vsyncpa %s20, 0
    loop: start=0, step=1, limit=6
    $region2: #{mamba_i2p_forward.2} parent=1 // loop_pre_header
      _
    $region3: #{mamba_i2p_forward.2} parent=1 // loop_header
      %s23 = sphi 0, %s27
      %p24 = scmp.ge.s32.totalorder %s23, 6
      %s30 = sphi 0, %s42
      %s31 = sphi 0, %s38
      %s32 = sphi 0, %s30
      %s33 = sphi 0, %s31
      %s34 = sphi 0, %s32
      %s35 = sphi 0, %s33
      %s47 = sphi 0, %s49
      %s50 = sphi 0, %s47
      %s51 = sphi 0, %s50
      %s67 = sphi 0, %s51
      %s73 = sphi 0, %s75
      %s76 = sphi 0, %s73
      %s77 = sphi 0, %s76
      %s93 = sphi 0, %s77
      %s97 = sphi 0, %s97
      %s99 = sphi 0, %s97
      %s100 = sphi 0, %s99
      %s114 = sphi 0, %s100
      %s118 = sphi 0, %s118
      %s120 = sphi 0, %s118
      %s121 = sphi 0, %s120
      %s135 = sphi 0, %s121
      %s139 = sphi 0, %s139
      %s141 = sphi 0, %s139
      %s142 = sphi 0, %s141
      %s156 = sphi 0, %s142
      %s160 = sphi 0, %s160
      %s162 = sphi 0, %s160
      %s163 = sphi 0, %s162
      %s177 = sphi 0, %s163
      %s181 = sphi 0, %s181
      %s183 = sphi 0, %s181
      %s184 = sphi 0, %s183
      %s198 = sphi 0, %s184
      %s202 = sphi 0, %s202
      %s204 = sphi 0, %s202
      %s205 = sphi 0, %s204
      %s219 = sphi 0, %s205
      %s223 = sphi 0, %s223
      %s225 = sphi 0, %s223
      %s226 = sphi 0, %s225
      %s240 = sphi 0, %s226
      %s248 = sphi 0, %s250
      %s251 = sphi 0, %s248
      %s252 = sphi 0, %s251
      %s268 = sphi 0, %s252
      %s276 = sphi 0, %s278
      %s279 = sphi 0, %s276
      %s280 = sphi 0, %s279
      %s296 = sphi 0, %s280
    $region4: #{mamba_i2p_forward.2} parent=1 // loop_header_branch
      %26 = sbr.rel (%p24) target = $region8
    $region5: #{mamba_i2p_forward.2} parent=1 // loop_body
      %s28 = ssub.s32 %s23, 1
      %s29 = ssub.s32 %s23, 2
      %s36 = sadd.s32 1, %s31
      %p37 = scmp.ge.s32.totalorder %s36, 2
      %s38 = scalar_select %p37, 0, %s36
      %s39 = sadd.s32 1, %s30
      %s40 = scalar_select %p37, %s39, %s30
      %p41 = scmp.ge.s32.totalorder %s40, 2
      %s42 = scalar_select %p41, 0, %s40
      %s43 = ssub.s32 %s30, %s42
      %s44 = ssub.s32 %s31, %s38
      %s45 = sor.u32 %s43, %s44
      %p46 = scmp.eq.s32.totalorder %s45, 0
      %s48 = sadd.s32 %s47, 1
      %s49 = scalar_select %p46, %s47, %s48
      %p52 = pneg %p46
      %p53 = scmp.eq.s32.totalorder %s23, 3
      %p54 = por %p52, %p53
      %p55 = scmp.ne.s32.totalorder %s47, %s50
      %p56 = scmp.eq.s32.totalorder %s23, 0
      %p57 = por %p55, %p56
      %p58 = scmp.ne.s32.totalorder %s47, %s50
      %p59 = scmp.eq.s32.totalorder %s28, 3
      %p60 = por %p58, %p59
      %p61 = scmp.ne.s32.totalorder %s50, %s51
      %p62 = scmp.eq.s32.totalorder %s28, 0
      %p63 = por %p61, %p62
      %p64 = scmp.ne.s32.totalorder %s50, %s51
      %p65 = scmp.eq.s32.totalorder %s29, 3
      %p66 = por %p64, %p65
      %p68 = scmp.ne.s32.totalorder %s51, %s67
      %p69 = scmp.eq.s32.totalorder %s29, 0
      %p70 = por %p68, %p69
      %s71 = ssub.s32 %s30, %s42
      %p72 = scmp.eq.s32.totalorder %s71, 0
      %s74 = sadd.s32 %s73, 1
      %s75 = scalar_select %p72, %s73, %s74
      %p78 = pneg %p72
      %p79 = scmp.eq.s32.totalorder %s23, 3
      %p80 = por %p78, %p79
      %p81 = scmp.ne.s32.totalorder %s73, %s76
      %p82 = scmp.eq.s32.totalorder %s23, 0
      %p83 = por %p81, %p82
      %p84 = scmp.ne.s32.totalorder %s73, %s76
      %p85 = scmp.eq.s32.totalorder %s28, 3
      %p86 = por %p84, %p85
      %p87 = scmp.ne.s32.totalorder %s76, %s77
      %p88 = scmp.eq.s32.totalorder %s28, 0
      %p89 = por %p87, %p88
      %p90 = scmp.ne.s32.totalorder %s76, %s77
      %p91 = scmp.eq.s32.totalorder %s29, 3
      %p92 = por %p90, %p91
      %p94 = scmp.ne.s32.totalorder %s77, %s93
      %p95 = scmp.eq.s32.totalorder %s29, 0
      %p96 = por %p94, %p95
      %s98 = sadd.s32 %s97, 1
      %p101 = scmp.eq.s32.totalorder %s23, 3
      %p102 = scmp.ne.s32.totalorder %s97, %s99
      %p103 = scmp.eq.s32.totalorder %s23, 0
      %p104 = por %p102, %p103
      %p105 = scmp.ne.s32.totalorder %s97, %s99
      %p106 = scmp.eq.s32.totalorder %s28, 3
      %p107 = por %p105, %p106
      %p108 = scmp.ne.s32.totalorder %s99, %s100
      %p109 = scmp.eq.s32.totalorder %s28, 0
      %p110 = por %p108, %p109
      %p111 = scmp.ne.s32.totalorder %s99, %s100
      %p112 = scmp.eq.s32.totalorder %s29, 3
      %p113 = por %p111, %p112
      %p115 = scmp.ne.s32.totalorder %s100, %s114
      %p116 = scmp.eq.s32.totalorder %s29, 0
      %p117 = por %p115, %p116
      %s119 = sadd.s32 %s118, 1
      %p122 = scmp.eq.s32.totalorder %s23, 3
      %p123 = scmp.ne.s32.totalorder %s118, %s120
      %p124 = scmp.eq.s32.totalorder %s23, 0
      %p125 = por %p123, %p124
      %p126 = scmp.ne.s32.totalorder %s118, %s120
      %p127 = scmp.eq.s32.totalorder %s28, 3
      %p128 = por %p126, %p127
      %p129 = scmp.ne.s32.totalorder %s120, %s121
      %p130 = scmp.eq.s32.totalorder %s28, 0
      %p131 = por %p129, %p130
      %p132 = scmp.ne.s32.totalorder %s120, %s121
      %p133 = scmp.eq.s32.totalorder %s29, 3
      %p134 = por %p132, %p133
      %p136 = scmp.ne.s32.totalorder %s121, %s135
      %p137 = scmp.eq.s32.totalorder %s29, 0
      %p138 = por %p136, %p137
      %s140 = sadd.s32 %s139, 1
      %p143 = scmp.eq.s32.totalorder %s23, 3
      %p144 = scmp.ne.s32.totalorder %s139, %s141
      %p145 = scmp.eq.s32.totalorder %s23, 0
      %p146 = por %p144, %p145
      %p147 = scmp.ne.s32.totalorder %s139, %s141
      %p148 = scmp.eq.s32.totalorder %s28, 3
      %p149 = por %p147, %p148
      %p150 = scmp.ne.s32.totalorder %s141, %s142
      %p151 = scmp.eq.s32.totalorder %s28, 0
      %p152 = por %p150, %p151
      %p153 = scmp.ne.s32.totalorder %s141, %s142
      %p154 = scmp.eq.s32.totalorder %s29, 3
      %p155 = por %p153, %p154
      %p157 = scmp.ne.s32.totalorder %s142, %s156
      %p158 = scmp.eq.s32.totalorder %s29, 0
      %p159 = por %p157, %p158
      %s161 = sadd.s32 %s160, 1
      %p164 = scmp.eq.s32.totalorder %s23, 3
      %p165 = scmp.ne.s32.totalorder %s160, %s162
      %p166 = scmp.eq.s32.totalorder %s23, 0
      %p167 = por %p165, %p166
      %p168 = scmp.ne.s32.totalorder %s160, %s162
      %p169 = scmp.eq.s32.totalorder %s28, 3
      %p170 = por %p168, %p169
      %p171 = scmp.ne.s32.totalorder %s162, %s163
      %p172 = scmp.eq.s32.totalorder %s28, 0
      %p173 = por %p171, %p172
      %p174 = scmp.ne.s32.totalorder %s162, %s163
      %p175 = scmp.eq.s32.totalorder %s29, 3
      %p176 = por %p174, %p175
      %p178 = scmp.ne.s32.totalorder %s163, %s177
      %p179 = scmp.eq.s32.totalorder %s29, 0
      %p180 = por %p178, %p179
      %s182 = sadd.s32 %s181, 1
      %p185 = scmp.eq.s32.totalorder %s23, 3
      %p186 = scmp.ne.s32.totalorder %s181, %s183
      %p187 = scmp.eq.s32.totalorder %s23, 0
      %p188 = por %p186, %p187
      %p189 = scmp.ne.s32.totalorder %s181, %s183
      %p190 = scmp.eq.s32.totalorder %s28, 3
      %p191 = por %p189, %p190
      %p192 = scmp.ne.s32.totalorder %s183, %s184
      %p193 = scmp.eq.s32.totalorder %s28, 0
      %p194 = por %p192, %p193
      %p195 = scmp.ne.s32.totalorder %s183, %s184
      %p196 = scmp.eq.s32.totalorder %s29, 3
      %p197 = por %p195, %p196
      %p199 = scmp.ne.s32.totalorder %s184, %s198
      %p200 = scmp.eq.s32.totalorder %s29, 0
      %p201 = por %p199, %p200
      %s203 = sadd.s32 %s202, 1
      %p206 = scmp.eq.s32.totalorder %s23, 3
      %p207 = scmp.ne.s32.totalorder %s202, %s204
      %p208 = scmp.eq.s32.totalorder %s23, 0
      %p209 = por %p207, %p208
      %p210 = scmp.ne.s32.totalorder %s202, %s204
      %p211 = scmp.eq.s32.totalorder %s28, 3
      %p212 = por %p210, %p211
      %p213 = scmp.ne.s32.totalorder %s204, %s205
      %p214 = scmp.eq.s32.totalorder %s28, 0
      %p215 = por %p213, %p214
      %p216 = scmp.ne.s32.totalorder %s204, %s205
      %p217 = scmp.eq.s32.totalorder %s29, 3
      %p218 = por %p216, %p217
      %p220 = scmp.ne.s32.totalorder %s205, %s219
      %p221 = scmp.eq.s32.totalorder %s29, 0
      %p222 = por %p220, %p221
      %s224 = sadd.s32 %s223, 1
      %p227 = scmp.eq.s32.totalorder %s23, 3
      %p228 = scmp.ne.s32.totalorder %s223, %s225
      %p229 = scmp.eq.s32.totalorder %s23, 0
      %p230 = por %p228, %p229
      %p231 = scmp.ne.s32.totalorder %s223, %s225
      %p232 = scmp.eq.s32.totalorder %s28, 3
      %p233 = por %p231, %p232
      %p234 = scmp.ne.s32.totalorder %s225, %s226
      %p235 = scmp.eq.s32.totalorder %s28, 0
      %p236 = por %p234, %p235
      %p237 = scmp.ne.s32.totalorder %s225, %s226
      %p238 = scmp.eq.s32.totalorder %s29, 3
      %p239 = por %p237, %p238
      %p241 = scmp.ne.s32.totalorder %s226, %s240
      %p242 = scmp.eq.s32.totalorder %s29, 0
      %p243 = por %p241, %p242
      %s244 = ssub.s32 %s30, %s42
      %s245 = ssub.s32 %s31, %s38
      %s246 = sor.u32 %s244, %s245
      %p247 = scmp.eq.s32.totalorder %s246, 0
      %s249 = sadd.s32 %s248, 1
      %s250 = scalar_select %p247, %s248, %s249
      %p253 = pneg %p247
      %p254 = scmp.eq.s32.totalorder %s23, 3
      %p255 = por %p253, %p254
      %p256 = scmp.ne.s32.totalorder %s248, %s251
      %p257 = scmp.eq.s32.totalorder %s23, 0
      %p258 = por %p256, %p257
      %p259 = scmp.ne.s32.totalorder %s248, %s251
      %p260 = scmp.eq.s32.totalorder %s28, 3
      %p261 = por %p259, %p260
      %p262 = scmp.ne.s32.totalorder %s251, %s252
      %p263 = scmp.eq.s32.totalorder %s28, 0
      %p264 = por %p262, %p263
      %p265 = scmp.ne.s32.totalorder %s251, %s252
      %p266 = scmp.eq.s32.totalorder %s29, 3
      %p267 = por %p265, %p266
      %p269 = scmp.ne.s32.totalorder %s252, %s268
      %p270 = scmp.eq.s32.totalorder %s29, 0
      %p271 = por %p269, %p270
      %s272 = ssub.s32 %s30, %s42
      %s273 = ssub.s32 %s31, %s38
      %s274 = sor.u32 %s272, %s273
      %p275 = scmp.eq.s32.totalorder %s274, 0
      %s277 = sadd.s32 %s276, 1
      %s278 = scalar_select %p275, %s276, %s277
      %p281 = pneg %p275
      %p282 = scmp.eq.s32.totalorder %s23, 3
      %p283 = por %p281, %p282
      %p284 = scmp.ne.s32.totalorder %s276, %s279
      %p285 = scmp.eq.s32.totalorder %s23, 0
      %p286 = por %p284, %p285
      %p287 = scmp.ne.s32.totalorder %s276, %s279
      %p288 = scmp.eq.s32.totalorder %s28, 3
      %p289 = por %p287, %p288
      %p290 = scmp.ne.s32.totalorder %s279, %s280
      %p291 = scmp.eq.s32.totalorder %s28, 0
      %p292 = por %p290, %p291
      %p293 = scmp.ne.s32.totalorder %s279, %s280
      %p294 = scmp.eq.s32.totalorder %s29, 3
      %p295 = por %p293, %p294
      %p297 = scmp.ne.s32.totalorder %s280, %s296
      %p298 = scmp.eq.s32.totalorder %s29, 0
      %p299 = por %p297, %p298
      %p300 = scmp.le.s32.totalorder 1, %s23
      %p301 = scmp.lt.s32.totalorder %s23, 5
      %p302 = pnand %p300, %p301
      %p303 = pneg %p302
      // Predicated region
      $region9: #{mamba_i2p_forward.2} parent=5 // pred_check
        _
      $region10: #{mamba_i2p_forward.2} parent=5 // pred_check_branch
        %305 = sbr.rel (%p302) target = $region12
      $region11: #{mamba_i2p_forward.2} parent=5 // pred_region
        %s306 = ssub.s32 %s23, 1
        // Predicated region
        $region13: #{mamba_i2p_forward.2} parent=11 // pred_check
          %p307 = pneg %p110
        $region14: #{mamba_i2p_forward.2} parent=11 // pred_check_branch
          %309 = sbr.rel (%p307) target = $region16
        $region15: #{mamba_i2p_forward.2} parent=11 // pred_region
          _
        $region16: #{mamba_i2p_forward.2} parent=11 // pred_fallthru
          _
        // Predicated region
        $region17: #{mamba_i2p_forward.2} parent=11 // pred_check
          %p310 = pneg %p131
        $region18: #{mamba_i2p_forward.2} parent=11 // pred_check_branch
          %312 = sbr.rel (%p310) target = $region20
        $region19: #{mamba_i2p_forward.2} parent=11 // pred_region
          _
        $region20: #{mamba_i2p_forward.2} parent=11 // pred_fallthru
          _
        // Predicated region
        $region21: #{mamba_i2p_forward.2} parent=11 // pred_check
          %p313 = pneg %p152
        $region22: #{mamba_i2p_forward.2} parent=11 // pred_check_branch
          %315 = sbr.rel (%p313) target = $region24
        $region23: #{mamba_i2p_forward.2} parent=11 // pred_region
          _
        $region24: #{mamba_i2p_forward.2} parent=11 // pred_fallthru
          _
        // Predicated region
        $region25: #{mamba_i2p_forward.2} parent=11 // pred_check
          %p316 = pneg %p173
        $region26: #{mamba_i2p_forward.2} parent=11 // pred_check_branch
          %318 = sbr.rel (%p316) target = $region28
        $region27: #{mamba_i2p_forward.2} parent=11 // pred_region
          _
        $region28: #{mamba_i2p_forward.2} parent=11 // pred_fallthru
          _
        // Predicated region
        $region29: #{mamba_i2p_forward.2} parent=11 // pred_check
          %p319 = pneg %p194
        $region30: #{mamba_i2p_forward.2} parent=11 // pred_check_branch
          %321 = sbr.rel (%p319) target = $region32
        $region31: #{mamba_i2p_forward.2} parent=11 // pred_region
          _
        $region32: #{mamba_i2p_forward.2} parent=11 // pred_fallthru
          _
        // Predicated region
        $region33: #{mamba_i2p_forward.2} parent=11 // pred_check
          %p322 = pneg %p215
        $region34: #{mamba_i2p_forward.2} parent=11 // pred_check_branch
          %324 = sbr.rel (%p322) target = $region36
        $region35: #{mamba_i2p_forward.2} parent=11 // pred_region
          _
        $region36: #{mamba_i2p_forward.2} parent=11 // pred_fallthru
          _
        // Predicated region
        $region37: #{mamba_i2p_forward.2} parent=11 // pred_check
          %p325 = pneg %p236
        $region38: #{mamba_i2p_forward.2} parent=11 // pred_check_branch
          %327 = sbr.rel (%p325) target = $region40
        $region39: #{mamba_i2p_forward.2} parent=11 // pred_region
          _
        $region40: #{mamba_i2p_forward.2} parent=11 // pred_fallthru
          _
      $region12: #{mamba_i2p_forward.2} parent=5 // pred_fallthru
        _
      %p328 = scmp.lt.s32.totalorder %s23, 4
      // Predicated region
      $region41: #{mamba_i2p_forward.2} parent=5 // pred_check
        %p329 = pneg %p328
      $region42: #{mamba_i2p_forward.2} parent=5 // pred_check_branch
        %331 = sbr.rel (%p329) target = $region44
      $region43: #{mamba_i2p_forward.2} parent=5 // pred_region
        // Predicated region
        $region45: #{mamba_i2p_forward.2} parent=43 // pred_check
          %p332 = pneg %p57
        $region46: #{mamba_i2p_forward.2} parent=43 // pred_check_branch
          %334 = sbr.rel (%p332) target = $region48
        $region47: #{mamba_i2p_forward.2} parent=43 // pred_region
          %s335 = sand.u32 %s47, 1
          %s336 = sand.u32 %s47, 1
          %s337 = smul.addr %s336, 32
          %s338 = scalar_lea.vmem [#allocation2], %s337
          %s339 = smul.addr %s30, 16
          %s340 = sadd.s32 %s31, %s339
          %s341 = smul.addr %s340, 4
          %s342 = scalar_lea.vmem %s0, %s341
          // Predicated region
          $region49: #{mamba_i2p_forward.2} parent=47 // pred_check
            _
          $region50: #{mamba_i2p_forward.2} parent=47 // pred_check_branch
            %344 = sbr.rel (0) target = $region52
          $region51: #{mamba_i2p_forward.2} parent=47 // pred_region
            // Predicated region
            $region53: #{mamba_i2p_forward.2} parent=51 // pred_check
              _
            $region54: #{mamba_i2p_forward.2} parent=51 // pred_check_branch
              %346 = sbr.rel target = $region56
            $region55: #{mamba_i2p_forward.2} parent=51 // pred_region
              // Predicated region
              $region68: #{mamba_i2p_forward.2} parent=55 // pred_check
                _
              $region69: #{mamba_i2p_forward.2} parent=55 // pred_check_branch
                %376 = sbr.rel (0) target = $region71
              $region70: #{mamba_i2p_forward.2} parent=55 // pred_region
                loop: start=0, step=1, limit=1
                $region72: #{mamba_i2p_forward.2} parent=70 // loop_pre_header
                  _
                $region73: #{mamba_i2p_forward.2} parent=70 // loop_header
                  %s378 = sphi 0, %s382
                  %p379 = scmp.ge.s32.totalorder %s378, 1
                  %s383 = sphi %s342, %s342
                  %s384 = sphi %s338, %s338
                $region74: #{mamba_i2p_forward.2} parent=70 // loop_header_branch
                  %381 = sbr.rel (%p379) target = $region78
                $region75: #{mamba_i2p_forward.2} parent=70 // loop_body
                  _
                $region76: #{mamba_i2p_forward.2} parent=70 // loop_footer
                  %s382 = sadd.s32 1, %s378
                $region77: #{mamba_i2p_forward.2} parent=70 // loop_footer_branch
                  %377 = sbr.rel target = $region73
                $region78: #{mamba_i2p_forward.2} parent=70 // loop_exit
                  _
                %s386 = ssub.s32 16, 1
                loop: start=0, step=1, limit=1
                $region79: #{mamba_i2p_forward.2} parent=70 // loop_pre_header
                  _
                $region80: #{mamba_i2p_forward.2} parent=70 // loop_header
                  %s388 = sphi 0, %s392
                  %p389 = scmp.ge.s32.totalorder %s388, 1
                  %s393 = sphi %s342, %s342
                  %s394 = sphi %s338, %s338
                $region81: #{mamba_i2p_forward.2} parent=70 // loop_header_branch
                  %391 = sbr.rel (%p389) target = $region85
                $region82: #{mamba_i2p_forward.2} parent=70 // loop_body
                  %v395 = vld [vmem:[%s393] sm:%s386]
                  %396 = vst [vmem:[%s394] sm:%s386] %v395
                  %v397 = vld [vmem:[%s393 + $0x8] sm:%s386]
                  %398 = vst [vmem:[%s394 + $0x4] sm:%s386] %v397
                  %v399 = vld [vmem:[%s393 + $0x10] sm:%s386]
                  %400 = vst [vmem:[%s394 + $0x8] sm:%s386] %v399
                  %v401 = vld [vmem:[%s393 + $0x18] sm:%s386]
                  %402 = vst [vmem:[%s394 + $0xc] sm:%s386] %v401
                  %v403 = vld [vmem:[%s393 + $0x20] sm:%s386]
                  %404 = vst [vmem:[%s394 + $0x10] sm:%s386] %v403
                  %v405 = vld [vmem:[%s393 + $0x28] sm:%s386]
                  %406 = vst [vmem:[%s394 + $0x14] sm:%s386] %v405
                  %v407 = vld [vmem:[%s393 + $0x30] sm:%s386]
                  %408 = vst [vmem:[%s394 + $0x18] sm:%s386] %v407
                  %v409 = vld [vmem:[%s393 + $0x38] sm:%s386]
                  %410 = vst [vmem:[%s394 + $0x1c] sm:%s386] %v409
                $region83: #{mamba_i2p_forward.2} parent=70 // loop_footer
                  %s392 = sadd.s32 1, %s388
                $region84: #{mamba_i2p_forward.2} parent=70 // loop_footer_branch
                  %387 = sbr.rel target = $region80
                $region85: #{mamba_i2p_forward.2} parent=70 // loop_exit
                  _
              $region71: #{mamba_i2p_forward.2} parent=55 // pred_fallthru
                _
            $region56: #{mamba_i2p_forward.2} parent=51 // pred_fallthru
              _
            // Predicated region
            $region57: #{mamba_i2p_forward.2} parent=51 // pred_check
              _
            $region58: #{mamba_i2p_forward.2} parent=51 // pred_check_branch
              %348 = sbr.rel (0) target = $region60
            $region59: #{mamba_i2p_forward.2} parent=51 // pred_region
              %s350 = ssub.s32 16, 1
              loop: start=0, step=1, limit=1
              $region61: #{mamba_i2p_forward.2} parent=59 // loop_pre_header
                _
              $region62: #{mamba_i2p_forward.2} parent=59 // loop_header
                %s352 = sphi 0, %s356
                %p353 = scmp.ge.s32.totalorder %s352, 1
                %s357 = sphi %s342, %s342
                %s358 = sphi %s338, %s338
              $region63: #{mamba_i2p_forward.2} parent=59 // loop_header_branch
                %355 = sbr.rel (%p353) target = $region67
              $region64: #{mamba_i2p_forward.2} parent=59 // loop_body
                %v359 = vld [vmem:[%s357] sm:%s350]
                %360 = vst [vmem:[%s358] sm:%s350] %v359
                %v361 = vld [vmem:[%s357 + $0x8] sm:%s350]
                %362 = vst [vmem:[%s358 + $0x4] sm:%s350] %v361
                %v363 = vld [vmem:[%s357 + $0x10] sm:%s350]
                %364 = vst [vmem:[%s358 + $0x8] sm:%s350] %v363
                %v365 = vld [vmem:[%s357 + $0x18] sm:%s350]
                %366 = vst [vmem:[%s358 + $0xc] sm:%s350] %v365
                %v367 = vld [vmem:[%s357 + $0x20] sm:%s350]
                %368 = vst [vmem:[%s358 + $0x10] sm:%s350] %v367
                %v369 = vld [vmem:[%s357 + $0x28] sm:%s350]
                %370 = vst [vmem:[%s358 + $0x14] sm:%s350] %v369
                %v371 = vld [vmem:[%s357 + $0x30] sm:%s350]
                %372 = vst [vmem:[%s358 + $0x18] sm:%s350] %v371
                %v373 = vld [vmem:[%s357 + $0x38] sm:%s350]
                %374 = vst [vmem:[%s358 + $0x1c] sm:%s350] %v373
              $region65: #{mamba_i2p_forward.2} parent=59 // loop_footer
                %s356 = sadd.s32 1, %s352
              $region66: #{mamba_i2p_forward.2} parent=59 // loop_footer_branch
                %351 = sbr.rel target = $region62
              $region67: #{mamba_i2p_forward.2} parent=59 // loop_exit
                _
            $region60: #{mamba_i2p_forward.2} parent=51 // pred_fallthru
              _
          $region52: #{mamba_i2p_forward.2} parent=47 // pred_fallthru
            _
          %411 = vnop
        $region48: #{mamba_i2p_forward.2} parent=43 // pred_fallthru
          _
        // Predicated region
        $region86: #{mamba_i2p_forward.2} parent=43 // pred_check
          %p412 = pneg %p83
        $region87: #{mamba_i2p_forward.2} parent=43 // pred_check_branch
          %414 = sbr.rel (%p412) target = $region89
        $region88: #{mamba_i2p_forward.2} parent=43 // pred_region
          %p415 = scmp.lt.s32.totalorder %s30, 1
          %s416 = scalar_select %p415, %s30, 1
          %s417 = smul.addr %s416, 24
          %s418 = smul.addr %s417, 8
          %s419 = scalar_lea.vmem %s1, %s418
        $region89: #{mamba_i2p_forward.2} parent=43 // pred_fallthru
          _
      $region44: #{mamba_i2p_forward.2} parent=5 // pred_fallthru
        _
      %p420 = scmp.le.s32.totalorder 1, %s23
      %p421 = scmp.lt.s32.totalorder %s23, 5
      %p422 = pnand %p420, %p421
      %p423 = pneg %p422
      // Predicated region
      $region90: #{mamba_i2p_forward.2} parent=5 // pred_check
        _
      $region91: #{mamba_i2p_forward.2} parent=5 // pred_check_branch
        %425 = sbr.rel (%p422) target = $region93
      $region92: #{mamba_i2p_forward.2} parent=5 // pred_region
        %s426 = ssub.s32 %s23, 1
        %s427 = sand.u32 %s50, 1
        %s428 = sand.u32 %s50, 1
        %s429 = smul.addr %s428, 32
        %s430 = scalar_lea.vmem [#allocation2], %s429
        // Predicated region
        $region94: #{mamba_i2p_forward.2} parent=92 // pred_check
          %p431 = pneg %p63
        $region95: #{mamba_i2p_forward.2} parent=92 // pred_check_branch
          %433 = sbr.rel (%p431) target = $region97
        $region96: #{mamba_i2p_forward.2} parent=92 // pred_region
          _
        $region97: #{mamba_i2p_forward.2} parent=92 // pred_fallthru
          _
        %s434 = sand.u32 %s50, 1
        %s435 = sand.u32 %s50, 1
        %s436 = smul.addr %s435, 32
        %s437 = scalar_lea.vmem [#allocation2], %s436
        %p438 = pneg %p63
        %p439 = pneg %p60
        %p440 = scmp.lt.s32.totalorder %s32, 1
        %s441 = scalar_select %p440, %s32, 1
        %s442 = smul.addr %s441, 24
        %s443 = smul.addr %s442, 8
        %s444 = scalar_lea.vmem %s1, %s443
        %p445 = pneg %p89
        %p446 = pneg %p86
        %p447 = pneg %p110
        %p448 = pneg %p107
        %p449 = pneg %p131
        %p450 = pneg %p128
        %p451 = pneg %p152
        %p452 = pneg %p149
        %p453 = pneg %p173
        %p454 = pneg %p170
        %p455 = pneg %p194
        %p456 = pneg %p191
        %p457 = pneg %p215
        %p458 = pneg %p212
        %p459 = pneg %p236
        %p460 = pneg %p233
        %p461 = pneg %p264
        %p462 = pneg %p261
        %s463 = sand.u32 %s251, 1
        %s464 = scalar_lea.sflag [#allocation4], %s463
        %s465 = sand.u32 %s251, 1
        %s466 = smul.addr %s465, 32
        %s467 = scalar_lea.vmem [#allocation3], %s466
        %p468 = pneg %p292
        %p469 = pneg %p289
        %s470 = sand.u32 %s279, 1
        %s471 = scalar_lea.sflag [#allocation6], %s470
        %s472 = sand.u32 %s279, 1
        %s473 = scalar_lea.vmem [#allocation5], %s472
        %p474 = scmp.lt.s32.totalorder %s32, 1
        %s475 = scalar_select %p474, %s32, 1
        %s476 = smul.addr %s475, 24
        %s477 = smul.addr %s476, 8
        %s478 = scalar_lea.vmem %s1, %s477
        %v480 = vld [vmem:[%s430] sm:$0xf]
        %v481 = vld [vmem:[%s430 + $0x4] sm:$0xf]
        %v482 = vld [vmem:[%s430 + $0x8] sm:$0xf]
        %v483 = vld [vmem:[%s430 + $0xc] sm:$0xf]
        %v484 = vld [vmem:[%s430 + $0x10] sm:$0xf]
        %v485 = vld [vmem:[%s430 + $0x14] sm:$0xf]
        %v486 = vld [vmem:[%s430 + $0x18] sm:$0xf]
        %v487 = vld [vmem:[%s430 + $0x1c] sm:$0xf]
        %v488 = vld [vmem:[%s2] sm:$0xf]
        %v489 = vld [vmem:[%s2 + $0x4] sm:$0xf]
        %v490 = vld [vmem:[%s2 + $0x8] sm:$0xf]
        %v491 = vld [vmem:[%s2 + $0xc] sm:$0xf]
        %v492 = vld [vmem:[%s2 + $0x10] sm:$0xf]
        %v493 = vld [vmem:[%s2 + $0x14] sm:$0xf]
        %v494 = vld [vmem:[%s2 + $0x18] sm:$0xf]
        %v495 = vld [vmem:[%s2 + $0x1c] sm:$0xf]
        %v496 = vld [vmem:[%s2 + $0x20] sm:$0xf]
        %v497 = vld [vmem:[%s2 + $0x24] sm:$0xf]
        %v498 = vld [vmem:[%s2 + $0x28] sm:$0xf]
        %v499 = vld [vmem:[%s2 + $0x2c] sm:$0xf]
        %v500 = vld [vmem:[%s2 + $0x30] sm:$0xf]
        %v501 = vld [vmem:[%s2 + $0x34] sm:$0xf]
        %v502 = vld [vmem:[%s2 + $0x38] sm:$0xf]
        %v503 = vld [vmem:[%s2 + $0x3c] sm:$0xf]
        %v504 = vld [vmem:[%s2 + $0x40] sm:$0xf]
        %v505 = vld [vmem:[%s2 + $0x44] sm:$0xf]
        %v506 = vld [vmem:[%s2 + $0x48] sm:$0xf]
        %v507 = vld [vmem:[%s2 + $0x4c] sm:$0xf]
        %v508 = vld [vmem:[%s2 + $0x50] sm:$0xf]
        %v509 = vld [vmem:[%s2 + $0x54] sm:$0xf]
        %v510 = vld [vmem:[%s2 + $0x58] sm:$0xf]
        %v511 = vld [vmem:[%s2 + $0x5c] sm:$0xf]
        %v512 = vld [vmem:[%s478] sm:$0xff]
        %v513 = vld [vmem:[%s478 + $0x8] sm:$0xff]
        %v514 = vld [vmem:[%s478 + $0x10] sm:$0xff]
        %v515 = vld [vmem:[%s478 + $0x18] sm:$0xff]
        %v516 = vld [vmem:[%s478 + $0x20] sm:$0xff]
        %v517 = vld [vmem:[%s478 + $0x28] sm:$0xff]
        %v518 = vld [vmem:[%s478 + $0x30] sm:$0xff]
        %v519 = vld [vmem:[%s478 + $0x38] sm:$0xff]
        %v520 = vld [vmem:[%s478 + $0x40] sm:$0xff]
        %v521 = vld [vmem:[%s478 + $0x48] sm:$0xff]
        %v522 = vld [vmem:[%s478 + $0x50] sm:$0xff]
        %v523 = vld [vmem:[%s478 + $0x58] sm:$0xff]
        %v524 = vld [vmem:[%s478 + $0x60] sm:$0xff]
        %v525 = vld [vmem:[%s478 + $0x68] sm:$0xff]
        %v526 = vld [vmem:[%s478 + $0x70] sm:$0xff]
        %v527 = vld [vmem:[%s478 + $0x78] sm:$0xff]
        %v528 = vld [vmem:[%s478 + $0x80] sm:$0xff]
        %v529 = vld [vmem:[%s478 + $0x88] sm:$0xff]
        %v530 = vld [vmem:[%s478 + $0x90] sm:$0xff]
        %v531 = vld [vmem:[%s478 + $0x98] sm:$0xff]
        %v532 = vld [vmem:[%s478 + $0xa0] sm:$0xff]
        %v533 = vld [vmem:[%s478 + $0xa8] sm:$0xff]
        %v534 = vld [vmem:[%s478 + $0xb0] sm:$0xff]
        %v535 = vld [vmem:[%s478 + $0xb8] sm:$0xff]
        %537 = vset.pattern.permute.xlu0 0
        %538 = vperm.xlu0 %537, %v512
        %v539 = vpop.permute.xlu0 %538
        %542 = vset.pattern.permute.xlu0 0
        %543 = vperm.xlu0 %542, %v513
        %v544 = vpop.permute.xlu0 %543
        %547 = vset.pattern.permute.xlu0 0
        %548 = vperm.xlu0 %547, %v514
        %v549 = vpop.permute.xlu0 %548
        %552 = vset.pattern.permute.xlu0 0
        %553 = vperm.xlu0 %552, %v515
        %v554 = vpop.permute.xlu0 %553
        %557 = vset.pattern.permute.xlu0 0
        %558 = vperm.xlu0 %557, %v516
        %v559 = vpop.permute.xlu0 %558
        %562 = vset.pattern.permute.xlu0 0
        %563 = vperm.xlu0 %562, %v517
        %v564 = vpop.permute.xlu0 %563
        %567 = vset.pattern.permute.xlu0 0
        %568 = vperm.xlu0 %567, %v518
        %v569 = vpop.permute.xlu0 %568
        %572 = vset.pattern.permute.xlu0 0
        %573 = vperm.xlu0 %572, %v519
        %v574 = vpop.permute.xlu0 %573
        %577 = vset.pattern.permute.xlu0 0
        %578 = vperm.xlu0 %577, %v520
        %v579 = vpop.permute.xlu0 %578
        %582 = vset.pattern.permute.xlu0 0
        %583 = vperm.xlu0 %582, %v521
        %v584 = vpop.permute.xlu0 %583
        %587 = vset.pattern.permute.xlu0 0
        %588 = vperm.xlu0 %587, %v522
        %v589 = vpop.permute.xlu0 %588
        %592 = vset.pattern.permute.xlu0 0
        %593 = vperm.xlu0 %592, %v523
        %v594 = vpop.permute.xlu0 %593
        %597 = vset.pattern.permute.xlu0 0
        %598 = vperm.xlu0 %597, %v524
        %v599 = vpop.permute.xlu0 %598
        %602 = vset.pattern.permute.xlu0 0
        %603 = vperm.xlu0 %602, %v525
        %v604 = vpop.permute.xlu0 %603
        %607 = vset.pattern.permute.xlu0 0
        %608 = vperm.xlu0 %607, %v526
        %v609 = vpop.permute.xlu0 %608
        %612 = vset.pattern.permute.xlu0 0
        %613 = vperm.xlu0 %612, %v527
        %v614 = vpop.permute.xlu0 %613
        %617 = vset.pattern.permute.xlu0 0
        %618 = vperm.xlu0 %617, %v528
        %v619 = vpop.permute.xlu0 %618
        %622 = vset.pattern.permute.xlu0 0
        %623 = vperm.xlu0 %622, %v529
        %v624 = vpop.permute.xlu0 %623
        %627 = vset.pattern.permute.xlu0 0
        %628 = vperm.xlu0 %627, %v530
        %v629 = vpop.permute.xlu0 %628
        %632 = vset.pattern.permute.xlu0 0
        %633 = vperm.xlu0 %632, %v531
        %v634 = vpop.permute.xlu0 %633
        %637 = vset.pattern.permute.xlu0 0
        %638 = vperm.xlu0 %637, %v532
        %v639 = vpop.permute.xlu0 %638
        %642 = vset.pattern.permute.xlu0 0
        %643 = vperm.xlu0 %642, %v533
        %v644 = vpop.permute.xlu0 %643
        %647 = vset.pattern.permute.xlu0 0
        %648 = vperm.xlu0 %647, %v534
        %v649 = vpop.permute.xlu0 %648
        %652 = vset.pattern.permute.xlu0 0
        %653 = vperm.xlu0 %652, %v535
        %v654 = vpop.permute.xlu0 %653
        %v680 = vunpack.c.l.b16 %v488
        %v681 = vunpack.c.l.b16 %v489
        %v682 = vunpack.c.l.b16 %v490
        %v683 = vunpack.c.l.b16 %v491
        %v684 = vunpack.c.l.b16 %v492
        %v685 = vunpack.c.l.b16 %v493
        %v686 = vunpack.c.l.b16 %v494
        %v687 = vunpack.c.l.b16 %v495
        %v688 = vunpack.c.l.b16 %v496
        %v689 = vunpack.c.l.b16 %v497
        %v690 = vunpack.c.l.b16 %v498
        %v691 = vunpack.c.l.b16 %v499
        %v692 = vunpack.c.l.b16 %v500
        %v693 = vunpack.c.l.b16 %v501
        %v694 = vunpack.c.l.b16 %v502
        %v695 = vunpack.c.l.b16 %v503
        %v696 = vunpack.c.l.b16 %v504
        %v697 = vunpack.c.l.b16 %v505
        %v698 = vunpack.c.l.b16 %v506
        %v699 = vunpack.c.l.b16 %v507
        %v700 = vunpack.c.l.b16 %v508
        %v701 = vunpack.c.l.b16 %v509
        %v702 = vunpack.c.l.b16 %v510
        %v703 = vunpack.c.l.b16 %v511
        %v704 = vpack.c.b16 %v681, %v680
        %v705 = vpack.c.b16 %v683, %v682
        %v706 = vpack.c.b16 %v685, %v684
        %v707 = vpack.c.b16 %v687, %v686
        %v708 = vpack.c.b16 %v689, %v688
        %v709 = vpack.c.b16 %v691, %v690
        %v710 = vpack.c.b16 %v693, %v692
        %v711 = vpack.c.b16 %v695, %v694
        %v712 = vpack.c.b16 %v697, %v696
        %v713 = vpack.c.b16 %v699, %v698
        %v714 = vpack.c.b16 %v701, %v700
        %v715 = vpack.c.b16 %v703, %v702
        %v724 = vunpack.c.l.b16 %v480
        %v725 = vunpack.c.l.b16 %v481
        %v726 = vunpack.c.l.b16 %v482
        %v727 = vunpack.c.l.b16 %v483
        %v728 = vunpack.c.l.b16 %v484
        %v729 = vunpack.c.l.b16 %v485
        %v730 = vunpack.c.l.b16 %v486
        %v731 = vunpack.c.l.b16 %v487
        %v732 = vpack.c.b16 %v725, %v724
        %v733 = vpack.c.b16 %v727, %v726
        %v734 = vpack.c.b16 %v729, %v728
        %v735 = vpack.c.b16 %v731, %v730
        %vm740 = vcmask 523264
        %v742 = vsel %vm740, %v704, 0
        %v745 = vsel %vm740, %v705, 0
        %v748 = vsel %vm740, %v706, 0
        %v751 = vsel %vm740, %v707, 0
        %v754 = vsel %vm740, %v708, 0
        %v757 = vsel %vm740, %v709, 0
        %v760 = vsel %vm740, %v710, 0
        %v763 = vsel %vm740, %v711, 0
        %v766 = vsel %vm740, %v712, 0
        %v769 = vsel %vm740, %v713, 0
        %v772 = vsel %vm740, %v714, 0
        %v775 = vsel %vm740, %v715, 0
        %777 = vmatpush.bf16.msra.mxu0 0
        %778 = vmatpush.bf16.msra.mxu0 0
        %779 = vmatpush.bf16.msra.mxu0 0
        %780 = vmatpush.bf16.msra.mxu0 0
        %781 = vmatpush.bf16.msra.mxu0 %v735
        %782 = vmatpush.bf16.msra.mxu0 %v734
        %783 = vmatpush.bf16.msra.mxu0 %v733
        %784 = vmatpush.bf16.msra.mxu0 %v732
        %785 = vmatmul.bf16.gmra.mxu0 %v742
        %v786 = vpop.f32.mrf.mxu0
        %v787 = vadd.f32 %v539, %v786
        %v788 = vpop.f32.mrf.mxu0
        %v789 = vadd.f32 %v544, %v788
        %790 = vmatmul.bf16.gmra.mxu0 %v745
        %v791 = vpop.f32.mrf.mxu0
        %v792 = vadd.f32 %v549, %v791
        %v793 = vpop.f32.mrf.mxu0
        %v794 = vadd.f32 %v554, %v793
        %795 = vmatmul.bf16.gmra.mxu0 %v748
        %v796 = vpop.f32.mrf.mxu0
        %v797 = vadd.f32 %v559, %v796
        %v798 = vpop.f32.mrf.mxu0
        %v799 = vadd.f32 %v564, %v798
        %800 = vmatmul.bf16.gmra.mxu0 %v751
        %v801 = vpop.f32.mrf.mxu0
        %v802 = vadd.f32 %v569, %v801
        %v803 = vpop.f32.mrf.mxu0
        %v804 = vadd.f32 %v574, %v803
        %805 = vmatmul.bf16.gmra.mxu0 %v754
        %v806 = vpop.f32.mrf.mxu0
        %v807 = vadd.f32 %v579, %v806
        %v808 = vpop.f32.mrf.mxu0
        %v809 = vadd.f32 %v584, %v808
        %810 = vmatmul.bf16.gmra.mxu0 %v757
        %v811 = vpop.f32.mrf.mxu0
        %v812 = vadd.f32 %v589, %v811
        %v813 = vpop.f32.mrf.mxu0
        %v814 = vadd.f32 %v594, %v813
        %815 = vmatmul.bf16.gmra.mxu0 %v760
        %v816 = vpop.f32.mrf.mxu0
        %v817 = vadd.f32 %v599, %v816
        %v818 = vpop.f32.mrf.mxu0
        %v819 = vadd.f32 %v604, %v818
        %820 = vmatmul.bf16.gmra.mxu0 %v763
        %v821 = vpop.f32.mrf.mxu0
        %v822 = vadd.f32 %v609, %v821
        %v823 = vpop.f32.mrf.mxu0
        %v824 = vadd.f32 %v614, %v823
        %825 = vmatmul.bf16.gmra.mxu0 %v766
        %v826 = vpop.f32.mrf.mxu0
        %v827 = vadd.f32 %v619, %v826
        %v828 = vpop.f32.mrf.mxu0
        %v829 = vadd.f32 %v624, %v828
        %830 = vmatmul.bf16.gmra.mxu0 %v769
        %v831 = vpop.f32.mrf.mxu0
        %v832 = vadd.f32 %v629, %v831
        %v833 = vpop.f32.mrf.mxu0
        %v834 = vadd.f32 %v634, %v833
        %835 = vmatmul.bf16.gmra.mxu0 %v772
        %v836 = vpop.f32.mrf.mxu0
        %v837 = vadd.f32 %v639, %v836
        %v838 = vpop.f32.mrf.mxu0
        %v839 = vadd.f32 %v644, %v838
        %840 = vmatmul.bf16.gmra.mxu0 %v775
        %v841 = vpop.f32.mrf.mxu0
        %v842 = vadd.f32 %v649, %v841
        %v843 = vpop.f32.mrf.mxu0
        %v844 = vadd.f32 %v654, %v843
        %845 = vdwg.mxu0
        %v846 = vmax.f32 %v787, 0.0
        %v847 = vmax.f32 %v789, 0.0
        %v848 = vmax.f32 %v792, 0.0
        %v849 = vmax.f32 %v794, 0.0
        %v850 = vmax.f32 %v797, 0.0
        %v851 = vmax.f32 %v799, 0.0
        %v852 = vmax.f32 %v802, 0.0
        %v853 = vmax.f32 %v804, 0.0
        %v854 = vmax.f32 %v807, 0.0
        %v855 = vmax.f32 %v809, 0.0
        %v856 = vmax.f32 %v812, 0.0
        %v857 = vmax.f32 %v814, 0.0
        %v858 = vmax.f32 %v817, 0.0
        %v859 = vmax.f32 %v819, 0.0
        %v860 = vmax.f32 %v822, 0.0
        %v861 = vmax.f32 %v824, 0.0
        %v862 = vmax.f32 %v827, 0.0
        %v863 = vmax.f32 %v829, 0.0
        %v864 = vmax.f32 %v832, 0.0
        %v865 = vmax.f32 %v834, 0.0
        %v866 = vmax.f32 %v837, 0.0
        %v867 = vmax.f32 %v839, 0.0
        %v868 = vmax.f32 %v842, 0.0
        %v869 = vmax.f32 %v844, 0.0
        %v870 = vld [vmem:[%s3] sm:$0xf]
        %v871 = vld [vmem:[%s3 + $0x4] sm:$0xf]
        %v872 = vld [vmem:[%s3 + $0x8] sm:$0xf]
        %v873 = vld [vmem:[%s3 + $0xc] sm:$0xf]
        %v874 = vld [vmem:[%s3 + $0x10] sm:$0xf]
        %v875 = vld [vmem:[%s3 + $0x14] sm:$0xf]
        %v876 = vld [vmem:[%s3 + $0x18] sm:$0xf]
        %v877 = vld [vmem:[%s3 + $0x1c] sm:$0xf]
        %v878 = vpack.c.bf16 %v847, %v846
        %v879 = vpack.c.bf16 %v849, %v848
        %v880 = vpack.c.bf16 %v851, %v850
        %v881 = vpack.c.bf16 %v853, %v852
        %v882 = vpack.c.bf16 %v855, %v854
        %v883 = vpack.c.bf16 %v857, %v856
        %v884 = vpack.c.bf16 %v859, %v858
        %v885 = vpack.c.bf16 %v861, %v860
        %v886 = vld [vmem:[%s4] sm:$0xff]
        %v887 = vld [vmem:[%s4 + $0x8] sm:$0xff]
        %v888 = vld [vmem:[%s4 + $0x10] sm:$0xff]
        %v889 = vld [vmem:[%s4 + $0x18] sm:$0xff]
        %v890 = vld [vmem:[%s4 + $0x20] sm:$0xff]
        %v891 = vld [vmem:[%s4 + $0x28] sm:$0xff]
        %v892 = vld [vmem:[%s4 + $0x30] sm:$0xff]
        %v893 = vld [vmem:[%s4 + $0x38] sm:$0xff]
        %895 = vset.pattern.permute.xlu0 0
        %896 = vperm.xlu0 %895, %v886
        %v897 = vpop.permute.xlu0 %896
        %900 = vset.pattern.permute.xlu0 0
        %901 = vperm.xlu0 %900, %v887
        %v902 = vpop.permute.xlu0 %901
        %905 = vset.pattern.permute.xlu0 0
        %906 = vperm.xlu0 %905, %v888
        %v907 = vpop.permute.xlu0 %906
        %910 = vset.pattern.permute.xlu0 0
        %911 = vperm.xlu0 %910, %v889
        %v912 = vpop.permute.xlu0 %911
        %915 = vset.pattern.permute.xlu0 0
        %916 = vperm.xlu0 %915, %v890
        %v917 = vpop.permute.xlu0 %916
        %920 = vset.pattern.permute.xlu0 0
        %921 = vperm.xlu0 %920, %v891
        %v922 = vpop.permute.xlu0 %921
        %925 = vset.pattern.permute.xlu0 0
        %926 = vperm.xlu0 %925, %v892
        %v927 = vpop.permute.xlu0 %926
        %930 = vset.pattern.permute.xlu0 0
        %931 = vperm.xlu0 %930, %v893
        %v932 = vpop.permute.xlu0 %931
        %v942 = vunpack.c.l.b16 %v870
        %v943 = vunpack.c.l.b16 %v871
        %v944 = vunpack.c.l.b16 %v872
        %v945 = vunpack.c.l.b16 %v873
        %v946 = vunpack.c.l.b16 %v874
        %v947 = vunpack.c.l.b16 %v875
        %v948 = vunpack.c.l.b16 %v876
        %v949 = vunpack.c.l.b16 %v877
        %v950 = vpack.c.b16 %v943, %v942
        %v951 = vpack.c.b16 %v945, %v944
        %v952 = vpack.c.b16 %v947, %v946
        %v953 = vpack.c.b16 %v949, %v948
        %958 = vmatpush.bf16.msra.mxu0 %v885
        %959 = vmatpush.bf16.msra.mxu0 %v884
        %960 = vmatpush.bf16.msra.mxu0 %v883
        %961 = vmatpush.bf16.msra.mxu0 %v882
        %962 = vmatpush.bf16.msra.mxu0 %v881
        %963 = vmatpush.bf16.msra.mxu0 %v880
        %964 = vmatpush.bf16.msra.mxu0 %v879
        %965 = vmatpush.bf16.msra.mxu0 %v878
        %966 = vmatmul.bf16.gmra.mxu0 %v950
        %v967 = vpop.f32.mrf.mxu0
        %v968 = vadd.f32 %v897, %v967
        %v969 = vpop.f32.mrf.mxu0
        %v970 = vadd.f32 %v902, %v969
        %971 = vmatmul.bf16.gmra.mxu0 %v951
        %v972 = vpop.f32.mrf.mxu0
        %v973 = vadd.f32 %v907, %v972
        %v974 = vpop.f32.mrf.mxu0
        %v975 = vadd.f32 %v912, %v974
        %976 = vmatmul.bf16.gmra.mxu0 %v952
        %v977 = vpop.f32.mrf.mxu0
        %v978 = vadd.f32 %v917, %v977
        %v979 = vpop.f32.mrf.mxu0
        %v980 = vadd.f32 %v922, %v979
        %981 = vmatmul.bf16.gmra.mxu0 %v953
        %v982 = vpop.f32.mrf.mxu0
        %v983 = vadd.f32 %v927, %v982
        %v984 = vpop.f32.mrf.mxu0
        %v985 = vadd.f32 %v932, %v984
        %986 = vdwg.mxu0
        %v987 = vmax.f32 %v968, 0.0
        %v988 = vmax.f32 %v970, 0.0
        %v989 = vmax.f32 %v973, 0.0
        %v990 = vmax.f32 %v975, 0.0
        %v991 = vmax.f32 %v978, 0.0
        %v992 = vmax.f32 %v980, 0.0
        %v993 = vmax.f32 %v983, 0.0
        %v994 = vmax.f32 %v985, 0.0
        %v995 = vld [vmem:[%s5] sm:$0xff]
        %v996 = vld [vmem:[%s5 + $0x8] sm:$0xff]
        %v997 = vld [vmem:[%s5 + $0x10] sm:$0xff]
        %v998 = vld [vmem:[%s5 + $0x18] sm:$0xff]
        %v999 = vld [vmem:[%s5 + $0x20] sm:$0xff]
        %v1000 = vld [vmem:[%s5 + $0x28] sm:$0xff]
        %v1001 = vld [vmem:[%s5 + $0x30] sm:$0xff]
        %v1002 = vld [vmem:[%s5 + $0x38] sm:$0xff]
        %1004 = vset.pattern.permute.xlu0 0
        %1005 = vperm.xlu0 %1004, %v995
        %v1006 = vpop.permute.xlu0 %1005
        %1009 = vset.pattern.permute.xlu0 0
        %1010 = vperm.xlu0 %1009, %v996
        %v1011 = vpop.permute.xlu0 %1010
        %1014 = vset.pattern.permute.xlu0 0
        %1015 = vperm.xlu0 %1014, %v997
        %v1016 = vpop.permute.xlu0 %1015
        %1019 = vset.pattern.permute.xlu0 0
        %1020 = vperm.xlu0 %1019, %v998
        %v1021 = vpop.permute.xlu0 %1020
        %1024 = vset.pattern.permute.xlu0 0
        %1025 = vperm.xlu0 %1024, %v999
        %v1026 = vpop.permute.xlu0 %1025
        %1029 = vset.pattern.permute.xlu0 0
        %1030 = vperm.xlu0 %1029, %v1000
        %v1031 = vpop.permute.xlu0 %1030
        %1034 = vset.pattern.permute.xlu0 0
        %1035 = vperm.xlu0 %1034, %v1001
        %v1036 = vpop.permute.xlu0 %1035
        %1039 = vset.pattern.permute.xlu0 0
        %1040 = vperm.xlu0 %1039, %v1002
        %v1041 = vpop.permute.xlu0 %1040
        %v1043 = vmul.f32 %v987, %v1006
        %v1044 = vmul.f32 %v988, %v1011
        %v1045 = vmul.f32 %v989, %v1016
        %v1046 = vmul.f32 %v990, %v1021
        %v1047 = vmul.f32 %v991, %v1026
        %v1048 = vmul.f32 %v992, %v1031
        %v1049 = vmul.f32 %v993, %v1036
        %v1050 = vmul.f32 %v994, %v1041
        %v1051 = vadd.f32 %v1043, %v1044
        %v1052 = vadd.f32 %v1051, %v1045
        %v1053 = vadd.f32 %v1052, %v1046
        %v1054 = vadd.f32 %v1053, %v1047
        %v1055 = vadd.f32 %v1054, %v1048
        %v1056 = vadd.f32 %v1055, %v1049
        %v1057 = vadd.f32 %v1056, %v1050
        %v1058 = vrot.slane %v1057, 4
        %v1059 = vadd.f32 %v1057, %v1058
        %v1060 = vrot.slane %v1059, 2
        %v1061 = vadd.f32 %v1059, %v1060
        %v1062 = vrot.slane %v1061, 1
        %v1063 = vadd.f32 %v1061, %v1062
        %v1064 = vxor.u32 %v1063, 2147483648
        %v1065 = vmul.f32 %v1064, 1.442695
        %v1066 = vpow.pop %v1065
        %v1067 = vadd.f32 %v1066, 1.0
        %v1068 = vrcp.pop %v1067
        %v1069 = vmul.f32 %v1067, %v1068
        %v1070 = vsub.f32 1.0, %v1069
        %v1071 = vmul.f32 %v1068, %v1070
        %v1072 = vadd.f32 %v1068, %v1071
        %vm1073 = vweird.f32 %v1067
        %vm1074 = vweird.f32 %v1068
        %vm1075 = vmor %vm1073, %vm1074
        %v1076 = vsel %vm1075, %v1068, %v1072
        %v1077 = vand.u32 2147483647, %v1067
        %vm1078 = vcmp.eq.f32.partialorder %v1077, 8.507059e+37
        %v1079 = vand.u32 %v1067, 2147483648
        %v1080 = vor.u32 1.1754944e-38, %v1079
        %v1081 = vsel %vm1078, %v1080, %v1076
        %v1082 = vmul.f32 1.0, %v1081
        %1083 = vst [vmem:[%s473] sm:$0x1] %v1082
        %v1084 = vld [vmem:[%s6] sm:$0xf]
        %v1085 = vld [vmem:[%s6 + $0x4] sm:$0xf]
        %v1086 = vld [vmem:[%s6 + $0x8] sm:$0xf]
        %v1087 = vld [vmem:[%s6 + $0xc] sm:$0xf]
        %v1088 = vld [vmem:[%s6 + $0x10] sm:$0xf]
        %v1089 = vld [vmem:[%s6 + $0x14] sm:$0xf]
        %v1090 = vld [vmem:[%s6 + $0x18] sm:$0xf]
        %v1091 = vld [vmem:[%s6 + $0x1c] sm:$0xf]
        %v1092 = vpack.c.bf16 %v863, %v862
        %v1093 = vpack.c.bf16 %v865, %v864
        %v1094 = vpack.c.bf16 %v867, %v866
        %v1095 = vpack.c.bf16 %v869, %v868
        %v1096 = vld [vmem:[%s7] sm:$0xff]
        %v1097 = vld [vmem:[%s7 + $0x8] sm:$0xff]
        %v1098 = vld [vmem:[%s7 + $0x10] sm:$0xff]
        %v1099 = vld [vmem:[%s7 + $0x18] sm:$0xff]
        %v1100 = vld [vmem:[%s7 + $0x20] sm:$0xff]
        %v1101 = vld [vmem:[%s7 + $0x28] sm:$0xff]
        %v1102 = vld [vmem:[%s7 + $0x30] sm:$0xff]
        %v1103 = vld [vmem:[%s7 + $0x38] sm:$0xff]
        %1105 = vset.pattern.permute.xlu0 0
        %1106 = vperm.xlu0 %1105, %v1096
        %v1107 = vpop.permute.xlu0 %1106
        %1110 = vset.pattern.permute.xlu0 0
        %1111 = vperm.xlu0 %1110, %v1097
        %v1112 = vpop.permute.xlu0 %1111
        %1115 = vset.pattern.permute.xlu0 0
        %1116 = vperm.xlu0 %1115, %v1098
        %v1117 = vpop.permute.xlu0 %1116
        %1120 = vset.pattern.permute.xlu0 0
        %1121 = vperm.xlu0 %1120, %v1099
        %v1122 = vpop.permute.xlu0 %1121
        %1125 = vset.pattern.permute.xlu0 0
        %1126 = vperm.xlu0 %1125, %v1100
        %v1127 = vpop.permute.xlu0 %1126
        %1130 = vset.pattern.permute.xlu0 0
        %1131 = vperm.xlu0 %1130, %v1101
        %v1132 = vpop.permute.xlu0 %1131
        %1135 = vset.pattern.permute.xlu0 0
        %1136 = vperm.xlu0 %1135, %v1102
        %v1137 = vpop.permute.xlu0 %1136
        %1140 = vset.pattern.permute.xlu0 0
        %1141 = vperm.xlu0 %1140, %v1103
        %v1142 = vpop.permute.xlu0 %1141
        %v1152 = vunpack.c.l.b16 %v1084
        %v1153 = vunpack.c.l.b16 %v1085
        %v1154 = vunpack.c.l.b16 %v1086
        %v1155 = vunpack.c.l.b16 %v1087
        %v1156 = vunpack.c.l.b16 %v1088
        %v1157 = vunpack.c.l.b16 %v1089
        %v1158 = vunpack.c.l.b16 %v1090
        %v1159 = vunpack.c.l.b16 %v1091
        %v1160 = vpack.c.b16 %v1153, %v1152
        %v1161 = vpack.c.b16 %v1155, %v1154
        %v1162 = vpack.c.b16 %v1157, %v1156
        %v1163 = vpack.c.b16 %v1159, %v1158
        %v1165 = vsel %vm740, %v1160, 0
        %v1168 = vsel %vm740, %v1161, 0
        %v1171 = vsel %vm740, %v1162, 0
        %v1174 = vsel %vm740, %v1163, 0
        %1176 = vmatpush.bf16.msra.mxu0 0
        %1177 = vmatpush.bf16.msra.mxu0 0
        %1178 = vmatpush.bf16.msra.mxu0 0
        %1179 = vmatpush.bf16.msra.mxu0 0
        %1180 = vmatpush.bf16.msra.mxu0 %v1095
        %1181 = vmatpush.bf16.msra.mxu0 %v1094
        %1182 = vmatpush.bf16.msra.mxu0 %v1093
        %1183 = vmatpush.bf16.msra.mxu0 %v1092
        %1184 = vmatmul.bf16.gmra.mxu0 %v1165
        %v1185 = vpop.f32.mrf.mxu0
        %v1186 = vadd.f32 %v1107, %v1185
        %v1187 = vpop.f32.mrf.mxu0
        %v1188 = vadd.f32 %v1112, %v1187
        %1189 = vmatmul.bf16.gmra.mxu0 %v1168
        %v1190 = vpop.f32.mrf.mxu0
        %v1191 = vadd.f32 %v1117, %v1190
        %v1192 = vpop.f32.mrf.mxu0
        %v1193 = vadd.f32 %v1122, %v1192
        %1194 = vmatmul.bf16.gmra.mxu0 %v1171
        %v1195 = vpop.f32.mrf.mxu0
        %v1196 = vadd.f32 %v1127, %v1195
        %v1197 = vpop.f32.mrf.mxu0
        %v1198 = vadd.f32 %v1132, %v1197
        %1199 = vmatmul.bf16.gmra.mxu0 %v1174
        %v1200 = vpop.f32.mrf.mxu0
        %v1201 = vadd.f32 %v1137, %v1200
        %v1202 = vpop.f32.mrf.mxu0
        %v1203 = vadd.f32 %v1142, %v1202
        %1204 = vdwg.mxu0
        %v1205 = vmax.f32 %v1186, 0.0
        %v1206 = vmax.f32 %v1188, 0.0
        %v1207 = vmax.f32 %v1191, 0.0
        %v1208 = vmax.f32 %v1193, 0.0
        %v1209 = vmax.f32 %v1196, 0.0
        %v1210 = vmax.f32 %v1198, 0.0
        %v1211 = vmax.f32 %v1201, 0.0
        %v1212 = vmax.f32 %v1203, 0.0
        %v1213 = vld [vmem:[%s8] sm:$0xf]
        %v1214 = vld [vmem:[%s8 + $0x4] sm:$0xf]
        %v1215 = vld [vmem:[%s8 + $0x8] sm:$0xf]
        %v1216 = vld [vmem:[%s8 + $0xc] sm:$0xf]
        %v1217 = vld [vmem:[%s8 + $0x10] sm:$0xf]
        %v1218 = vld [vmem:[%s8 + $0x14] sm:$0xf]
        %v1219 = vld [vmem:[%s8 + $0x18] sm:$0xf]
        %v1220 = vld [vmem:[%s8 + $0x1c] sm:$0xf]
        %v1221 = vpack.c.bf16 %v1206, %v1205
        %v1222 = vpack.c.bf16 %v1208, %v1207
        %v1223 = vpack.c.bf16 %v1210, %v1209
        %v1224 = vpack.c.bf16 %v1212, %v1211
        %v1233 = vunpack.c.l.b16 %v1213
        %v1234 = vunpack.c.l.b16 %v1214
        %v1235 = vunpack.c.l.b16 %v1215
        %v1236 = vunpack.c.l.b16 %v1216
        %v1237 = vunpack.c.l.b16 %v1217
        %v1238 = vunpack.c.l.b16 %v1218
        %v1239 = vunpack.c.l.b16 %v1219
        %v1240 = vunpack.c.l.b16 %v1220
        %v1241 = vpack.c.b16 %v1234, %v1233
        %v1242 = vpack.c.b16 %v1236, %v1235
        %v1243 = vpack.c.b16 %v1238, %v1237
        %v1244 = vpack.c.b16 %v1240, %v1239
        %v1246 = vsel %vm740, %v1241, 0
        %v1249 = vsel %vm740, %v1242, 0
        %v1252 = vsel %vm740, %v1243, 0
        %v1255 = vsel %vm740, %v1244, 0
        %1257 = vmatpush.bf16.msra.mxu0 0
        %1258 = vmatpush.bf16.msra.mxu0 0
        %1259 = vmatpush.bf16.msra.mxu0 0
        %1260 = vmatpush.bf16.msra.mxu0 0
        %1261 = vmatpush.bf16.msra.mxu0 %v1224
        %1262 = vmatpush.bf16.msra.mxu0 %v1223
        %1263 = vmatpush.bf16.msra.mxu0 %v1222
        %1264 = vmatpush.bf16.msra.mxu0 %v1221
        %1265 = vmatmul.bf16.gmra.mxu0 %v1246
        %v1266 = vpop.f32.mrf.mxu0
        %v1267 = vadd.f32 0.0, %v1266
        %v1268 = vpop.f32.mrf.mxu0
        %v1269 = vadd.f32 0.0, %v1268
        %1270 = vmatmul.bf16.gmra.mxu0 %v1249
        %v1271 = vpop.f32.mrf.mxu0
        %v1272 = vadd.f32 0.0, %v1271
        %v1273 = vpop.f32.mrf.mxu0
        %v1274 = vadd.f32 0.0, %v1273
        %1275 = vmatmul.bf16.gmra.mxu0 %v1252
        %v1276 = vpop.f32.mrf.mxu0
        %v1277 = vadd.f32 0.0, %v1276
        %v1278 = vpop.f32.mrf.mxu0
        %v1279 = vadd.f32 0.0, %v1278
        %1280 = vmatmul.bf16.gmra.mxu0 %v1255
        %v1281 = vpop.f32.mrf.mxu0
        %v1282 = vadd.f32 0.0, %v1281
        %v1283 = vpop.f32.mrf.mxu0
        %v1284 = vadd.f32 0.0, %v1283
        %1285 = vdwg.mxu0
        %v1286 = vmul.f32 %v1267, %v1267
        %v1287 = vmul.f32 %v1269, %v1269
        %v1288 = vmul.f32 %v1272, %v1272
        %v1289 = vmul.f32 %v1274, %v1274
        %v1290 = vmul.f32 %v1277, %v1277
        %v1291 = vmul.f32 %v1279, %v1279
        %v1292 = vmul.f32 %v1282, %v1282
        %v1293 = vmul.f32 %v1284, %v1284
        %v1294 = vadd.f32 %v1286, %v1287
        %v1295 = vadd.f32 %v1294, %v1288
        %v1296 = vadd.f32 %v1295, %v1289
        %v1297 = vadd.f32 %v1296, %v1290
        %v1298 = vadd.f32 %v1297, %v1291
        %v1299 = vadd.f32 %v1298, %v1292
        %v1300 = vadd.f32 %v1299, %v1293
        %v1301 = vrot.slane %v1300, 4
        %v1302 = vadd.f32 %v1300, %v1301
        %v1303 = vrot.slane %v1302, 2
        %v1304 = vadd.f32 %v1302, %v1303
        %v1305 = vrot.slane %v1304, 1
        %v1306 = vadd.f32 %v1304, %v1305
        %v1307 = vmax.f32 %v1306, 1e-24
        %v1308 = vrsqrt.pop %v1307
        %v1309 = vmul.f32 %v1308, %v1307
        %v1310 = vmul.f32 %v1309, %v1308
        %v1311 = vmul.f32 0.5, %v1310
        %v1312 = vsub.f32 1.5, %v1311
        %v1313 = vmul.f32 %v1308, %v1312
        %vm1314 = vweird.f32 %v1307
        %vm1315 = vweird.f32 %v1308
        %vm1316 = vmor %vm1314, %vm1315
        %v1317 = vsel %vm1316, %v1308, %v1313
        %v1318 = vmul.f32 %v1267, %v1317
        %v1319 = vmul.f32 %v1269, %v1317
        %v1320 = vmul.f32 %v1272, %v1317
        %v1321 = vmul.f32 %v1274, %v1317
        %v1322 = vmul.f32 %v1277, %v1317
        %v1323 = vmul.f32 %v1279, %v1317
        %v1324 = vmul.f32 %v1282, %v1317
        %v1325 = vmul.f32 %v1284, %v1317
        %v1326 = vpack.c.bf16 %v1318, %v1318
        %v1327 = vpack.c.bf16 %v1319, %v1319
        %v1328 = vpack.c.bf16 %v1320, %v1320
        %v1329 = vpack.c.bf16 %v1321, %v1321
        %v1330 = vpack.c.bf16 %v1322, %v1322
        %v1331 = vpack.c.bf16 %v1323, %v1323
        %v1332 = vpack.c.bf16 %v1324, %v1324
        %v1333 = vpack.c.bf16 %v1325, %v1325
        %1334 = vst [vmem:[%s467] sm:$0xf] %v1326
        %1335 = vst [vmem:[%s467 + $0x4] sm:$0xf] %v1327
        %1336 = vst [vmem:[%s467 + $0x8] sm:$0xf] %v1328
        %1337 = vst [vmem:[%s467 + $0xc] sm:$0xf] %v1329
        %1338 = vst [vmem:[%s467 + $0x10] sm:$0xf] %v1330
        %1339 = vst [vmem:[%s467 + $0x14] sm:$0xf] %v1331
        %1340 = vst [vmem:[%s467 + $0x18] sm:$0xf] %v1332
        %1341 = vst [vmem:[%s467 + $0x1c] sm:$0xf] %v1333
        %s1342 = sand.u32 %s251, 1
        %s1343 = scalar_lea.sflag [#allocation4], %s1342
        %s1344 = sand.u32 %s251, 1
        %s1345 = smul.addr %s1344, 32
        %s1346 = scalar_lea.vmem [#allocation3], %s1345
        %s1347 = sand.u32 %s279, 1
        %s1348 = scalar_lea.sflag [#allocation6], %s1347
        %s1349 = sand.u32 %s279, 1
        %s1350 = scalar_lea.vmem [#allocation5], %s1349
        // Predicated region
        $region98: #{mamba_i2p_forward.2} parent=92 // pred_check
          %p1351 = pneg %p261
        $region99: #{mamba_i2p_forward.2} parent=92 // pred_check_branch
          %1353 = sbr.rel (%p1351) target = $region101
        $region100: #{mamba_i2p_forward.2} parent=92 // pred_region
          %1355 = vsyncadd %s1343, 0
          %s1356 = smul.addr %s32, 16
          %s1357 = sadd.s32 %s33, %s1356
          %s1358 = smul.addr %s1357, 4
          %s1359 = scalar_lea.hbm %s9, %s1358
          %s1360 = sshll.u32 %s1346, 4
          %s1361 = int_to_ptr.vmem [resolvable:$true] %s1360
          %s1362 = sshll.u32 %s1359, 4
          %s1363 = int_to_ptr.hbm [resolvable:$true] %s1362
          %1368 = dma.vmem_to_hbm [thread:$0]  %s1361, 512, %s1363, %s1343, 64, 128, 4
        $region101: #{mamba_i2p_forward.2} parent=92 // pred_fallthru
          _
        // Predicated region
        $region102: #{mamba_i2p_forward.2} parent=92 // pred_check
          %p1369 = pneg %p289
        $region103: #{mamba_i2p_forward.2} parent=92 // pred_check_branch
          %1371 = sbr.rel (%p1369) target = $region105
        $region104: #{mamba_i2p_forward.2} parent=92 // pred_region
          %1373 = vsyncadd %s1348, 0
          %s1374 = smul.addr %s32, 2
          %s1375 = sadd.s32 %s33, %s1374
          %s1376 = scalar_lea.hbm %s10, %s1375
          %s1378 = sshll.u32 %s1350, 4
          %s1379 = int_to_ptr.vmem [resolvable:$true] %s1378
          %s1380 = sshll.u32 %s1376, 4
          %s1381 = int_to_ptr.hbm [resolvable:$true] %s1380
          %1383 = dma.vmem_to_hbm [thread:$0]  %s1379, 16, %s1381, %s1348
        $region105: #{mamba_i2p_forward.2} parent=92 // pred_fallthru
          _
      $region93: #{mamba_i2p_forward.2} parent=5 // pred_fallthru
        _
      %p1384 = scmp.le.s32.totalorder 2, %s23
      // Predicated region
      $region106: #{mamba_i2p_forward.2} parent=5 // pred_check
        %p1385 = pneg %p1384
      $region107: #{mamba_i2p_forward.2} parent=5 // pred_check_branch
        %1387 = sbr.rel (%p1385) target = $region109
      $region108: #{mamba_i2p_forward.2} parent=5 // pred_region
        %s1388 = ssub.s32 %s23, 2
        // Predicated region
        $region110: #{mamba_i2p_forward.2} parent=108 // pred_check
          %p1389 = pneg %p267
        $region111: #{mamba_i2p_forward.2} parent=108 // pred_check_branch
          %1391 = sbr.rel (%p1389) target = $region113
        $region112: #{mamba_i2p_forward.2} parent=108 // pred_region
          %s1392 = sand.u32 %s252, 1
          %s1393 = scalar_lea.sflag [#allocation4], %s1392
          %s1394 = sand.u32 %s252, 1
          %s1395 = smul.addr %s1394, 32
          %s1396 = scalar_lea.vmem [#allocation3], %s1395
          %1398 = dma.done %s1393, 512
        $region113: #{mamba_i2p_forward.2} parent=108 // pred_fallthru
          _
        // Predicated region
        $region114: #{mamba_i2p_forward.2} parent=108 // pred_check
          %p1399 = pneg %p295
        $region115: #{mamba_i2p_forward.2} parent=108 // pred_check_branch
          %1401 = sbr.rel (%p1399) target = $region117
        $region116: #{mamba_i2p_forward.2} parent=108 // pred_region
          %s1402 = sand.u32 %s280, 1
          %s1403 = scalar_lea.sflag [#allocation6], %s1402
          %s1404 = sand.u32 %s280, 1
          %s1405 = scalar_lea.vmem [#allocation5], %s1404
          %1407 = dma.done %s1403, 16
        $region117: #{mamba_i2p_forward.2} parent=108 // pred_fallthru
          _
      $region109: #{mamba_i2p_forward.2} parent=5 // pred_fallthru
        _
    $region6: #{mamba_i2p_forward.2} parent=1 // loop_footer
      %s27 = sadd.s32 1, %s23
    $region7: #{mamba_i2p_forward.2} parent=1 // loop_footer_branch
      %22 = sbr.rel target = $region3
    $region8: #{mamba_i2p_forward.2} parent=1 // loop_exit
      _
    %1408 = vsyncpa [#allocation4], 1
    %s1409 = scalar_lea.sflag [#allocation4], 1
    %1410 = vsyncpa %s1409, 1
    %1411 = vsyncpa [#allocation6], 1
    %s1412 = scalar_lea.sflag [#allocation6], 1
    %1413 = vsyncpa %s1412, 1

</llo_original>
